<compile_context>
chip_gen: v5e
topology: v5e:2x2
jax: 0.10.0
libtpu: 0.0.40
codegen_flags: <defaults>
</compile_context>

<pallas_src>
import functools

import jax
import jax.numpy as jnp
from jax import lax
from jax.experimental import pallas as pl
from jax.experimental.pallas import tpu as pltpu


# ----------------------------------------------------------------------------
# Fused Bottleneck kernel: one program = one (batch, row-tile) output slab.
#   x_ref  : (1, Hp, Wp, Cin)   padded NHWC image, resident per batch element
#   w1_ref : (Cin, P)    bf16   w2_ref: (3,3,P,P) bf16   w3_ref: (P, Cout) bf16
#   s*_ref/b*_ref : (1, C) f32  folded BN scale/bias
#   o_ref  : (1, th, W, Cout)
#   y1_ref : VMEM (th+2, Wp, P) bf16   conv1 output tile (with conv2 halo)
#   acc_ref: VMEM (th*W, P) f32        conv2 accumulator
# ----------------------------------------------------------------------------
def _bottleneck_kernel(x_ref, w1_ref, w2_ref, w3_ref,
                       s1_ref, b1_ref, s2_ref, b2_ref, s3_ref, b3_ref,
                       o_ref, y1_ref, acc_ref,
                       *, th, wdim, hp, planes, cin, cout):
    wp = wdim + 2
    hin = th + 2                                   # conv2 halo: +1 row each side
    row0 = pl.multiple_of(pl.program_id(1) * th, th)   # start row in padded coords

    # ---- conv1 (1x1) + bn1 + relu over the haloed row window -----------------
    xwin = x_ref[0, pl.ds(row0, hin), :, :]                       # (hin, Wp, Cin)
    y1 = jnp.dot(xwin.reshape(hin * wp, cin).astype(jnp.bfloat16),
                 w1_ref[...], preferred_element_type=jnp.float32)
    y1 = jnp.maximum(y1 * s1_ref[...] + b1_ref[...], 0.0)
    y1 = y1.reshape(hin, wp, planes)
    # conv2's zero padding is padding of conv1's OUTPUT, so positions that
    # correspond to the padded border must be exactly zero (not relu(bn1(0))).
    col = lax.broadcasted_iota(jnp.int32, (hin, wp, 1), 1)
    row = lax.broadcasted_iota(jnp.int32, (hin, wp, 1), 0) + row0
    is_pad = (col == 0) | (col == wp - 1) | (row == 0) | (row == hp - 1)
    y1_ref[...] = jnp.where(is_pad, 0.0, y1).astype(jnp.bfloat16)

    # ---- conv2 (3x3, stride 1) + bn2 + relu, f32 VMEM accumulator ------------
    # First tap initializes the accumulator directly (no zero-fill pass).
    for dy in range(3):
        for dx in range(3):
            patch = y1_ref[dy:dy + th, dx:dx + wdim, :]           # (th, W, P) bf16
            d = jnp.dot(patch.reshape(th * wdim, planes), w2_ref[dy, dx],
                        preferred_element_type=jnp.float32)
            if dy == 0 and dx == 0:
                acc_ref[...] = d
            else:
                acc_ref[...] += d
    y2 = jnp.maximum(acc_ref[...] * s2_ref[...] + b2_ref[...], 0.0)

    # ---- conv3 (1x1) + bn3 + identity residual + relu ------------------------
    y3 = jnp.dot(y2.astype(jnp.bfloat16), w3_ref[...],
                 preferred_element_type=jnp.float32)              # (th*W, Cout)
    y3 = y3 * s3_ref[...] + b3_ref[...]
    res = x_ref[0, pl.ds(row0 + 1, th), 1:wdim + 1, :]            # unpadded rows
    y3 = jnp.maximum(y3 + res.reshape(th * wdim, cin).astype(jnp.float32), 0.0)
    o_ref[0] = y3.reshape(th, wdim, cout).astype(o_ref.dtype)


# ----------------------------------------------------------------------------
# Wrapper
# ----------------------------------------------------------------------------
def fold_bn(gamma, beta, mean, var, eps=1e-5):
    scale = gamma / jnp.sqrt(var + eps)
    bias = beta - mean * scale
    return scale[None, :].astype(jnp.float32), bias[None, :].astype(jnp.float32)


def _pick_row_tile(h, wdim, max_rows=None, target_m=512):
    """Largest divisor of h such that tile*W targets ~target_m matmul rows."""
    cap = max_rows if max_rows is not None else max(1, target_m // max(wdim, 1))
    cap = max(1, min(cap, h))
    tile = 1
    for d in range(1, cap + 1):
        if h % d == 0:
            tile = d
    return tile


def bottleneck_forward(x_nchw, params, *, stride=1, downsample=None,
                       row_tile=None):
    """Pallas implementation of Bottleneck.forward (stride=1, downsample=None)."""
    if stride != 1 or downsample is not None:
        # TODO(synk): projection-shortcut (downsample) / stride>1 path not implemented.
        raise NotImplementedError("only stride=1, downsample=None is supported")

    n, cin, h, wdim = x_nchw.shape
    planes = params["w1"].shape[1]
    cout = params["w3"].shape[1]
    assert cin == cout, "identity residual requires inplanes == planes * expansion"

    # Layout plumbing: kernel is NHWC (channels lane-dense). In a full network
    # activations would stay NHWC end-to-end and these transposes disappear.
    # The pad fuses with the transpose in XLA (single activation pass).
    x = jnp.transpose(x_nchw, (0, 2, 3, 1))
    x_pad = jnp.pad(x, ((0, 0), (1, 1), (1, 1), (0, 0)))
    hp, wp = h + 2, wdim + 2

    th = _pick_row_tile(h, wdim, max_rows=row_tile)
    grid = (n, h // th)

    s1, b1 = fold_bn(*params["bn1"])
    s2, b2 = fold_bn(*params["bn2"])
    s3, b3 = fold_bn(*params["bn3"])
    w1 = params["w1"].astype(jnp.bfloat16)
    w2 = params["w2"].astype(jnp.bfloat16)
    w3 = params["w3"].astype(jnp.bfloat16)
    # TODO(synk): for configs with channels < 128 the MXU/lanes are underfilled;
    # real ResNet stages (>=64/256 channels) are already lane-dense.

    kernel = functools.partial(_bottleneck_kernel, th=th, wdim=wdim, hp=hp,
                               planes=planes, cin=cin, cout=cout)

    const2 = lambda *_: (0, 0)
    const4 = lambda *_: (0, 0, 0, 0)
    in_specs = [
        pl.BlockSpec((1, hp, wp, cin), lambda b, r: (b, 0, 0, 0)),  # resident / batch
        pl.BlockSpec((cin, planes), const2),
        pl.BlockSpec((3, 3, planes, planes), const4),
        pl.BlockSpec((planes, cout), const2),
        pl.BlockSpec((1, planes), const2), pl.BlockSpec((1, planes), const2),
        pl.BlockSpec((1, planes), const2), pl.BlockSpec((1, planes), const2),
        pl.BlockSpec((1, cout), const2), pl.BlockSpec((1, cout), const2),
    ]
    out_specs = pl.BlockSpec((1, th, wdim, cout), lambda b, r: (b, r, 0, 0))
    scratch = [pltpu.VMEM((th + 2, wp, planes), jnp.bfloat16),
               pltpu.VMEM((th * wdim, planes), jnp.float32)]

    flops = 2 * n * h * wdim * (cin * planes + 9 * planes * planes + planes * cout)
    bytes_accessed = ((x_pad.size + n * h * wdim * cout) * 4
                      + (w1.size + w2.size + w3.size) * 2)
    vmem_est = (2 * hp * wp * cin * 4 + 2 * th * wdim * cout * 4
                + 2 * (w1.size + w2.size + w3.size) * 2
                + (th + 2) * wp * planes * 2 + th * wdim * planes * 4
                + (1 << 20))
    vmem_limit = int(min(48 * 1024 * 1024, max(2 * vmem_est, 16 * 1024 * 1024)))

    out = pl.pallas_call(
        kernel,
        out_shape=jax.ShapeDtypeStruct((n, h, wdim, cout), x.dtype),
        grid_spec=pltpu.PrefetchScalarGridSpec(
            num_scalar_prefetch=0, grid=grid,
            in_specs=in_specs, out_specs=out_specs, scratch_shapes=scratch),
        compiler_params=pltpu.CompilerParams(
            dimension_semantics=("parallel", "parallel"),
            vmem_limit_bytes=vmem_limit),
        cost_estimate=pl.CostEstimate(flops=flops, transcendentals=0,
                                      bytes_accessed=bytes_accessed),
    )(x_pad, w1, w2, w3, s1, b1, s2, b2, s3, b3)

    return jnp.transpose(out, (0, 3, 1, 2))          # NHWC -> NCHW


# ----------------------------------------------------------------------------
# Parameter setup + plain-JAX reference (same bf16-matmul / f32-epilogue scheme)
# ----------------------------------------------------------------------------
def make_params(key, inplanes, planes, expansion=4):
    keys = jax.random.split(key, 15)
    p = {
        "w1": jax.random.normal(keys[0], (inplanes, planes), jnp.float32) * 0.1,
        "w2": jax.random.normal(keys[1], (3, 3, planes, planes), jnp.float32) * 0.1,
        "w3": jax.random.normal(keys[2], (planes, planes * expansion),
                                jnp.float32) * 0.1,
    }
    for i, c in enumerate((planes, planes, planes * expansion), start=1):
        k = keys[3 + 4 * (i - 1): 3 + 4 * i]
        gamma = 1.0 + 0.1 * jax.random.normal(k[0], (c,), jnp.float32)
        beta = 0.1 * jax.random.normal(k[1], (c,), jnp.float32)
        mean = 0.1 * jax.random.normal(k[2], (c,), jnp.float32)
        var = 1.0 + 0.05 * jnp.abs(jax.random.normal(k[3], (c,), jnp.float32))
        p[f"bn{i}"] = (gamma, beta, mean, var)
    return p


def reference_forward(x_nchw, params):
    x = jnp.transpose(x_nchw, (0, 2, 3, 1))
    s1, b1 = fold_bn(*params["bn1"])
    s2, b2 = fold_bn(*params["bn2"])
    s3, b3 = fold_bn(*params["bn3"])
    dn = ("NHWC", "HWIO", "NHWC")

    def conv(a, w, padding):
        return lax.conv_general_dilated(
            a.astype(jnp.bfloat16), w.astype(jnp.bfloat16), (1, 1), padding,
            dimension_numbers=dn, preferred_element_type=jnp.float32)

    out = conv(x, params["w1"][None, None], "VALID")
    out = jnp.maximum(out * s1 + b1, 0.0)
    out = conv(out, params["w2"], [(1, 1), (1, 1)])
    out = jnp.maximum(out * s2 + b2, 0.0)
    out = conv(out, params["w3"][None, None], "VALID")
    out = out * s3 + b3
    out = jnp.maximum(out + x, 0.0)
    return jnp.transpose(out, (0, 3, 1, 2))


if __name__ == "__main__":
    # batch=2, inplanes=16, planes=4 (expansion 4 -> out=16), 16x16 spatial,
    # stride=1, downsample=None. row_tile=8 -> grid=(2, 2) exercises row tiling.
    N, INPLANES, PLANES, H, W = 2, 16, 4, 16, 16
    key = jax.random.PRNGKey(0)
    kx, kp = jax.random.split(key)
    x = jax.random.normal(kx, (N, INPLANES, H, W), jnp.float32)
    params = make_params(kp, INPLANES, PLANES)

    out = jax.block_until_ready(bottleneck_forward(x, params, row_tile=8))
    ref = reference_forward(x, params)

    assert out.shape == (N, PLANES * 4, H, W), out.shape
    max_err = float(jnp.max(jnp.abs(out - ref)))
    assert jnp.allclose(out, ref, rtol=1e-3, atol=1e-3), max_err

    print("KERNEL_OK")
</pallas_src>

<mosaic_0001>
module attributes {stable_mosaic.version = 11 : i64} {
  func.func @_bottleneck_kernel(%arg0: i32, %arg1: i32, %arg2: memref<1x18x18x16xf32, #tpu.memory_space<vmem>>, %arg3: memref<16x4xbf16, #tpu.memory_space<vmem>>, %arg4: memref<3x3x4x4xbf16, #tpu.memory_space<vmem>>, %arg5: memref<4x16xbf16, #tpu.memory_space<vmem>>, %arg6: memref<1x4xf32, #tpu.memory_space<vmem>>, %arg7: memref<1x4xf32, #tpu.memory_space<vmem>>, %arg8: memref<1x4xf32, #tpu.memory_space<vmem>>, %arg9: memref<1x4xf32, #tpu.memory_space<vmem>>, %arg10: memref<1x16xf32, #tpu.memory_space<vmem>>, %arg11: memref<1x16xf32, #tpu.memory_space<vmem>>, %arg12: memref<1x8x16x16xf32, #tpu.memory_space<vmem>>, %arg13: memref<10x18x4xbf16, #tpu.memory_space<vmem>>, %arg14: memref<128x4xf32, #tpu.memory_space<vmem>>) attributes {dimension_semantics = [#tpu.dimension_semantics<parallel>, #tpu.dimension_semantics<parallel>], iteration_bounds = array<i64: 2, 2>, scalar_prefetch = 0 : i64, scratch_operands = 2 : i64, tpu.core_type = #tpu.core_type<tc>, window_params = [{transform_indices = @transform_0, window_bounds = array<i64: 1, 18, 18, 16>}, {pipeline_mode = #tpu.pipeline_mode<synchronous>, transform_indices = @transform_1, window_bounds = array<i64: 16, 4>}, {pipeline_mode = #tpu.pipeline_mode<synchronous>, transform_indices = @transform_2, window_bounds = array<i64: 3, 3, 4, 4>}, {pipeline_mode = #tpu.pipeline_mode<synchronous>, transform_indices = @transform_3, window_bounds = array<i64: 4, 16>}, {pipeline_mode = #tpu.pipeline_mode<synchronous>, transform_indices = @transform_4, window_bounds = array<i64: 1, 4>}, {pipeline_mode = #tpu.pipeline_mode<synchronous>, transform_indices = @transform_5, window_bounds = array<i64: 1, 4>}, {pipeline_mode = #tpu.pipeline_mode<synchronous>, transform_indices = @transform_6, window_bounds = array<i64: 1, 4>}, {pipeline_mode = #tpu.pipeline_mode<synchronous>, transform_indices = @transform_7, window_bounds = array<i64: 1, 4>}, {pipeline_mode = #tpu.pipeline_mode<synchronous>, transform_indices = @transform_8, window_bounds = array<i64: 1, 16>}, {pipeline_mode = #tpu.pipeline_mode<synchronous>, transform_indices = @transform_9, window_bounds = array<i64: 1, 16>}, {transform_indices = @transform_10, window_bounds = array<i64: 1, 8, 16, 16>}]} {
    %c8_i32 = arith.constant 8 : i32
    %0 = arith.muli %arg1, %c8_i32 : i32
    %1 = tpu.assume_multiple %0, 8 : i32
    %c0 = arith.constant 0 : index
    %2 = arith.index_cast %1 : i32 to index
    %c0_0 = arith.constant 0 : index
    %c0_1 = arith.constant 0 : index
    %3 = vector.load %arg2[%c0, %2, %c0_0, %c0_1] : memref<1x18x18x16xf32, #tpu.memory_space<vmem>>, vector<1x10x18x16xf32>
    %4 = vector.shape_cast %3 : vector<1x10x18x16xf32> to vector<10x18x16xf32>
    %5 = vector.shape_cast %4 : vector<10x18x16xf32> to vector<180x16xf32>
    %6 = arith.truncf %5 : vector<180x16xf32> to vector<180x16xbf16>
    %c0_2 = arith.constant 0 : index
    %c0_3 = arith.constant 0 : index
    %7 = vector.load %arg3[%c0_2, %c0_3] : memref<16x4xbf16, #tpu.memory_space<vmem>>, vector<16x4xbf16>
    %cst = arith.constant dense<0.000000e+00> : vector<180x4xf32>
    %8 = tpu.matmul %6, %7, %cst {dimension_numbers = #tpu.dot_dimension_numbers<[1], [0], [0], [1], [0, 0, 1, 1], [], []>} : vector<180x16xbf16>, vector<16x4xbf16>, vector<180x4xf32> -> vector<180x4xf32>
    %c0_4 = arith.constant 0 : index
    %c0_5 = arith.constant 0 : index
    %9 = vector.load %arg6[%c0_4, %c0_5] : memref<1x4xf32, #tpu.memory_space<vmem>>, vector<1x4xf32>
    %10 = vector.broadcast %9 : vector<1x4xf32> to vector<180x4xf32>
    %11 = arith.mulf %8, %10 : vector<180x4xf32>
    %c0_6 = arith.constant 0 : index
    %c0_7 = arith.constant 0 : index
    %12 = vector.load %arg7[%c0_6, %c0_7] : memref<1x4xf32, #tpu.memory_space<vmem>>, vector<1x4xf32>
    %13 = vector.broadcast %12 : vector<1x4xf32> to vector<180x4xf32>
    %14 = arith.addf %11, %13 : vector<180x4xf32>
    %cst_8 = arith.constant 0.000000e+00 : f32
    %15 = vector.broadcast %cst_8 : f32 to vector<180x4xf32>
    %16 = arith.maximumf %14, %15 : vector<180x4xf32>
    %17 = vector.shape_cast %16 : vector<180x4xf32> to vector<10x18x4xf32>
    %18 = tpu.iota {dimensions = array<i32: 1>} : vector<10x18x1xi32>
    %19 = tpu.iota {dimensions = array<i32: 0>} : vector<10x18x1xi32>
    %20 = vector.broadcast %1 : i32 to vector<10x18x1xi32>
    %21 = arith.addi %19, %20 : vector<10x18x1xi32>
    %c0_i32 = arith.constant 0 : i32
    %22 = vector.broadcast %c0_i32 : i32 to vector<10x18x1xi32>
    %23 = arith.cmpi eq, %18, %22 : vector<10x18x1xi32>
    %c17_i32 = arith.constant 17 : i32
    %24 = vector.broadcast %c17_i32 : i32 to vector<10x18x1xi32>
    %25 = arith.cmpi eq, %18, %24 : vector<10x18x1xi32>
    %26 = arith.ori %23, %25 : vector<10x18x1xi1>
    %c0_i32_9 = arith.constant 0 : i32
    %27 = vector.broadcast %c0_i32_9 : i32 to vector<10x18x1xi32>
    %28 = arith.cmpi eq, %21, %27 : vector<10x18x1xi32>
    %29 = arith.ori %26, %28 : vector<10x18x1xi1>
    %c17_i32_10 = arith.constant 17 : i32
    %30 = vector.broadcast %c17_i32_10 : i32 to vector<10x18x1xi32>
    %31 = arith.cmpi eq, %21, %30 : vector<10x18x1xi32>
    %32 = arith.ori %29, %31 : vector<10x18x1xi1>
    %cst_11 = arith.constant 0.000000e+00 : f32
    %33 = vector.shape_cast %32 : vector<10x18x1xi1> to vector<10x18x1xi1>
    %34 = vector.broadcast %33 : vector<10x18x1xi1> to vector<10x18x4xi1>
    %35 = vector.broadcast %cst_11 : f32 to vector<10x18x4xf32>
    %36 = arith.select %34, %35, %17 : vector<10x18x4xi1>, vector<10x18x4xf32>
    %37 = arith.truncf %36 : vector<10x18x4xf32> to vector<10x18x4xbf16>
    %c0_12 = arith.constant 0 : index
    %c0_13 = arith.constant 0 : index
    %c0_14 = arith.constant 0 : index
    %38 = vector.load %arg13[%c0_12, %c0_13, %c0_14] : memref<10x18x4xbf16, #tpu.memory_space<vmem>>, vector<10x18x4xbf16>
    tpu.vector_store %arg13[%c0_12, %c0_13, %c0_14], %37 {strides = array<i32>} : memref<10x18x4xbf16, #tpu.memory_space<vmem>>, vector<10x18x4xbf16>,
    %c0_15 = arith.constant 0 : index
    %c0_16 = arith.constant 0 : index
    %c0_17 = arith.constant 0 : index
    %39 = vector.load %arg13[%c0_15, %c0_16, %c0_17] : memref<10x18x4xbf16, #tpu.memory_space<vmem>>, vector<8x16x4xbf16>
    %40 = vector.shape_cast %39 : vector<8x16x4xbf16> to vector<128x4xbf16>
    %c0_18 = arith.constant 0 : index
    %c0_19 = arith.constant 0 : index
    %c0_20 = arith.constant 0 : index
    %c0_21 = arith.constant 0 : index
    %41 = vector.load %arg4[%c0_18, %c0_19, %c0_20, %c0_21] : memref<3x3x4x4xbf16, #tpu.memory_space<vmem>>, vector<1x1x4x4xbf16>
    %42 = vector.shape_cast %41 : vector<1x1x4x4xbf16> to vector<4x4xbf16>
    %cst_22 = arith.constant dense<0.000000e+00> : vector<128x4xf32>
    %43 = tpu.matmul %40, %42, %cst_22 {dimension_numbers = #tpu.dot_dimension_numbers<[1], [0], [0], [1], [0, 0, 1, 1], [], []>} : vector<128x4xbf16>, vector<4x4xbf16>, vector<128x4xf32> -> vector<128x4xf32>
    %c0_23 = arith.constant 0 : index
    %c0_24 = arith.constant 0 : index
    %44 = vector.load %arg14[%c0_23, %c0_24] : memref<128x4xf32, #tpu.memory_space<vmem>>, vector<128x4xf32>
    tpu.vector_store %arg14[%c0_23, %c0_24], %43 {strides = array<i32>} : memref<128x4xf32, #tpu.memory_space<vmem>>, vector<128x4xf32>,
    %c0_25 = arith.constant 0 : index
    %c1 = arith.constant 1 : index
    %c0_26 = arith.constant 0 : index
    %45 = vector.load %arg13[%c0_25, %c1, %c0_26] : memref<10x18x4xbf16, #tpu.memory_space<vmem>>, vector<8x16x4xbf16>
    %46 = vector.shape_cast %45 : vector<8x16x4xbf16> to vector<128x4xbf16>
    %c0_27 = arith.constant 0 : index
    %c1_28 = arith.constant 1 : index
    %c0_29 = arith.constant 0 : index
    %c0_30 = arith.constant 0 : index
    %47 = vector.load %arg4[%c0_27, %c1_28, %c0_29, %c0_30] : memref<3x3x4x4xbf16, #tpu.memory_space<vmem>>, vector<1x1x4x4xbf16>
    %48 = vector.shape_cast %47 : vector<1x1x4x4xbf16> to vector<4x4xbf16>
    %cst_31 = arith.constant dense<0.000000e+00> : vector<128x4xf32>
    %49 = tpu.matmul %46, %48, %cst_31 {dimension_numbers = #tpu.dot_dimension_numbers<[1], [0], [0], [1], [0, 0, 1, 1], [], []>} : vector<128x4xbf16>, vector<4x4xbf16>, vector<128x4xf32> -> vector<128x4xf32>
    %c0_32 = arith.constant 0 : index
    %c0_33 = arith.constant 0 : index
    %50 = vector.load %arg14[%c0_32, %c0_33] : memref<128x4xf32, #tpu.memory_space<vmem>>, vector<128x4xf32>
    %51 = arith.addf %50, %49 : vector<128x4xf32>
    %c0_34 = arith.constant 0 : index
    %c0_35 = arith.constant 0 : index
    %52 = vector.load %arg14[%c0_34, %c0_35] : memref<128x4xf32, #tpu.memory_space<vmem>>, vector<128x4xf32>
    tpu.vector_store %arg14[%c0_34, %c0_35], %51 {strides = array<i32>} : memref<128x4xf32, #tpu.memory_space<vmem>>, vector<128x4xf32>,
    %c0_36 = arith.constant 0 : index
    %c2 = arith.constant 2 : index
    %c0_37 = arith.constant 0 : index
    %53 = vector.load %arg13[%c0_36, %c2, %c0_37] : memref<10x18x4xbf16, #tpu.memory_space<vmem>>, vector<8x16x4xbf16>
    %54 = vector.shape_cast %53 : vector<8x16x4xbf16> to vector<128x4xbf16>
    %c0_38 = arith.constant 0 : index
    %c2_39 = arith.constant 2 : index
    %c0_40 = arith.constant 0 : index
    %c0_41 = arith.constant 0 : index
    %55 = vector.load %arg4[%c0_38, %c2_39, %c0_40, %c0_41] : memref<3x3x4x4xbf16, #tpu.memory_space<vmem>>, vector<1x1x4x4xbf16>
    %56 = vector.shape_cast %55 : vector<1x1x4x4xbf16> to vector<4x4xbf16>
    %cst_42 = arith.constant dense<0.000000e+00> : vector<128x4xf32>
    %57 = tpu.matmul %54, %56, %cst_42 {dimension_numbers = #tpu.dot_dimension_numbers<[1], [0], [0], [1], [0, 0, 1, 1], [], []>} : vector<128x4xbf16>, vector<4x4xbf16>, vector<128x4xf32> -> vector<128x4xf32>
    %c0_43 = arith.constant 0 : index
    %c0_44 = arith.constant 0 : index
    %58 = vector.load %arg14[%c0_43, %c0_44] : memref<128x4xf32, #tpu.memory_space<vmem>>, vector<128x4xf32>
    %59 = arith.addf %58, %57 : vector<128x4xf32>
    %c0_45 = arith.constant 0 : index
    %c0_46 = arith.constant 0 : index
    %60 = vector.load %arg14[%c0_45, %c0_46] : memref<128x4xf32, #tpu.memory_space<vmem>>, vector<128x4xf32>
    tpu.vector_store %arg14[%c0_45, %c0_46], %59 {strides = array<i32>} : memref<128x4xf32, #tpu.memory_space<vmem>>, vector<128x4xf32>,
    %c1_47 = arith.constant 1 : index
    %c0_48 = arith.constant 0 : index
    %c0_49 = arith.constant 0 : index
    %61 = vector.load %arg13[%c1_47, %c0_48, %c0_49] : memref<10x18x4xbf16, #tpu.memory_space<vmem>>, vector<8x16x4xbf16>
    %62 = vector.shape_cast %61 : vector<8x16x4xbf16> to vector<128x4xbf16>
    %c1_50 = arith.constant 1 : index
    %c0_51 = arith.constant 0 : index
    %c0_52 = arith.constant 0 : index
    %c0_53 = arith.constant 0 : index
    %63 = vector.load %arg4[%c1_50, %c0_51, %c0_52, %c0_53] : memref<3x3x4x4xbf16, #tpu.memory_space<vmem>>, vector<1x1x4x4xbf16>
    %64 = vector.shape_cast %63 : vector<1x1x4x4xbf16> to vector<4x4xbf16>
    %cst_54 = arith.constant dense<0.000000e+00> : vector<128x4xf32>
    %65 = tpu.matmul %62, %64, %cst_54 {dimension_numbers = #tpu.dot_dimension_numbers<[1], [0], [0], [1], [0, 0, 1, 1], [], []>} : vector<128x4xbf16>, vector<4x4xbf16>, vector<128x4xf32> -> vector<128x4xf32>
    %c0_55 = arith.constant 0 : index
    %c0_56 = arith.constant 0 : index
    %66 = vector.load %arg14[%c0_55, %c0_56] : memref<128x4xf32, #tpu.memory_space<vmem>>, vector<128x4xf32>
    %67 = arith.addf %66, %65 : vector<128x4xf32>
    %c0_57 = arith.constant 0 : index
    %c0_58 = arith.constant 0 : index
    %68 = vector.load %arg14[%c0_57, %c0_58] : memref<128x4xf32, #tpu.memory_space<vmem>>, vector<128x4xf32>
    tpu.vector_store %arg14[%c0_57, %c0_58], %67 {strides = array<i32>} : memref<128x4xf32, #tpu.memory_space<vmem>>, vector<128x4xf32>,
    %c1_59 = arith.constant 1 : index
    %c1_60 = arith.constant 1 : index
    %c0_61 = arith.constant 0 : index
    %69 = vector.load %arg13[%c1_59, %c1_60, %c0_61] : memref<10x18x4xbf16, #tpu.memory_space<vmem>>, vector<8x16x4xbf16>
    %70 = vector.shape_cast %69 : vector<8x16x4xbf16> to vector<128x4xbf16>
    %c1_62 = arith.constant 1 : index
    %c1_63 = arith.constant 1 : index
    %c0_64 = arith.constant 0 : index
    %c0_65 = arith.constant 0 : index
    %71 = vector.load %arg4[%c1_62, %c1_63, %c0_64, %c0_65] : memref<3x3x4x4xbf16, #tpu.memory_space<vmem>>, vector<1x1x4x4xbf16>
    %72 = vector.shape_cast %71 : vector<1x1x4x4xbf16> to vector<4x4xbf16>
    %cst_66 = arith.constant dense<0.000000e+00> : vector<128x4xf32>
    %73 = tpu.matmul %70, %72, %cst_66 {dimension_numbers = #tpu.dot_dimension_numbers<[1], [0], [0], [1], [0, 0, 1, 1], [], []>} : vector<128x4xbf16>, vector<4x4xbf16>, vector<128x4xf32> -> vector<128x4xf32>
    %c0_67 = arith.constant 0 : index
    %c0_68 = arith.constant 0 : index
    %74 = vector.load %arg14[%c0_67, %c0_68] : memref<128x4xf32, #tpu.memory_space<vmem>>, vector<128x4xf32>
    %75 = arith.addf %74, %73 : vector<128x4xf32>
    %c0_69 = arith.constant 0 : index
    %c0_70 = arith.constant 0 : index
    %76 = vector.load %arg14[%c0_69, %c0_70] : memref<128x4xf32, #tpu.memory_space<vmem>>, vector<128x4xf32>
    tpu.vector_store %arg14[%c0_69, %c0_70], %75 {strides = array<i32>} : memref<128x4xf32, #tpu.memory_space<vmem>>, vector<128x4xf32>,
    %c1_71 = arith.constant 1 : index
    %c2_72 = arith.constant 2 : index
    %c0_73 = arith.constant 0 : index
    %77 = vector.load %arg13[%c1_71, %c2_72, %c0_73] : memref<10x18x4xbf16, #tpu.memory_space<vmem>>, vector<8x16x4xbf16>
    %78 = vector.shape_cast %77 : vector<8x16x4xbf16> to vector<128x4xbf16>
    %c1_74 = arith.constant 1 : index
    %c2_75 = arith.constant 2 : index
    %c0_76 = arith.constant 0 : index
    %c0_77 = arith.constant 0 : index
    %79 = vector.load %arg4[%c1_74, %c2_75, %c0_76, %c0_77] : memref<3x3x4x4xbf16, #tpu.memory_space<vmem>>, vector<1x1x4x4xbf16>
    %80 = vector.shape_cast %79 : vector<1x1x4x4xbf16> to vector<4x4xbf16>
    %cst_78 = arith.constant dense<0.000000e+00> : vector<128x4xf32>
    %81 = tpu.matmul %78, %80, %cst_78 {dimension_numbers = #tpu.dot_dimension_numbers<[1], [0], [0], [1], [0, 0, 1, 1], [], []>} : vector<128x4xbf16>, vector<4x4xbf16>, vector<128x4xf32> -> vector<128x4xf32>
    %c0_79 = arith.constant 0 : index
    %c0_80 = arith.constant 0 : index
    %82 = vector.load %arg14[%c0_79, %c0_80] : memref<128x4xf32, #tpu.memory_space<vmem>>, vector<128x4xf32>
    %83 = arith.addf %82, %81 : vector<128x4xf32>
    %c0_81 = arith.constant 0 : index
    %c0_82 = arith.constant 0 : index
    %84 = vector.load %arg14[%c0_81, %c0_82] : memref<128x4xf32, #tpu.memory_space<vmem>>, vector<128x4xf32>
    tpu.vector_store %arg14[%c0_81, %c0_82], %83 {strides = array<i32>} : memref<128x4xf32, #tpu.memory_space<vmem>>, vector<128x4xf32>,
    %c2_83 = arith.constant 2 : index
    %c0_84 = arith.constant 0 : index
    %c0_85 = arith.constant 0 : index
    %85 = vector.load %arg13[%c2_83, %c0_84, %c0_85] : memref<10x18x4xbf16, #tpu.memory_space<vmem>>, vector<8x16x4xbf16>
    %86 = vector.shape_cast %85 : vector<8x16x4xbf16> to vector<128x4xbf16>
    %c2_86 = arith.constant 2 : index
    %c0_87 = arith.constant 0 : index
    %c0_88 = arith.constant 0 : index
    %c0_89 = arith.constant 0 : index
    %87 = vector.load %arg4[%c2_86, %c0_87, %c0_88, %c0_89] : memref<3x3x4x4xbf16, #tpu.memory_space<vmem>>, vector<1x1x4x4xbf16>
    %88 = vector.shape_cast %87 : vector<1x1x4x4xbf16> to vector<4x4xbf16>
    %cst_90 = arith.constant dense<0.000000e+00> : vector<128x4xf32>
    %89 = tpu.matmul %86, %88, %cst_90 {dimension_numbers = #tpu.dot_dimension_numbers<[1], [0], [0], [1], [0, 0, 1, 1], [], []>} : vector<128x4xbf16>, vector<4x4xbf16>, vector<128x4xf32> -> vector<128x4xf32>
    %c0_91 = arith.constant 0 : index
    %c0_92 = arith.constant 0 : index
    %90 = vector.load %arg14[%c0_91, %c0_92] : memref<128x4xf32, #tpu.memory_space<vmem>>, vector<128x4xf32>
    %91 = arith.addf %90, %89 : vector<128x4xf32>
    %c0_93 = arith.constant 0 : index
    %c0_94 = arith.constant 0 : index
    %92 = vector.load %arg14[%c0_93, %c0_94] : memref<128x4xf32, #tpu.memory_space<vmem>>, vector<128x4xf32>
    tpu.vector_store %arg14[%c0_93, %c0_94], %91 {strides = array<i32>} : memref<128x4xf32, #tpu.memory_space<vmem>>, vector<128x4xf32>,
    %c2_95 = arith.constant 2 : index
    %c1_96 = arith.constant 1 : index
    %c0_97 = arith.constant 0 : index
    %93 = vector.load %arg13[%c2_95, %c1_96, %c0_97] : memref<10x18x4xbf16, #tpu.memory_space<vmem>>, vector<8x16x4xbf16>
    %94 = vector.shape_cast %93 : vector<8x16x4xbf16> to vector<128x4xbf16>
    %c2_98 = arith.constant 2 : index
    %c1_99 = arith.constant 1 : index
    %c0_100 = arith.constant 0 : index
    %c0_101 = arith.constant 0 : index
    %95 = vector.load %arg4[%c2_98, %c1_99, %c0_100, %c0_101] : memref<3x3x4x4xbf16, #tpu.memory_space<vmem>>, vector<1x1x4x4xbf16>
    %96 = vector.shape_cast %95 : vector<1x1x4x4xbf16> to vector<4x4xbf16>
    %cst_102 = arith.constant dense<0.000000e+00> : vector<128x4xf32>
    %97 = tpu.matmul %94, %96, %cst_102 {dimension_numbers = #tpu.dot_dimension_numbers<[1], [0], [0], [1], [0, 0, 1, 1], [], []>} : vector<128x4xbf16>, vector<4x4xbf16>, vector<128x4xf32> -> vector<128x4xf32>
    %c0_103 = arith.constant 0 : index
    %c0_104 = arith.constant 0 : index
    %98 = vector.load %arg14[%c0_103, %c0_104] : memref<128x4xf32, #tpu.memory_space<vmem>>, vector<128x4xf32>
    %99 = arith.addf %98, %97 : vector<128x4xf32>
    %c0_105 = arith.constant 0 : index
    %c0_106 = arith.constant 0 : index
    %100 = vector.load %arg14[%c0_105, %c0_106] : memref<128x4xf32, #tpu.memory_space<vmem>>, vector<128x4xf32>
    tpu.vector_store %arg14[%c0_105, %c0_106], %99 {strides = array<i32>} : memref<128x4xf32, #tpu.memory_space<vmem>>, vector<128x4xf32>,
    %c2_107 = arith.constant 2 : index
    %c2_108 = arith.constant 2 : index
    %c0_109 = arith.constant 0 : index
    %101 = vector.load %arg13[%c2_107, %c2_108, %c0_109] : memref<10x18x4xbf16, #tpu.memory_space<vmem>>, vector<8x16x4xbf16>
    %102 = vector.shape_cast %101 : vector<8x16x4xbf16> to vector<128x4xbf16>
    %c2_110 = arith.constant 2 : index
    %c2_111 = arith.constant 2 : index
    %c0_112 = arith.constant 0 : index
    %c0_113 = arith.constant 0 : index
    %103 = vector.load %arg4[%c2_110, %c2_111, %c0_112, %c0_113] : memref<3x3x4x4xbf16, #tpu.memory_space<vmem>>, vector<1x1x4x4xbf16>
    %104 = vector.shape_cast %103 : vector<1x1x4x4xbf16> to vector<4x4xbf16>
    %cst_114 = arith.constant dense<0.000000e+00> : vector<128x4xf32>
    %105 = tpu.matmul %102, %104, %cst_114 {dimension_numbers = #tpu.dot_dimension_numbers<[1], [0], [0], [1], [0, 0, 1, 1], [], []>} : vector<128x4xbf16>, vector<4x4xbf16>, vector<128x4xf32> -> vector<128x4xf32>
    %c0_115 = arith.constant 0 : index
    %c0_116 = arith.constant 0 : index
    %106 = vector.load %arg14[%c0_115, %c0_116] : memref<128x4xf32, #tpu.memory_space<vmem>>, vector<128x4xf32>
    %107 = arith.addf %106, %105 : vector<128x4xf32>
    %c0_117 = arith.constant 0 : index
    %c0_118 = arith.constant 0 : index
    %108 = vector.load %arg14[%c0_117, %c0_118] : memref<128x4xf32, #tpu.memory_space<vmem>>, vector<128x4xf32>
    tpu.vector_store %arg14[%c0_117, %c0_118], %107 {strides = array<i32>} : memref<128x4xf32, #tpu.memory_space<vmem>>, vector<128x4xf32>,
    %c0_119 = arith.constant 0 : index
    %c0_120 = arith.constant 0 : index
    %109 = vector.load %arg14[%c0_119, %c0_120] : memref<128x4xf32, #tpu.memory_space<vmem>>, vector<128x4xf32>
    %c0_121 = arith.constant 0 : index
    %c0_122 = arith.constant 0 : index
    %110 = vector.load %arg8[%c0_121, %c0_122] : memref<1x4xf32, #tpu.memory_space<vmem>>, vector<1x4xf32>
    %111 = vector.broadcast %110 : vector<1x4xf32> to vector<128x4xf32>
    %112 = arith.mulf %109, %111 : vector<128x4xf32>
    %c0_123 = arith.constant 0 : index
    %c0_124 = arith.constant 0 : index
    %113 = vector.load %arg9[%c0_123, %c0_124] : memref<1x4xf32, #tpu.memory_space<vmem>>, vector<1x4xf32>
    %114 = vector.broadcast %113 : vector<1x4xf32> to vector<128x4xf32>
    %115 = arith.addf %112, %114 : vector<128x4xf32>
    %cst_125 = arith.constant 0.000000e+00 : f32
    %116 = vector.broadcast %cst_125 : f32 to vector<128x4xf32>
    %117 = arith.maximumf %115, %116 : vector<128x4xf32>
    %118 = arith.truncf %117 : vector<128x4xf32> to vector<128x4xbf16>
    %c0_126 = arith.constant 0 : index
    %c0_127 = arith.constant 0 : index
    %119 = vector.load %arg5[%c0_126, %c0_127] : memref<4x16xbf16, #tpu.memory_space<vmem>>, vector<4x16xbf16>
    %cst_128 = arith.constant dense<0.000000e+00> : vector<128x16xf32>
    %120 = tpu.matmul %118, %119, %cst_128 {dimension_numbers = #tpu.dot_dimension_numbers<[1], [0], [0], [1], [0, 0, 1, 1], [], []>} : vector<128x4xbf16>, vector<4x16xbf16>, vector<128x16xf32> -> vector<128x16xf32>
    %c0_129 = arith.constant 0 : index
    %c0_130 = arith.constant 0 : index
    %121 = vector.load %arg10[%c0_129, %c0_130] : memref<1x16xf32, #tpu.memory_space<vmem>>, vector<1x16xf32>
    %122 = vector.broadcast %121 : vector<1x16xf32> to vector<128x16xf32>
    %123 = arith.mulf %120, %122 : vector<128x16xf32>
    %c0_131 = arith.constant 0 : index
    %c0_132 = arith.constant 0 : index
    %124 = vector.load %arg11[%c0_131, %c0_132] : memref<1x16xf32, #tpu.memory_space<vmem>>, vector<1x16xf32>
    %125 = vector.broadcast %124 : vector<1x16xf32> to vector<128x16xf32>
    %126 = arith.addf %123, %125 : vector<128x16xf32>
    %c1_i32 = arith.constant 1 : i32
    %127 = arith.addi %1, %c1_i32 : i32
    %c0_133 = arith.constant 0 : index
    %128 = arith.index_cast %127 : i32 to index
    %c1_134 = arith.constant 1 : index
    %c0_135 = arith.constant 0 : index
    %129 = vector.load %arg2[%c0_133, %128, %c1_134, %c0_135] : memref<1x18x18x16xf32, #tpu.memory_space<vmem>>, vector<1x8x16x16xf32>
    %130 = vector.shape_cast %129 : vector<1x8x16x16xf32> to vector<8x16x16xf32>
    %131 = vector.shape_cast %130 : vector<8x16x16xf32> to vector<128x16xf32>
    %132 = arith.addf %126, %131 : vector<128x16xf32>
    %cst_136 = arith.constant 0.000000e+00 : f32
    %133 = vector.broadcast %cst_136 : f32 to vector<128x16xf32>
    %134 = arith.maximumf %132, %133 : vector<128x16xf32>
    %135 = vector.shape_cast %134 : vector<128x16xf32> to vector<8x16x16xf32>
    %c0_137 = arith.constant 0 : index
    %c0_138 = arith.constant 0 : index
    %c0_139 = arith.constant 0 : index
    %c0_140 = arith.constant 0 : index
    %136 = vector.load %arg12[%c0_137, %c0_138, %c0_139, %c0_140] : memref<1x8x16x16xf32, #tpu.memory_space<vmem>>, vector<1x8x16x16xf32>
    %137 = vector.shape_cast %136 : vector<1x8x16x16xf32> to vector<8x16x16xf32>
    %138 = vector.shape_cast %135 : vector<8x16x16xf32> to vector<1x8x16x16xf32>
    tpu.vector_store %arg12[%c0_137, %c0_138, %c0_139, %c0_140], %138 {strides = array<i32>} : memref<1x8x16x16xf32, #tpu.memory_space<vmem>>, vector<1x8x16x16xf32>,
    return
  }
  func.func @transform_0(%arg0: i32, %arg1: i32) -> (i32, i32, i32, i32) {
    %c0_i32 = arith.constant 0 : i32
    %c0_i32_0 = arith.constant 0 : i32
    %c0_i32_1 = arith.constant 0 : i32
    %c0_i32_2 = arith.constant 0 : i32
    return %arg0, %c0_i32, %c0_i32_0, %c0_i32_1 : i32, i32, i32, i32
  }
  func.func @transform_1(%arg0: i32, %arg1: i32) -> (i32, i32) {
    %c0_i32 = arith.constant 0 : i32
    %c0_i32_0 = arith.constant 0 : i32
    %c0_i32_1 = arith.constant 0 : i32
    return %c0_i32, %c0_i32_0 : i32, i32
  }
  func.func @transform_2(%arg0: i32, %arg1: i32) -> (i32, i32, i32, i32) {
    %c0_i32 = arith.constant 0 : i32
    %c0_i32_0 = arith.constant 0 : i32
    %c0_i32_1 = arith.constant 0 : i32
    %c0_i32_2 = arith.constant 0 : i32
    %c0_i32_3 = arith.constant 0 : i32
    return %c0_i32, %c0_i32_0, %c0_i32_1, %c0_i32_2 : i32, i32, i32, i32
  }
  func.func @transform_3(%arg0: i32, %arg1: i32) -> (i32, i32) {
    %c0_i32 = arith.constant 0 : i32
    %c0_i32_0 = arith.constant 0 : i32
    %c0_i32_1 = arith.constant 0 : i32
    return %c0_i32, %c0_i32_0 : i32, i32
  }
  func.func @transform_4(%arg0: i32, %arg1: i32) -> (i32, i32) {
    %c0_i32 = arith.constant 0 : i32
    %c0_i32_0 = arith.constant 0 : i32
    %c0_i32_1 = arith.constant 0 : i32
    return %c0_i32, %c0_i32_0 : i32, i32
  }
  func.func @transform_5(%arg0: i32, %arg1: i32) -> (i32, i32) {
    %c0_i32 = arith.constant 0 : i32
    %c0_i32_0 = arith.constant 0 : i32
    %c0_i32_1 = arith.constant 0 : i32
    return %c0_i32, %c0_i32_0 : i32, i32
  }
  func.func @transform_6(%arg0: i32, %arg1: i32) -> (i32, i32) {
    %c0_i32 = arith.constant 0 : i32
    %c0_i32_0 = arith.constant 0 : i32
    %c0_i32_1 = arith.constant 0 : i32
    return %c0_i32, %c0_i32_0 : i32, i32
  }
  func.func @transform_7(%arg0: i32, %arg1: i32) -> (i32, i32) {
    %c0_i32 = arith.constant 0 : i32
    %c0_i32_0 = arith.constant 0 : i32
    %c0_i32_1 = arith.constant 0 : i32
    return %c0_i32, %c0_i32_0 : i32, i32
  }
  func.func @transform_8(%arg0: i32, %arg1: i32) -> (i32, i32) {
    %c0_i32 = arith.constant 0 : i32
    %c0_i32_0 = arith.constant 0 : i32
    %c0_i32_1 = arith.constant 0 : i32
    return %c0_i32, %c0_i32_0 : i32, i32
  }
  func.func @transform_9(%arg0: i32, %arg1: i32) -> (i32, i32) {
    %c0_i32 = arith.constant 0 : i32
    %c0_i32_0 = arith.constant 0 : i32
    %c0_i32_1 = arith.constant 0 : i32
    return %c0_i32, %c0_i32_0 : i32, i32
  }
  func.func @transform_10(%arg0: i32, %arg1: i32) -> (i32, i32, i32, i32) {
    %c0_i32 = arith.constant 0 : i32
    %c0_i32_0 = arith.constant 0 : i32
    %c0_i32_1 = arith.constant 0 : i32
    return %arg0, %arg1, %c0_i32, %c0_i32_0 : i32, i32, i32, i32
  }
}

</mosaic_0001>

<llo_original>
// kernel: tpu_custom_call.1
$region0: #{tpu_custom_call.1}
  #allocation0 [shape = 'u32[]', space=smem, size = 0x4, offset = 0x4, fixed_abs, tag = 'smem constant byte address 0x4 - core index']
  #allocation1 [shape = 'u32[72,128]{1,0:T(1,128)}', space=vmem, size = 0x9000, scoped, tag = 'internal scratch']
  #allocation2 [shape = 'bf16[10,18,4]{2,1,0:T(8,128)(2,1)}', space=vmem, size = 0xf000, scoped, tag = 'scratch operand']
  #allocation3 [shape = 'f32[128,4]{1,0:T(8,128)}', space=vmem, size = 0x10000, scoped, tag = 'scratch operand']
  %s0 = inlined_call_operand.vmem [shape: f32[2,18,18,16], index: 0, kind: input, shape index: {}]
  %s1 = inlined_call_operand.vmem [shape: bf16[16,4], index: 1, kind: input, shape index: {}]
  %s2 = inlined_call_operand.vmem [shape: bf16[3,3,4,4], index: 2, kind: input, shape index: {}]
  %s3 = inlined_call_operand.vmem [shape: bf16[4,16], index: 3, kind: input, shape index: {}]
  %s4 = inlined_call_operand.vmem [shape: f32[1,4], index: 4, kind: input, shape index: {}]
  %s5 = inlined_call_operand.vmem [shape: f32[1,4], index: 5, kind: input, shape index: {}]
  %s6 = inlined_call_operand.vmem [shape: f32[1,4], index: 6, kind: input, shape index: {}]
  %s7 = inlined_call_operand.vmem [shape: f32[1,4], index: 7, kind: input, shape index: {}]
  %s8 = inlined_call_operand.vmem [shape: f32[1,16], index: 8, kind: input, shape index: {}]
  %s9 = inlined_call_operand.vmem [shape: f32[1,16], index: 9, kind: input, shape index: {}]
  %s10 = inlined_call_operand.hbm [shape: f32[2,16,16,16], index: 10, kind: output, shape index: {}]
  %s11 = sld [smem:[#allocation0]]
  $region73: #{tpu_custom_call.1} parent=0
    _
  %s13 = ssub.s32 1, %s11
  %s14 = scalar_select 0, %s13, %s11
  $region1: #{tpu_custom_call.1} parent=0
    #allocation4 [shape = 'u8[131072]{0}', space=vmem, size = 0x20000, scoped, tag = 'output window, operand 0']
    #allocation5 [shape = 's32[2]{0}', space=sflag, size = 0x8, scoped, tag = 'scoped memory for tpu_custom_call.1']
    %15 = vsyncpa [#allocation5], 0
    %s16 = scalar_lea.sflag [#allocation5], 1
    %17 = vsyncpa %s16, 0
    loop: start=0, step=1, limit=6
    $region2: #{tpu_custom_call.1} parent=1 // loop_pre_header
      _
    $region3: #{tpu_custom_call.1} parent=1 // loop_header
      %s19 = sphi 0, %s23
      %p20 = scmp.ge.s32.totalorder %s19, 6
      %s26 = sphi 0, %s38
      %s27 = sphi 0, %s34
      %s28 = sphi 0, %s26
      %s29 = sphi 0, %s27
      %s30 = sphi 0, %s28
      %s31 = sphi 0, %s29
      %s41 = sphi 0, %s43
      %s44 = sphi 0, %s41
      %s45 = sphi 0, %s44
      %s61 = sphi 0, %s45
      %s65 = sphi 0, %s65
      %s67 = sphi 0, %s65
      %s68 = sphi 0, %s67
      %s82 = sphi 0, %s68
      %s86 = sphi 0, %s86
      %s88 = sphi 0, %s86
      %s89 = sphi 0, %s88
      %s103 = sphi 0, %s89
      %s107 = sphi 0, %s107
      %s109 = sphi 0, %s107
      %s110 = sphi 0, %s109
      %s124 = sphi 0, %s110
      %s128 = sphi 0, %s128
      %s130 = sphi 0, %s128
      %s131 = sphi 0, %s130
      %s145 = sphi 0, %s131
      %s149 = sphi 0, %s149
      %s151 = sphi 0, %s149
      %s152 = sphi 0, %s151
      %s166 = sphi 0, %s152
      %s170 = sphi 0, %s170
      %s172 = sphi 0, %s170
      %s173 = sphi 0, %s172
      %s187 = sphi 0, %s173
      %s191 = sphi 0, %s191
      %s193 = sphi 0, %s191
      %s194 = sphi 0, %s193
      %s208 = sphi 0, %s194
      %s212 = sphi 0, %s212
      %s214 = sphi 0, %s212
      %s215 = sphi 0, %s214
      %s229 = sphi 0, %s215
      %s233 = sphi 0, %s233
      %s235 = sphi 0, %s233
      %s236 = sphi 0, %s235
      %s250 = sphi 0, %s236
      %s258 = sphi 0, %s260
      %s261 = sphi 0, %s258
      %s262 = sphi 0, %s261
      %s278 = sphi 0, %s262
    $region4: #{tpu_custom_call.1} parent=1 // loop_header_branch
      %22 = sbr.rel (%p20) target = $region8
    $region5: #{tpu_custom_call.1} parent=1 // loop_body
      %s24 = ssub.s32 %s19, 1
      %s25 = ssub.s32 %s19, 2
      %s32 = sadd.s32 1, %s27
      %p33 = scmp.ge.s32.totalorder %s32, 2
      %s34 = scalar_select %p33, 0, %s32
      %s35 = sadd.s32 1, %s26
      %s36 = scalar_select %p33, %s35, %s26
      %p37 = scmp.ge.s32.totalorder %s36, 2
      %s38 = scalar_select %p37, 0, %s36
      %s39 = ssub.s32 %s26, %s38
      %p40 = scmp.eq.s32.totalorder %s39, 0
      %s42 = sadd.s32 %s41, 1
      %s43 = scalar_select %p40, %s41, %s42
      %p46 = pneg %p40
      %p47 = scmp.eq.s32.totalorder %s19, 3
      %p48 = por %p46, %p47
      %p49 = scmp.ne.s32.totalorder %s41, %s44
      %p50 = scmp.eq.s32.totalorder %s19, 0
      %p51 = por %p49, %p50
      %p52 = scmp.ne.s32.totalorder %s41, %s44
      %p53 = scmp.eq.s32.totalorder %s24, 3
      %p54 = por %p52, %p53
      %p55 = scmp.ne.s32.totalorder %s44, %s45
      %p56 = scmp.eq.s32.totalorder %s24, 0
      %p57 = por %p55, %p56
      %p58 = scmp.ne.s32.totalorder %s44, %s45
      %p59 = scmp.eq.s32.totalorder %s25, 3
      %p60 = por %p58, %p59
      %p62 = scmp.ne.s32.totalorder %s45, %s61
      %p63 = scmp.eq.s32.totalorder %s25, 0
      %p64 = por %p62, %p63
      %s66 = sadd.s32 %s65, 1
      %p69 = scmp.eq.s32.totalorder %s19, 3
      %p70 = scmp.ne.s32.totalorder %s65, %s67
      %p71 = scmp.eq.s32.totalorder %s19, 0
      %p72 = por %p70, %p71
      %p73 = scmp.ne.s32.totalorder %s65, %s67
      %p74 = scmp.eq.s32.totalorder %s24, 3
      %p75 = por %p73, %p74
      %p76 = scmp.ne.s32.totalorder %s67, %s68
      %p77 = scmp.eq.s32.totalorder %s24, 0
      %p78 = por %p76, %p77
      %p79 = scmp.ne.s32.totalorder %s67, %s68
      %p80 = scmp.eq.s32.totalorder %s25, 3
      %p81 = por %p79, %p80
      %p83 = scmp.ne.s32.totalorder %s68, %s82
      %p84 = scmp.eq.s32.totalorder %s25, 0
      %p85 = por %p83, %p84
      %s87 = sadd.s32 %s86, 1
      %p90 = scmp.eq.s32.totalorder %s19, 3
      %p91 = scmp.ne.s32.totalorder %s86, %s88
      %p92 = scmp.eq.s32.totalorder %s19, 0
      %p93 = por %p91, %p92
      %p94 = scmp.ne.s32.totalorder %s86, %s88
      %p95 = scmp.eq.s32.totalorder %s24, 3
      %p96 = por %p94, %p95
      %p97 = scmp.ne.s32.totalorder %s88, %s89
      %p98 = scmp.eq.s32.totalorder %s24, 0
      %p99 = por %p97, %p98
      %p100 = scmp.ne.s32.totalorder %s88, %s89
      %p101 = scmp.eq.s32.totalorder %s25, 3
      %p102 = por %p100, %p101
      %p104 = scmp.ne.s32.totalorder %s89, %s103
      %p105 = scmp.eq.s32.totalorder %s25, 0
      %p106 = por %p104, %p105
      %s108 = sadd.s32 %s107, 1
      %p111 = scmp.eq.s32.totalorder %s19, 3
      %p112 = scmp.ne.s32.totalorder %s107, %s109
      %p113 = scmp.eq.s32.totalorder %s19, 0
      %p114 = por %p112, %p113
      %p115 = scmp.ne.s32.totalorder %s107, %s109
      %p116 = scmp.eq.s32.totalorder %s24, 3
      %p117 = por %p115, %p116
      %p118 = scmp.ne.s32.totalorder %s109, %s110
      %p119 = scmp.eq.s32.totalorder %s24, 0
      %p120 = por %p118, %p119
      %p121 = scmp.ne.s32.totalorder %s109, %s110
      %p122 = scmp.eq.s32.totalorder %s25, 3
      %p123 = por %p121, %p122
      %p125 = scmp.ne.s32.totalorder %s110, %s124
      %p126 = scmp.eq.s32.totalorder %s25, 0
      %p127 = por %p125, %p126
      %s129 = sadd.s32 %s128, 1
      %p132 = scmp.eq.s32.totalorder %s19, 3
      %p133 = scmp.ne.s32.totalorder %s128, %s130
      %p134 = scmp.eq.s32.totalorder %s19, 0
      %p135 = por %p133, %p134
      %p136 = scmp.ne.s32.totalorder %s128, %s130
      %p137 = scmp.eq.s32.totalorder %s24, 3
      %p138 = por %p136, %p137
      %p139 = scmp.ne.s32.totalorder %s130, %s131
      %p140 = scmp.eq.s32.totalorder %s24, 0
      %p141 = por %p139, %p140
      %p142 = scmp.ne.s32.totalorder %s130, %s131
      %p143 = scmp.eq.s32.totalorder %s25, 3
      %p144 = por %p142, %p143
      %p146 = scmp.ne.s32.totalorder %s131, %s145
      %p147 = scmp.eq.s32.totalorder %s25, 0
      %p148 = por %p146, %p147
      %s150 = sadd.s32 %s149, 1
      %p153 = scmp.eq.s32.totalorder %s19, 3
      %p154 = scmp.ne.s32.totalorder %s149, %s151
      %p155 = scmp.eq.s32.totalorder %s19, 0
      %p156 = por %p154, %p155
      %p157 = scmp.ne.s32.totalorder %s149, %s151
      %p158 = scmp.eq.s32.totalorder %s24, 3
      %p159 = por %p157, %p158
      %p160 = scmp.ne.s32.totalorder %s151, %s152
      %p161 = scmp.eq.s32.totalorder %s24, 0
      %p162 = por %p160, %p161
      %p163 = scmp.ne.s32.totalorder %s151, %s152
      %p164 = scmp.eq.s32.totalorder %s25, 3
      %p165 = por %p163, %p164
      %p167 = scmp.ne.s32.totalorder %s152, %s166
      %p168 = scmp.eq.s32.totalorder %s25, 0
      %p169 = por %p167, %p168
      %s171 = sadd.s32 %s170, 1
      %p174 = scmp.eq.s32.totalorder %s19, 3
      %p175 = scmp.ne.s32.totalorder %s170, %s172
      %p176 = scmp.eq.s32.totalorder %s19, 0
      %p177 = por %p175, %p176
      %p178 = scmp.ne.s32.totalorder %s170, %s172
      %p179 = scmp.eq.s32.totalorder %s24, 3
      %p180 = por %p178, %p179
      %p181 = scmp.ne.s32.totalorder %s172, %s173
      %p182 = scmp.eq.s32.totalorder %s24, 0
      %p183 = por %p181, %p182
      %p184 = scmp.ne.s32.totalorder %s172, %s173
      %p185 = scmp.eq.s32.totalorder %s25, 3
      %p186 = por %p184, %p185
      %p188 = scmp.ne.s32.totalorder %s173, %s187
      %p189 = scmp.eq.s32.totalorder %s25, 0
      %p190 = por %p188, %p189
      %s192 = sadd.s32 %s191, 1
      %p195 = scmp.eq.s32.totalorder %s19, 3
      %p196 = scmp.ne.s32.totalorder %s191, %s193
      %p197 = scmp.eq.s32.totalorder %s19, 0
      %p198 = por %p196, %p197
      %p199 = scmp.ne.s32.totalorder %s191, %s193
      %p200 = scmp.eq.s32.totalorder %s24, 3
      %p201 = por %p199, %p200
      %p202 = scmp.ne.s32.totalorder %s193, %s194
      %p203 = scmp.eq.s32.totalorder %s24, 0
      %p204 = por %p202, %p203
      %p205 = scmp.ne.s32.totalorder %s193, %s194
      %p206 = scmp.eq.s32.totalorder %s25, 3
      %p207 = por %p205, %p206
      %p209 = scmp.ne.s32.totalorder %s194, %s208
      %p210 = scmp.eq.s32.totalorder %s25, 0
      %p211 = por %p209, %p210
      %s213 = sadd.s32 %s212, 1
      %p216 = scmp.eq.s32.totalorder %s19, 3
      %p217 = scmp.ne.s32.totalorder %s212, %s214
      %p218 = scmp.eq.s32.totalorder %s19, 0
      %p219 = por %p217, %p218
      %p220 = scmp.ne.s32.totalorder %s212, %s214
      %p221 = scmp.eq.s32.totalorder %s24, 3
      %p222 = por %p220, %p221
      %p223 = scmp.ne.s32.totalorder %s214, %s215
      %p224 = scmp.eq.s32.totalorder %s24, 0
      %p225 = por %p223, %p224
      %p226 = scmp.ne.s32.totalorder %s214, %s215
      %p227 = scmp.eq.s32.totalorder %s25, 3
      %p228 = por %p226, %p227
      %p230 = scmp.ne.s32.totalorder %s215, %s229
      %p231 = scmp.eq.s32.totalorder %s25, 0
      %p232 = por %p230, %p231
      %s234 = sadd.s32 %s233, 1
      %p237 = scmp.eq.s32.totalorder %s19, 3
      %p238 = scmp.ne.s32.totalorder %s233, %s235
      %p239 = scmp.eq.s32.totalorder %s19, 0
      %p240 = por %p238, %p239
      %p241 = scmp.ne.s32.totalorder %s233, %s235
      %p242 = scmp.eq.s32.totalorder %s24, 3
      %p243 = por %p241, %p242
      %p244 = scmp.ne.s32.totalorder %s235, %s236
      %p245 = scmp.eq.s32.totalorder %s24, 0
      %p246 = por %p244, %p245
      %p247 = scmp.ne.s32.totalorder %s235, %s236
      %p248 = scmp.eq.s32.totalorder %s25, 3
      %p249 = por %p247, %p248
      %p251 = scmp.ne.s32.totalorder %s236, %s250
      %p252 = scmp.eq.s32.totalorder %s25, 0
      %p253 = por %p251, %p252
      %s254 = ssub.s32 %s26, %s38
      %s255 = ssub.s32 %s27, %s34
      %s256 = sor.u32 %s254, %s255
      %p257 = scmp.eq.s32.totalorder %s256, 0
      %s259 = sadd.s32 %s258, 1
      %s260 = scalar_select %p257, %s258, %s259
      %p263 = pneg %p257
      %p264 = scmp.eq.s32.totalorder %s19, 3
      %p265 = por %p263, %p264
      %p266 = scmp.ne.s32.totalorder %s258, %s261
      %p267 = scmp.eq.s32.totalorder %s19, 0
      %p268 = por %p266, %p267
      %p269 = scmp.ne.s32.totalorder %s258, %s261
      %p270 = scmp.eq.s32.totalorder %s24, 3
      %p271 = por %p269, %p270
      %p272 = scmp.ne.s32.totalorder %s261, %s262
      %p273 = scmp.eq.s32.totalorder %s24, 0
      %p274 = por %p272, %p273
      %p275 = scmp.ne.s32.totalorder %s261, %s262
      %p276 = scmp.eq.s32.totalorder %s25, 3
      %p277 = por %p275, %p276
      %p279 = scmp.ne.s32.totalorder %s262, %s278
      %p280 = scmp.eq.s32.totalorder %s25, 0
      %p281 = por %p279, %p280
      %p282 = scmp.le.s32.totalorder 1, %s19
      %p283 = scmp.lt.s32.totalorder %s19, 5
      %p284 = pnand %p282, %p283
      %p285 = pneg %p284
      // Predicated region
      $region9: #{tpu_custom_call.1} parent=5 // pred_check
        _
      $region10: #{tpu_custom_call.1} parent=5 // pred_check_branch
        %287 = sbr.rel (%p284) target = $region12
      $region11: #{tpu_custom_call.1} parent=5 // pred_region
        %s288 = ssub.s32 %s19, 1
        // Predicated region
        $region13: #{tpu_custom_call.1} parent=11 // pred_check
          %p289 = pneg %p78
        $region14: #{tpu_custom_call.1} parent=11 // pred_check_branch
          %291 = sbr.rel (%p289) target = $region16
        $region15: #{tpu_custom_call.1} parent=11 // pred_region
          _
        $region16: #{tpu_custom_call.1} parent=11 // pred_fallthru
          _
        // Predicated region
        $region17: #{tpu_custom_call.1} parent=11 // pred_check
          %p292 = pneg %p99
        $region18: #{tpu_custom_call.1} parent=11 // pred_check_branch
          %294 = sbr.rel (%p292) target = $region20
        $region19: #{tpu_custom_call.1} parent=11 // pred_region
          _
        $region20: #{tpu_custom_call.1} parent=11 // pred_fallthru
          _
        // Predicated region
        $region21: #{tpu_custom_call.1} parent=11 // pred_check
          %p295 = pneg %p120
        $region22: #{tpu_custom_call.1} parent=11 // pred_check_branch
          %297 = sbr.rel (%p295) target = $region24
        $region23: #{tpu_custom_call.1} parent=11 // pred_region
          _
        $region24: #{tpu_custom_call.1} parent=11 // pred_fallthru
          _
        // Predicated region
        $region25: #{tpu_custom_call.1} parent=11 // pred_check
          %p298 = pneg %p141
        $region26: #{tpu_custom_call.1} parent=11 // pred_check_branch
          %300 = sbr.rel (%p298) target = $region28
        $region27: #{tpu_custom_call.1} parent=11 // pred_region
          _
        $region28: #{tpu_custom_call.1} parent=11 // pred_fallthru
          _
        // Predicated region
        $region29: #{tpu_custom_call.1} parent=11 // pred_check
          %p301 = pneg %p162
        $region30: #{tpu_custom_call.1} parent=11 // pred_check_branch
          %303 = sbr.rel (%p301) target = $region32
        $region31: #{tpu_custom_call.1} parent=11 // pred_region
          _
        $region32: #{tpu_custom_call.1} parent=11 // pred_fallthru
          _
        // Predicated region
        $region33: #{tpu_custom_call.1} parent=11 // pred_check
          %p304 = pneg %p183
        $region34: #{tpu_custom_call.1} parent=11 // pred_check_branch
          %306 = sbr.rel (%p304) target = $region36
        $region35: #{tpu_custom_call.1} parent=11 // pred_region
          _
        $region36: #{tpu_custom_call.1} parent=11 // pred_fallthru
          _
        // Predicated region
        $region37: #{tpu_custom_call.1} parent=11 // pred_check
          %p307 = pneg %p204
        $region38: #{tpu_custom_call.1} parent=11 // pred_check_branch
          %309 = sbr.rel (%p307) target = $region40
        $region39: #{tpu_custom_call.1} parent=11 // pred_region
          _
        $region40: #{tpu_custom_call.1} parent=11 // pred_fallthru
          _
        // Predicated region
        $region41: #{tpu_custom_call.1} parent=11 // pred_check
          %p310 = pneg %p225
        $region42: #{tpu_custom_call.1} parent=11 // pred_check_branch
          %312 = sbr.rel (%p310) target = $region44
        $region43: #{tpu_custom_call.1} parent=11 // pred_region
          _
        $region44: #{tpu_custom_call.1} parent=11 // pred_fallthru
          _
        // Predicated region
        $region45: #{tpu_custom_call.1} parent=11 // pred_check
          %p313 = pneg %p246
        $region46: #{tpu_custom_call.1} parent=11 // pred_check_branch
          %315 = sbr.rel (%p313) target = $region48
        $region47: #{tpu_custom_call.1} parent=11 // pred_region
          _
        $region48: #{tpu_custom_call.1} parent=11 // pred_fallthru
          _
      $region12: #{tpu_custom_call.1} parent=5 // pred_fallthru
        _
      %p316 = scmp.lt.s32.totalorder %s19, 4
      // Predicated region
      $region49: #{tpu_custom_call.1} parent=5 // pred_check
        %p317 = pneg %p316
      $region50: #{tpu_custom_call.1} parent=5 // pred_check_branch
        %319 = sbr.rel (%p317) target = $region52
      $region51: #{tpu_custom_call.1} parent=5 // pred_region
        // Predicated region
        $region53: #{tpu_custom_call.1} parent=51 // pred_check
          %p320 = pneg %p51
        $region54: #{tpu_custom_call.1} parent=51 // pred_check_branch
          %322 = sbr.rel (%p320) target = $region56
        $region55: #{tpu_custom_call.1} parent=51 // pred_region
          %p323 = scmp.lt.s32.totalorder %s26, 1
          %s324 = scalar_select %p323, %s26, 1
          %s325 = smul.addr %s324, 54
          %s326 = smul.addr %s325, 8
          %s327 = scalar_lea.vmem %s0, %s326
        $region56: #{tpu_custom_call.1} parent=51 // pred_fallthru
          _
      $region52: #{tpu_custom_call.1} parent=5 // pred_fallthru
        _
      %p328 = scmp.le.s32.totalorder 1, %s19
      %p329 = scmp.lt.s32.totalorder %s19, 5
      %p330 = pnand %p328, %p329
      %p331 = pneg %p330
      // Predicated region
      $region57: #{tpu_custom_call.1} parent=5 // pred_check
        _
      $region58: #{tpu_custom_call.1} parent=5 // pred_check_branch
        %333 = sbr.rel (%p330) target = $region60
      $region59: #{tpu_custom_call.1} parent=5 // pred_region
        %s334 = ssub.s32 %s19, 1
        %p335 = scmp.lt.s32.totalorder %s28, 1
        %s336 = scalar_select %p335, %s28, 1
        %s337 = smul.addr %s336, 54
        %s338 = smul.addr %s337, 8
        %s339 = scalar_lea.vmem %s0, %s338
        %p340 = pneg %p57
        %p341 = pneg %p54
        %p342 = pneg %p78
        %p343 = pneg %p75
        %p344 = pneg %p99
        %p345 = pneg %p96
        %p346 = pneg %p120
        %p347 = pneg %p117
        %p348 = pneg %p141
        %p349 = pneg %p138
        %p350 = pneg %p162
        %p351 = pneg %p159
        %p352 = pneg %p183
        %p353 = pneg %p180
        %p354 = pneg %p204
        %p355 = pneg %p201
        %p356 = pneg %p225
        %p357 = pneg %p222
        %p358 = pneg %p246
        %p359 = pneg %p243
        %p360 = pneg %p274
        %p361 = pneg %p271
        %s362 = sand.u32 %s261, 1
        %s363 = scalar_lea.sflag [#allocation5], %s362
        %s364 = sand.u32 %s261, 1
        %s365 = smul.addr %s364, 128
        %s366 = scalar_lea.vmem [#allocation4], %s365
        %p367 = scmp.lt.s32.totalorder %s28, 1
        %s368 = scalar_select %p367, %s28, 1
        %s369 = smul.addr %s368, 54
        %s370 = smul.addr %s369, 8
        %s371 = scalar_lea.vmem %s0, %s370
        %s372 = smul.u32 8, %s29
        %s374 = smul.u32 %s29, 8
        %s375 = smul.u32 %s374, 24
        %s376 = scalar_lea.vmem %s371, %s375
        %v377 = vld [vmem:[%s376] sm:$0xff]
        %v378 = vld [vmem:[%s376 + $0x8] sm:$0xff]
        %v379 = vld [vmem:[%s376 + $0x10] sm:$0x3]
        %v380 = vld [vmem:[%s376 + $0x18] sm:$0xff]
        %v381 = vld [vmem:[%s376 + $0x20] sm:$0xff]
        %v382 = vld [vmem:[%s376 + $0x28] sm:$0x3]
        %v383 = vld [vmem:[%s376 + $0x30] sm:$0xff]
        %v384 = vld [vmem:[%s376 + $0x38] sm:$0xff]
        %v385 = vld [vmem:[%s376 + $0x40] sm:$0x3]
        %v386 = vld [vmem:[%s376 + $0x48] sm:$0xff]
        %v387 = vld [vmem:[%s376 + $0x50] sm:$0xff]
        %v388 = vld [vmem:[%s376 + $0x58] sm:$0x3]
        %v389 = vld [vmem:[%s376 + $0x60] sm:$0xff]
        %v390 = vld [vmem:[%s376 + $0x68] sm:$0xff]
        %v391 = vld [vmem:[%s376 + $0x70] sm:$0x3]
        %v392 = vld [vmem:[%s376 + $0x78] sm:$0xff]
        %v393 = vld [vmem:[%s376 + $0x80] sm:$0xff]
        %v394 = vld [vmem:[%s376 + $0x88] sm:$0x3]
        %v395 = vld [vmem:[%s376 + $0x90] sm:$0xff]
        %v396 = vld [vmem:[%s376 + $0x98] sm:$0xff]
        %v397 = vld [vmem:[%s376 + $0xa0] sm:$0x3]
        %v398 = vld [vmem:[%s376 + $0xa8] sm:$0xff]
        %v399 = vld [vmem:[%s376 + $0xb0] sm:$0xff]
        %v400 = vld [vmem:[%s376 + $0xb8] sm:$0x3]
        %v401 = vld [vmem:[%s376 + $0xc0] sm:$0xff]
        %v402 = vld [vmem:[%s376 + $0xc8] sm:$0xff]
        %v403 = vld [vmem:[%s376 + $0xd0] sm:$0x3]
        %v404 = vld [vmem:[%s376 + $0xd8] sm:$0xff]
        %v405 = vld [vmem:[%s376 + $0xe0] sm:$0xff]
        %v406 = vld [vmem:[%s376 + $0xe8] sm:$0x3]
        %v437 = vrot.slane %v377, 2
        %v438 = vrot.slane %v377, 4
        %v439 = vrot.slane %v377, 6
        %v440 = vrot.slane %v378, 2
        %v441 = vrot.slane %v378, 4
        %v442 = vrot.slane %v378, 6
        %v443 = vrot.slane %v380, 2
        %v444 = vrot.slane %v380, 4
        %v445 = vrot.slane %v380, 6
        %v446 = vrot.slane %v381, 2
        %v447 = vrot.slane %v381, 4
        %v448 = vrot.slane %v381, 6
        %v449 = vrot.slane %v383, 2
        %v450 = vrot.slane %v383, 4
        %v451 = vrot.slane %v383, 6
        %v452 = vrot.slane %v384, 2
        %v453 = vrot.slane %v384, 4
        %v454 = vrot.slane %v384, 6
        %v455 = vrot.slane %v386, 2
        %v456 = vrot.slane %v386, 4
        %v457 = vrot.slane %v386, 6
        %v458 = vrot.slane %v387, 2
        %v459 = vrot.slane %v387, 4
        %v460 = vrot.slane %v387, 6
        %v461 = vrot.slane %v389, 2
        %v462 = vrot.slane %v389, 4
        %v463 = vrot.slane %v389, 6
        %v464 = vrot.slane %v390, 2
        %v465 = vrot.slane %v390, 4
        %v466 = vrot.slane %v390, 6
        %v467 = vrot.slane %v392, 2
        %v468 = vrot.slane %v392, 4
        %v469 = vrot.slane %v392, 6
        %v470 = vrot.slane %v393, 2
        %v471 = vrot.slane %v393, 4
        %v472 = vrot.slane %v393, 6
        %v473 = vrot.slane %v395, 2
        %v474 = vrot.slane %v395, 4
        %v475 = vrot.slane %v395, 6
        %v476 = vrot.slane %v396, 2
        %v477 = vrot.slane %v396, 4
        %v478 = vrot.slane %v396, 6
        %v479 = vrot.slane %v398, 2
        %v480 = vrot.slane %v398, 4
        %v481 = vrot.slane %v398, 6
        %v482 = vrot.slane %v399, 2
        %v483 = vrot.slane %v399, 4
        %v484 = vrot.slane %v399, 6
        %v485 = vrot.slane %v401, 2
        %v486 = vrot.slane %v401, 4
        %v487 = vrot.slane %v401, 6
        %v488 = vrot.slane %v402, 2
        %v489 = vrot.slane %v402, 4
        %v490 = vrot.slane %v402, 6
        %v491 = vrot.slane %v404, 2
        %v492 = vrot.slane %v404, 4
        %v493 = vrot.slane %v404, 6
        %v494 = vrot.slane %v405, 2
        %v495 = vrot.slane %v405, 4
        %v496 = vrot.slane %v405, 6
        %497 = vst [vmem:[#allocation1] ss:$4 sm:$0xff] %v377
        %s498 = scalar_lea.vmem [#allocation1], 1
        %499 = vst [vmem:[%s498] ss:$4 sm:$0xff] %v437
        %s500 = scalar_lea.vmem [#allocation1], 2
        %501 = vst [vmem:[%s500] ss:$4 sm:$0xff] %v438
        %s502 = scalar_lea.vmem [#allocation1], 3
        %503 = vst [vmem:[%s502] ss:$4 sm:$0xff] %v439
        %s504 = scalar_lea.vmem [#allocation1], 32
        %505 = vst [vmem:[%s504] ss:$4 sm:$0xff] %v378
        %s506 = scalar_lea.vmem [#allocation1], 33
        %507 = vst [vmem:[%s506] ss:$4 sm:$0xff] %v440
        %s508 = scalar_lea.vmem [#allocation1], 34
        %509 = vst [vmem:[%s508] ss:$4 sm:$0xff] %v441
        %s510 = scalar_lea.vmem [#allocation1], 35
        %511 = vst [vmem:[%s510] ss:$4 sm:$0xff] %v442
        %v512 = vld.sshfl [vmem:[#allocation1] sm:$0xff pattern:$0x73625140]
        %v513 = vld.sshfl [vmem:[#allocation1 + $0x20] sm:$0xff pattern:$0x73625140]
        %514 = vst [vmem:[#allocation1] ss:$4 sm:$0xff] %v379
        %515 = vst [vmem:[%s498] ss:$4 sm:$0xff] %v380
        %516 = vst [vmem:[%s500] ss:$4 sm:$0xff] %v443
        %517 = vst [vmem:[%s502] ss:$4 sm:$0xff] %v444
        %518 = vst [vmem:[%s504] ss:$4 sm:$0xff] %v445
        %519 = vst [vmem:[%s506] ss:$4 sm:$0xff] %v381
        %520 = vst [vmem:[%s508] ss:$4 sm:$0xff] %v446
        %521 = vst [vmem:[%s510] ss:$4 sm:$0xff] %v447
        %v522 = vld.sshfl [vmem:[#allocation1] sm:$0xff pattern:$0x73625140]
        %v523 = vld.sshfl [vmem:[#allocation1 + $0x20] sm:$0xff pattern:$0x73625140]
        %524 = vst [vmem:[#allocation1] ss:$4 sm:$0xff] %v448
        %525 = vst [vmem:[%s498] ss:$4 sm:$0xff] %v382
        %526 = vst [vmem:[%s500] ss:$4 sm:$0xff] %v383
        %527 = vst [vmem:[%s502] ss:$4 sm:$0xff] %v449
        %528 = vst [vmem:[%s504] ss:$4 sm:$0xff] %v450
        %529 = vst [vmem:[%s506] ss:$4 sm:$0xff] %v451
        %530 = vst [vmem:[%s508] ss:$4 sm:$0xff] %v384
        %531 = vst [vmem:[%s510] ss:$4 sm:$0xff] %v452
        %v532 = vld.sshfl [vmem:[#allocation1] sm:$0xff pattern:$0x73625140]
        %v533 = vld.sshfl [vmem:[#allocation1 + $0x20] sm:$0xff pattern:$0x73625140]
        %534 = vst [vmem:[#allocation1] ss:$4 sm:$0xff] %v453
        %535 = vst [vmem:[%s498] ss:$4 sm:$0xff] %v454
        %536 = vst [vmem:[%s500] ss:$4 sm:$0xff] %v385
        %537 = vst [vmem:[%s502] ss:$4 sm:$0xff] %v386
        %538 = vst [vmem:[%s504] ss:$4 sm:$0xff] %v455
        %539 = vst [vmem:[%s506] ss:$4 sm:$0xff] %v456
        %540 = vst [vmem:[%s508] ss:$4 sm:$0xff] %v457
        %541 = vst [vmem:[%s510] ss:$4 sm:$0xff] %v387
        %v542 = vld.sshfl [vmem:[#allocation1] sm:$0xff pattern:$0x73625140]
        %v543 = vld.sshfl [vmem:[#allocation1 + $0x20] sm:$0xff pattern:$0x73625140]
        %544 = vst [vmem:[#allocation1] ss:$4 sm:$0xff] %v458
        %545 = vst [vmem:[%s498] ss:$4 sm:$0xff] %v459
        %546 = vst [vmem:[%s500] ss:$4 sm:$0xff] %v460
        %547 = vst [vmem:[%s502] ss:$4 sm:$0xff] %v388
        %548 = vst [vmem:[%s504] ss:$4 sm:$0xff] %v389
        %549 = vst [vmem:[%s506] ss:$4 sm:$0xff] %v461
        %550 = vst [vmem:[%s508] ss:$4 sm:$0xff] %v462
        %551 = vst [vmem:[%s510] ss:$4 sm:$0xff] %v463
        %v552 = vld.sshfl [vmem:[#allocation1] sm:$0xff pattern:$0x73625140]
        %v553 = vld.sshfl [vmem:[#allocation1 + $0x20] sm:$0xff pattern:$0x73625140]
        %554 = vst [vmem:[#allocation1] ss:$4 sm:$0xff] %v390
        %555 = vst [vmem:[%s498] ss:$4 sm:$0xff] %v464
        %556 = vst [vmem:[%s500] ss:$4 sm:$0xff] %v465
        %557 = vst [vmem:[%s502] ss:$4 sm:$0xff] %v466
        %558 = vst [vmem:[%s504] ss:$4 sm:$0xff] %v391
        %559 = vst [vmem:[%s506] ss:$4 sm:$0xff] %v392
        %560 = vst [vmem:[%s508] ss:$4 sm:$0xff] %v467
        %561 = vst [vmem:[%s510] ss:$4 sm:$0xff] %v468
        %v562 = vld.sshfl [vmem:[#allocation1] sm:$0xff pattern:$0x73625140]
        %v563 = vld.sshfl [vmem:[#allocation1 + $0x20] sm:$0xff pattern:$0x73625140]
        %564 = vst [vmem:[#allocation1] ss:$4 sm:$0xff] %v469
        %565 = vst [vmem:[%s498] ss:$4 sm:$0xff] %v393
        %566 = vst [vmem:[%s500] ss:$4 sm:$0xff] %v470
        %567 = vst [vmem:[%s502] ss:$4 sm:$0xff] %v471
        %568 = vst [vmem:[%s504] ss:$4 sm:$0xff] %v472
        %569 = vst [vmem:[%s506] ss:$4 sm:$0xff] %v394
        %570 = vst [vmem:[%s508] ss:$4 sm:$0xff] %v395
        %571 = vst [vmem:[%s510] ss:$4 sm:$0xff] %v473
        %v572 = vld.sshfl [vmem:[#allocation1] sm:$0xff pattern:$0x73625140]
        %v573 = vld.sshfl [vmem:[#allocation1 + $0x20] sm:$0xff pattern:$0x73625140]
        %574 = vst [vmem:[#allocation1] ss:$4 sm:$0xff] %v474
        %575 = vst [vmem:[%s498] ss:$4 sm:$0xff] %v475
        %576 = vst [vmem:[%s500] ss:$4 sm:$0xff] %v396
        %577 = vst [vmem:[%s502] ss:$4 sm:$0xff] %v476
        %578 = vst [vmem:[%s504] ss:$4 sm:$0xff] %v477
        %579 = vst [vmem:[%s506] ss:$4 sm:$0xff] %v478
        %580 = vst [vmem:[%s508] ss:$4 sm:$0xff] %v397
        %581 = vst [vmem:[%s510] ss:$4 sm:$0xff] %v398
        %v582 = vld.sshfl [vmem:[#allocation1] sm:$0xff pattern:$0x73625140]
        %v583 = vld.sshfl [vmem:[#allocation1 + $0x20] sm:$0xff pattern:$0x73625140]
        %584 = vst [vmem:[#allocation1] ss:$4 sm:$0xff] %v479
        %585 = vst [vmem:[%s498] ss:$4 sm:$0xff] %v480
        %586 = vst [vmem:[%s500] ss:$4 sm:$0xff] %v481
        %587 = vst [vmem:[%s502] ss:$4 sm:$0xff] %v399
        %588 = vst [vmem:[%s504] ss:$4 sm:$0xff] %v482
        %589 = vst [vmem:[%s506] ss:$4 sm:$0xff] %v483
        %590 = vst [vmem:[%s508] ss:$4 sm:$0xff] %v484
        %591 = vst [vmem:[%s510] ss:$4 sm:$0xff] %v400
        %v592 = vld.sshfl [vmem:[#allocation1] sm:$0xff pattern:$0x73625140]
        %v593 = vld.sshfl [vmem:[#allocation1 + $0x20] sm:$0xff pattern:$0x73625140]
        %594 = vst [vmem:[#allocation1] ss:$4 sm:$0xff] %v401
        %595 = vst [vmem:[%s498] ss:$4 sm:$0xff] %v485
        %596 = vst [vmem:[%s500] ss:$4 sm:$0xff] %v486
        %597 = vst [vmem:[%s502] ss:$4 sm:$0xff] %v487
        %598 = vst [vmem:[%s504] ss:$4 sm:$0xff] %v402
        %599 = vst [vmem:[%s506] ss:$4 sm:$0xff] %v488
        %600 = vst [vmem:[%s508] ss:$4 sm:$0xff] %v489
        %601 = vst [vmem:[%s510] ss:$4 sm:$0xff] %v490
        %v602 = vld.sshfl [vmem:[#allocation1] sm:$0xff pattern:$0x73625140]
        %v603 = vld.sshfl [vmem:[#allocation1 + $0x20] sm:$0xff pattern:$0x73625140]
        %604 = vst [vmem:[#allocation1] ss:$4 sm:$0xff] %v403
        %605 = vst [vmem:[%s498] ss:$4 sm:$0xff] %v404
        %606 = vst [vmem:[%s500] ss:$4 sm:$0xff] %v491
        %607 = vst [vmem:[%s502] ss:$4 sm:$0xff] %v492
        %608 = vst [vmem:[%s504] ss:$4 sm:$0xff] %v493
        %609 = vst [vmem:[%s506] ss:$4 sm:$0xff] %v405
        %610 = vst [vmem:[%s508] ss:$4 sm:$0xff] %v494
        %611 = vst [vmem:[%s510] ss:$4 sm:$0xff] %v495
        %v612 = vld.sshfl [vmem:[#allocation1] sm:$0xff pattern:$0x73625140]
        %v613 = vld.sshfl [vmem:[#allocation1 + $0x20] sm:$0xff pattern:$0x73625140]
        %614 = vst [vmem:[#allocation1] ss:$4 sm:$0xff] %v496
        %615 = vst [vmem:[%s498] ss:$4 sm:$0xff] %v406
        %v616 = vld.sshfl [vmem:[#allocation1] sm:$0xff pattern:$0x73625140]
        %v640 = vpack.c.bf16 %v513, %v512
        %v641 = vpack.c.bf16 %v523, %v522
        %v642 = vpack.c.bf16 %v533, %v532
        %v643 = vpack.c.bf16 %v543, %v542
        %v644 = vpack.c.bf16 %v553, %v552
        %v645 = vpack.c.bf16 %v563, %v562
        %v646 = vpack.c.bf16 %v573, %v572
        %v647 = vpack.c.bf16 %v583, %v582
        %v648 = vpack.c.bf16 %v593, %v592
        %v649 = vpack.c.bf16 %v603, %v602
        %v650 = vpack.c.bf16 %v613, %v612
        %v651 = vpack.c.bf16 %v616, %v616
        %v652 = vld [vmem:[%s1] sm:$0xf]
        %v653 = vld [vmem:[%s1 + $0x4] sm:$0xf]
        %v656 = vunpack.c.l.b16 %v652
        %v657 = vunpack.c.l.b16 %v653
        %v658 = vpack.c.b16 %v657, %v656
        %vm660 = vcmask 130048
        %v662 = vsel %vm660, %v640, 0
        %v665 = vsel %vm660, %v641, 0
        %v668 = vsel %vm660, %v642, 0
        %v671 = vsel %vm660, %v643, 0
        %v674 = vsel %vm660, %v644, 0
        %v677 = vsel %vm660, %v645, 0
        %v680 = vsel %vm660, %v646, 0
        %v683 = vsel %vm660, %v647, 0
        %v686 = vsel %vm660, %v648, 0
        %v689 = vsel %vm660, %v649, 0
        %v692 = vsel %vm660, %v650, 0
        %v695 = vsel %vm660, %v651, 0
        %697 = vmatpush.bf16.msra.mxu0 0
        %698 = vmatpush.bf16.msra.mxu0 0
        %699 = vmatpush.bf16.msra.mxu0 0
        %700 = vmatpush.bf16.msra.mxu0 0
        %701 = vmatpush.bf16.msra.mxu0 0
        %702 = vmatpush.bf16.msra.mxu0 0
        %703 = vmatpush.bf16.msra.mxu0 0
        %704 = vmatpush.bf16.msra.mxu0 %v658
        %705 = vmatmul.bf16.gmra.mxu0 %v662
        %v706 = vpop.f32.mrf.mxu0
        %v707 = vadd.f32 0.0, %v706
        %v708 = vpop.f32.mrf.mxu0
        %v709 = vadd.f32 0.0, %v708
        %710 = vmatmul.bf16.gmra.mxu0 %v665
        %v711 = vpop.f32.mrf.mxu0
        %v712 = vadd.f32 0.0, %v711
        %v713 = vpop.f32.mrf.mxu0
        %v714 = vadd.f32 0.0, %v713
        %715 = vmatmul.bf16.gmra.mxu0 %v668
        %v716 = vpop.f32.mrf.mxu0
        %v717 = vadd.f32 0.0, %v716
        %v718 = vpop.f32.mrf.mxu0
        %v719 = vadd.f32 0.0, %v718
        %720 = vmatmul.bf16.gmra.mxu0 %v671
        %v721 = vpop.f32.mrf.mxu0
        %v722 = vadd.f32 0.0, %v721
        %v723 = vpop.f32.mrf.mxu0
        %v724 = vadd.f32 0.0, %v723
        %725 = vmatmul.bf16.gmra.mxu0 %v674
        %v726 = vpop.f32.mrf.mxu0
        %v727 = vadd.f32 0.0, %v726
        %v728 = vpop.f32.mrf.mxu0
        %v729 = vadd.f32 0.0, %v728
        %730 = vmatmul.bf16.gmra.mxu0 %v677
        %v731 = vpop.f32.mrf.mxu0
        %v732 = vadd.f32 0.0, %v731
        %v733 = vpop.f32.mrf.mxu0
        %v734 = vadd.f32 0.0, %v733
        %735 = vmatmul.bf16.gmra.mxu0 %v680
        %v736 = vpop.f32.mrf.mxu0
        %v737 = vadd.f32 0.0, %v736
        %v738 = vpop.f32.mrf.mxu0
        %v739 = vadd.f32 0.0, %v738
        %740 = vmatmul.bf16.gmra.mxu0 %v683
        %v741 = vpop.f32.mrf.mxu0
        %v742 = vadd.f32 0.0, %v741
        %v743 = vpop.f32.mrf.mxu0
        %v744 = vadd.f32 0.0, %v743
        %745 = vmatmul.bf16.gmra.mxu0 %v686
        %v746 = vpop.f32.mrf.mxu0
        %v747 = vadd.f32 0.0, %v746
        %v748 = vpop.f32.mrf.mxu0
        %v749 = vadd.f32 0.0, %v748
        %750 = vmatmul.bf16.gmra.mxu0 %v689
        %v751 = vpop.f32.mrf.mxu0
        %v752 = vadd.f32 0.0, %v751
        %v753 = vpop.f32.mrf.mxu0
        %v754 = vadd.f32 0.0, %v753
        %755 = vmatmul.bf16.gmra.mxu0 %v692
        %v756 = vpop.f32.mrf.mxu0
        %v757 = vadd.f32 0.0, %v756
        %v758 = vpop.f32.mrf.mxu0
        %v759 = vadd.f32 0.0, %v758
        %760 = vmatmul.bf16.gmra.mxu0 %v695
        %v761 = vpop.f32.mrf.mxu0
        %v762 = vadd.f32 0.0, %v761
        %v763 = vpop.f32.mrf.mxu0
        %764 = vdwg.mxu0
        %v765 = vld [vmem:[%s4] sm:$0x1]
        %v767 = vperm.slane %v765, 0
        %v769 = vmul.f32 %v707, %v767
        %v770 = vmul.f32 %v709, %v767
        %v771 = vmul.f32 %v712, %v767
        %v772 = vmul.f32 %v714, %v767
        %v773 = vmul.f32 %v717, %v767
        %v774 = vmul.f32 %v719, %v767
        %v775 = vmul.f32 %v722, %v767
        %v776 = vmul.f32 %v724, %v767
        %v777 = vmul.f32 %v727, %v767
        %v778 = vmul.f32 %v729, %v767
        %v779 = vmul.f32 %v732, %v767
        %v780 = vmul.f32 %v734, %v767
        %v781 = vmul.f32 %v737, %v767
        %v782 = vmul.f32 %v739, %v767
        %v783 = vmul.f32 %v742, %v767
        %v784 = vmul.f32 %v744, %v767
        %v785 = vmul.f32 %v747, %v767
        %v786 = vmul.f32 %v749, %v767
        %v787 = vmul.f32 %v752, %v767
        %v788 = vmul.f32 %v754, %v767
        %v789 = vmul.f32 %v757, %v767
        %v790 = vmul.f32 %v759, %v767
        %v791 = vmul.f32 %v762, %v767
        %v792 = vld [vmem:[%s5] sm:$0x1]
        %v794 = vperm.slane %v792, 0
        %v796 = vadd.f32 %v769, %v794
        %v797 = vadd.f32 %v770, %v794
        %v798 = vadd.f32 %v771, %v794
        %v799 = vadd.f32 %v772, %v794
        %v800 = vadd.f32 %v773, %v794
        %v801 = vadd.f32 %v774, %v794
        %v802 = vadd.f32 %v775, %v794
        %v803 = vadd.f32 %v776, %v794
        %v804 = vadd.f32 %v777, %v794
        %v805 = vadd.f32 %v778, %v794
        %v806 = vadd.f32 %v779, %v794
        %v807 = vadd.f32 %v780, %v794
        %v808 = vadd.f32 %v781, %v794
        %v809 = vadd.f32 %v782, %v794
        %v810 = vadd.f32 %v783, %v794
        %v811 = vadd.f32 %v784, %v794
        %v812 = vadd.f32 %v785, %v794
        %v813 = vadd.f32 %v786, %v794
        %v814 = vadd.f32 %v787, %v794
        %v815 = vadd.f32 %v788, %v794
        %v816 = vadd.f32 %v789, %v794
        %v817 = vadd.f32 %v790, %v794
        %v818 = vadd.f32 %v791, %v794
        %v819 = vmax.f32 %v796, 0.0
        %v820 = vmax.f32 %v797, 0.0
        %v821 = vmax.f32 %v798, 0.0
        %v822 = vmax.f32 %v799, 0.0
        %v823 = vmax.f32 %v800, 0.0
        %v824 = vmax.f32 %v801, 0.0
        %v825 = vmax.f32 %v802, 0.0
        %v826 = vmax.f32 %v803, 0.0
        %v827 = vmax.f32 %v804, 0.0
        %v828 = vmax.f32 %v805, 0.0
        %v829 = vmax.f32 %v806, 0.0
        %v830 = vmax.f32 %v807, 0.0
        %v831 = vmax.f32 %v808, 0.0
        %v832 = vmax.f32 %v809, 0.0
        %v833 = vmax.f32 %v810, 0.0
        %v834 = vmax.f32 %v811, 0.0
        %v835 = vmax.f32 %v812, 0.0
        %v836 = vmax.f32 %v813, 0.0
        %v837 = vmax.f32 %v814, 0.0
        %v838 = vmax.f32 %v815, 0.0
        %v839 = vmax.f32 %v816, 0.0
        %v840 = vmax.f32 %v817, 0.0
        %v841 = vmax.f32 %v818, 0.0
        %v865 = vrot.slane %v819, 2
        %v866 = vrot.slane %v819, 4
        %v867 = vrot.slane %v819, 6
        %v868 = vrot.slane %v820, 2
        %v869 = vrot.slane %v820, 4
        %v870 = vrot.slane %v820, 6
        %v871 = vrot.slane %v821, 2
        %v872 = vrot.slane %v821, 4
        %v873 = vrot.slane %v821, 6
        %v874 = vrot.slane %v822, 2
        %v875 = vrot.slane %v822, 4
        %v876 = vrot.slane %v822, 6
        %v877 = vrot.slane %v823, 2
        %v878 = vrot.slane %v823, 4
        %v879 = vrot.slane %v823, 6
        %v880 = vrot.slane %v824, 2
        %v881 = vrot.slane %v824, 4
        %v882 = vrot.slane %v824, 6
        %v883 = vrot.slane %v825, 2
        %v884 = vrot.slane %v825, 4
        %v885 = vrot.slane %v825, 6
        %v886 = vrot.slane %v826, 2
        %v887 = vrot.slane %v826, 4
        %v888 = vrot.slane %v826, 6
        %v889 = vrot.slane %v827, 2
        %v890 = vrot.slane %v827, 4
        %v891 = vrot.slane %v827, 6
        %v892 = vrot.slane %v828, 2
        %v893 = vrot.slane %v828, 4
        %v894 = vrot.slane %v828, 6
        %v895 = vrot.slane %v829, 2
        %v896 = vrot.slane %v829, 4
        %v897 = vrot.slane %v829, 6
        %v898 = vrot.slane %v830, 2
        %v899 = vrot.slane %v830, 4
        %v900 = vrot.slane %v830, 6
        %v901 = vrot.slane %v831, 2
        %v902 = vrot.slane %v831, 4
        %v903 = vrot.slane %v831, 6
        %v904 = vrot.slane %v832, 2
        %v905 = vrot.slane %v832, 4
        %v906 = vrot.slane %v832, 6
        %v907 = vrot.slane %v833, 2
        %v908 = vrot.slane %v833, 4
        %v909 = vrot.slane %v833, 6
        %v910 = vrot.slane %v834, 2
        %v911 = vrot.slane %v834, 4
        %v912 = vrot.slane %v834, 6
        %v913 = vrot.slane %v835, 2
        %v914 = vrot.slane %v835, 4
        %v915 = vrot.slane %v835, 6
        %v916 = vrot.slane %v836, 2
        %v917 = vrot.slane %v836, 4
        %v918 = vrot.slane %v836, 6
        %v919 = vrot.slane %v837, 2
        %v920 = vrot.slane %v837, 4
        %v921 = vrot.slane %v837, 6
        %v922 = vrot.slane %v838, 2
        %v923 = vrot.slane %v838, 4
        %v924 = vrot.slane %v838, 6
        %v925 = vrot.slane %v839, 2
        %v926 = vrot.slane %v839, 4
        %v927 = vrot.slane %v839, 6
        %v928 = vrot.slane %v840, 2
        %v929 = vrot.slane %v840, 4
        %v930 = vrot.slane %v840, 6
        %v931 = vrot.slane %v841, 2
        %v932 = vlaneseq
        %v933 = vshrl.u32 %v932, 7
        %v934 = vadd.s32 %v933, 8
        %v935 = vadd.s32 %v933, 16
        %v936 = vstv %s374
        %v937 = vadd.s32 %v936, 1
        %v938 = vadd.s32 %v936, 2
        %v939 = vadd.s32 %v936, 3
        %v940 = vadd.s32 %v936, 4
        %v941 = vadd.s32 %v936, 5
        %v942 = vadd.s32 %v936, 6
        %v943 = vadd.s32 %v936, 7
        %v944 = vadd.s32 %v936, 8
        %v945 = vadd.s32 %v936, 9
        %vm946 = vcmp.eq.s32.totalorder %v933, 0
        %vm947 = vcmp.eq.s32.totalorder %v934, 0
        %vm948 = vcmp.eq.s32.totalorder %v935, 0
        %vm949 = vcmp.eq.s32.totalorder %v933, 17
        %vm950 = vcmp.eq.s32.totalorder %v934, 17
        %vm951 = vcmp.eq.s32.totalorder %v935, 17
        %vm952 = vmor %vm946, %vm949
        %vm953 = vmor %vm947, %vm950
        %vm954 = vmor %vm948, %vm951
        %vm955 = vcmp.eq.s32.totalorder %v936, 0
        %vm956 = vcmp.eq.s32.totalorder %v937, 0
        %vm957 = vcmp.eq.s32.totalorder %v938, 0
        %vm958 = vcmp.eq.s32.totalorder %v939, 0
        %vm959 = vcmp.eq.s32.totalorder %v940, 0
        %vm960 = vcmp.eq.s32.totalorder %v941, 0
        %vm961 = vcmp.eq.s32.totalorder %v942, 0
        %vm962 = vcmp.eq.s32.totalorder %v943, 0
        %vm963 = vcmp.eq.s32.totalorder %v944, 0
        %vm964 = vcmp.eq.s32.totalorder %v945, 0
        %vm965 = vmor %vm952, %vm955
        %vm966 = vmor %vm953, %vm955
        %vm967 = vmor %vm954, %vm955
        %vm968 = vmor %vm952, %vm956
        %vm969 = vmor %vm953, %vm956
        %vm970 = vmor %vm954, %vm956
        %vm971 = vmor %vm952, %vm957
        %vm972 = vmor %vm953, %vm957
        %vm973 = vmor %vm954, %vm957
        %vm974 = vmor %vm952, %vm958
        %vm975 = vmor %vm953, %vm958
        %vm976 = vmor %vm954, %vm958
        %vm977 = vmor %vm952, %vm959
        %vm978 = vmor %vm953, %vm959
        %vm979 = vmor %vm954, %vm959
        %vm980 = vmor %vm952, %vm960
        %vm981 = vmor %vm953, %vm960
        %vm982 = vmor %vm954, %vm960
        %vm983 = vmor %vm952, %vm961
        %vm984 = vmor %vm953, %vm961
        %vm985 = vmor %vm954, %vm961
        %vm986 = vmor %vm952, %vm962
        %vm987 = vmor %vm953, %vm962
        %vm988 = vmor %vm954, %vm962
        %vm989 = vmor %vm952, %vm963
        %vm990 = vmor %vm953, %vm963
        %vm991 = vmor %vm954, %vm963
        %vm992 = vmor %vm952, %vm964
        %vm993 = vmor %vm953, %vm964
        %vm994 = vmor %vm954, %vm964
        %vm995 = vcmp.eq.s32.totalorder %v936, 17
        %vm996 = vcmp.eq.s32.totalorder %v937, 17
        %vm997 = vcmp.eq.s32.totalorder %v938, 17
        %vm998 = vcmp.eq.s32.totalorder %v939, 17
        %vm999 = vcmp.eq.s32.totalorder %v940, 17
        %vm1000 = vcmp.eq.s32.totalorder %v941, 17
        %vm1001 = vcmp.eq.s32.totalorder %v942, 17
        %vm1002 = vcmp.eq.s32.totalorder %v943, 17
        %vm1003 = vcmp.eq.s32.totalorder %v944, 17
        %vm1004 = vcmp.eq.s32.totalorder %v945, 17
        %vm1005 = vmor %vm965, %vm995
        %vm1006 = vmor %vm966, %vm995
        %vm1007 = vmor %vm967, %vm995
        %vm1008 = vmor %vm968, %vm996
        %vm1009 = vmor %vm969, %vm996
        %vm1010 = vmor %vm970, %vm996
        %vm1011 = vmor %vm971, %vm997
        %vm1012 = vmor %vm972, %vm997
        %vm1013 = vmor %vm973, %vm997
        %vm1014 = vmor %vm974, %vm998
        %vm1015 = vmor %vm975, %vm998
        %vm1016 = vmor %vm976, %vm998
        %vm1017 = vmor %vm977, %vm999
        %vm1018 = vmor %vm978, %vm999
        %vm1019 = vmor %vm979, %vm999
        %vm1020 = vmor %vm980, %vm1000
        %vm1021 = vmor %vm981, %vm1000
        %vm1022 = vmor %vm982, %vm1000
        %vm1023 = vmor %vm983, %vm1001
        %vm1024 = vmor %vm984, %vm1001
        %vm1025 = vmor %vm985, %vm1001
        %vm1026 = vmor %vm986, %vm1002
        %vm1027 = vmor %vm987, %vm1002
        %vm1028 = vmor %vm988, %vm1002
        %vm1029 = vmor %vm989, %vm1003
        %vm1030 = vmor %vm990, %vm1003
        %vm1031 = vmor %vm991, %vm1003
        %vm1032 = vmor %vm992, %vm1004
        %vm1033 = vmor %vm993, %vm1004
        %vm1034 = vmor %vm994, %vm1004
        %v1035 = vsel %vm1005, 1, 0
        %v1036 = vsel %vm1006, 1, 0
        %v1037 = vsel %vm1007, 1, 0
        %v1038 = vsel %vm1008, 1, 0
        %v1039 = vsel %vm1009, 1, 0
        %v1040 = vsel %vm1010, 1, 0
        %v1041 = vsel %vm1011, 1, 0
        %v1042 = vsel %vm1012, 1, 0
        %v1043 = vsel %vm1013, 1, 0
        %v1044 = vsel %vm1014, 1, 0
        %v1045 = vsel %vm1015, 1, 0
        %v1046 = vsel %vm1016, 1, 0
        %v1047 = vsel %vm1017, 1, 0
        %v1048 = vsel %vm1018, 1, 0
        %v1049 = vsel %vm1019, 1, 0
        %v1050 = vsel %vm1020, 1, 0
        %v1051 = vsel %vm1021, 1, 0
        %v1052 = vsel %vm1022, 1, 0
        %v1053 = vsel %vm1023, 1, 0
        %v1054 = vsel %vm1024, 1, 0
        %v1055 = vsel %vm1025, 1, 0
        %v1056 = vsel %vm1026, 1, 0
        %v1057 = vsel %vm1027, 1, 0
        %v1058 = vsel %vm1028, 1, 0
        %v1059 = vsel %vm1029, 1, 0
        %v1060 = vsel %vm1030, 1, 0
        %v1061 = vsel %vm1031, 1, 0
        %v1062 = vsel %vm1032, 1, 0
        %v1063 = vsel %vm1033, 1, 0
        %v1064 = vsel %vm1034, 1, 0
        %vm1065 = vcmp.eq.s32.totalorder %v1035, 1
        %vm1066 = vcmp.eq.s32.totalorder %v1036, 1
        %vm1067 = vcmp.eq.s32.totalorder %v1037, 1
        %vm1068 = vcmp.eq.s32.totalorder %v1038, 1
        %vm1069 = vcmp.eq.s32.totalorder %v1039, 1
        %vm1070 = vcmp.eq.s32.totalorder %v1040, 1
        %vm1071 = vcmp.eq.s32.totalorder %v1041, 1
        %vm1072 = vcmp.eq.s32.totalorder %v1042, 1
        %vm1073 = vcmp.eq.s32.totalorder %v1043, 1
        %vm1074 = vcmp.eq.s32.totalorder %v1044, 1
        %vm1075 = vcmp.eq.s32.totalorder %v1045, 1
        %vm1076 = vcmp.eq.s32.totalorder %v1046, 1
        %vm1077 = vcmp.eq.s32.totalorder %v1047, 1
        %vm1078 = vcmp.eq.s32.totalorder %v1048, 1
        %vm1079 = vcmp.eq.s32.totalorder %v1049, 1
        %vm1080 = vcmp.eq.s32.totalorder %v1050, 1
        %vm1081 = vcmp.eq.s32.totalorder %v1051, 1
        %vm1082 = vcmp.eq.s32.totalorder %v1052, 1
        %vm1083 = vcmp.eq.s32.totalorder %v1053, 1
        %vm1084 = vcmp.eq.s32.totalorder %v1054, 1
        %vm1085 = vcmp.eq.s32.totalorder %v1055, 1
        %vm1086 = vcmp.eq.s32.totalorder %v1056, 1
        %vm1087 = vcmp.eq.s32.totalorder %v1057, 1
        %vm1088 = vcmp.eq.s32.totalorder %v1058, 1
        %vm1089 = vcmp.eq.s32.totalorder %v1059, 1
        %vm1090 = vcmp.eq.s32.totalorder %v1060, 1
        %vm1091 = vcmp.eq.s32.totalorder %v1061, 1
        %vm1092 = vcmp.eq.s32.totalorder %v1062, 1
        %vm1093 = vcmp.eq.s32.totalorder %v1063, 1
        %vm1094 = vcmp.eq.s32.totalorder %v1064, 1
        %1095 = vst [vmem:[#allocation1] ss:$4 sm:$0xff] %v819
        %s1096 = scalar_lea.vmem [#allocation1], 1
        %1097 = vst [vmem:[%s1096] ss:$4 sm:$0xff] %v865
        %s1098 = scalar_lea.vmem [#allocation1], 2
        %1099 = vst [vmem:[%s1098] ss:$4 sm:$0xff] %v866
        %s1100 = scalar_lea.vmem [#allocation1], 3
        %1101 = vst [vmem:[%s1100] ss:$4 sm:$0xff] %v867
        %s1102 = scalar_lea.vmem [#allocation1], 32
        %1103 = vst [vmem:[%s1102] ss:$4 sm:$0xff] %v820
        %s1104 = scalar_lea.vmem [#allocation1], 33
        %1105 = vst [vmem:[%s1104] ss:$4 sm:$0xff] %v868
        %s1106 = scalar_lea.vmem [#allocation1], 34
        %1107 = vst [vmem:[%s1106] ss:$4 sm:$0xff] %v869
        %s1108 = scalar_lea.vmem [#allocation1], 35
        %1109 = vst [vmem:[%s1108] ss:$4 sm:$0xff] %v870
        %v1110 = vld.sshfl [vmem:[#allocation1] sm:$0xff pattern:$0x73625140]
        %v1111 = vld.sshfl [vmem:[#allocation1 + $0x20] sm:$0xff pattern:$0x73625140]
        %1112 = vst [vmem:[#allocation1] ss:$4 sm:$0xff] %v821
        %v1113 = vld.sshfl [vmem:[#allocation1] sm:$0xff pattern:$0x73625140]
        %1114 = vst [vmem:[%s1102] ss:$4 sm:$0xff] %v871
        %1115 = vst [vmem:[%s1104] ss:$4 sm:$0xff] %v872
        %1116 = vst [vmem:[%s1106] ss:$4 sm:$0xff] %v873
        %1117 = vst [vmem:[%s1108] ss:$4 sm:$0xff] %v822
        %v1118 = vld.sshfl [vmem:[#allocation1 + $0x20] sm:$0xff pattern:$0x73625140]
        %1119 = vst [vmem:[#allocation1] ss:$4 sm:$0xff] %v874
        %1120 = vst [vmem:[%s1096] ss:$4 sm:$0xff] %v875
        %1121 = vst [vmem:[%s1098] ss:$4 sm:$0xff] %v876
        %1122 = vst [vmem:[%s1100] ss:$4 sm:$0xff] %v823
        %1123 = vst [vmem:[%s1102] ss:$4 sm:$0xff] %v877
        %v1124 = vld.sshfl [vmem:[#allocation1] sm:$0xff pattern:$0x73625140]
        %v1125 = vld.sshfl [vmem:[#allocation1 + $0x20] sm:$0xff pattern:$0x73625140]
        %1126 = vst [vmem:[#allocation1] ss:$4 sm:$0xff] %v878
        %1127 = vst [vmem:[%s1096] ss:$4 sm:$0xff] %v879
        %1128 = vst [vmem:[%s1098] ss:$4 sm:$0xff] %v824
        %1129 = vst [vmem:[%s1100] ss:$4 sm:$0xff] %v880
        %1130 = vst [vmem:[%s1102] ss:$4 sm:$0xff] %v881
        %1131 = vst [vmem:[%s1104] ss:$4 sm:$0xff] %v882
        %1132 = vst [vmem:[%s1106] ss:$4 sm:$0xff] %v825
        %1133 = vst [vmem:[%s1108] ss:$4 sm:$0xff] %v883
        %v1134 = vld.sshfl [vmem:[#allocation1] sm:$0xff pattern:$0x73625140]
        %v1135 = vld.sshfl [vmem:[#allocation1 + $0x20] sm:$0xff pattern:$0x73625140]
        %1136 = vst [vmem:[#allocation1] ss:$4 sm:$0xff] %v884
        %v1137 = vld.sshfl [vmem:[#allocation1] sm:$0xff pattern:$0x73625140]
        %1138 = vst [vmem:[%s1102] ss:$4 sm:$0xff] %v885
        %1139 = vst [vmem:[%s1104] ss:$4 sm:$0xff] %v826
        %1140 = vst [vmem:[%s1106] ss:$4 sm:$0xff] %v886
        %1141 = vst [vmem:[%s1108] ss:$4 sm:$0xff] %v887
        %v1142 = vld.sshfl [vmem:[#allocation1 + $0x20] sm:$0xff pattern:$0x73625140]
        %1143 = vst [vmem:[#allocation1] ss:$4 sm:$0xff] %v888
        %1144 = vst [vmem:[%s1096] ss:$4 sm:$0xff] %v827
        %1145 = vst [vmem:[%s1098] ss:$4 sm:$0xff] %v889
        %1146 = vst [vmem:[%s1100] ss:$4 sm:$0xff] %v890
        %1147 = vst [vmem:[%s1102] ss:$4 sm:$0xff] %v891
        %v1148 = vld.sshfl [vmem:[#allocation1] sm:$0xff pattern:$0x73625140]
        %v1149 = vld.sshfl [vmem:[#allocation1 + $0x20] sm:$0xff pattern:$0x73625140]
        %1150 = vst [vmem:[#allocation1] ss:$4 sm:$0xff] %v828
        %1151 = vst [vmem:[%s1096] ss:$4 sm:$0xff] %v892
        %1152 = vst [vmem:[%s1098] ss:$4 sm:$0xff] %v893
        %1153 = vst [vmem:[%s1100] ss:$4 sm:$0xff] %v894
        %1154 = vst [vmem:[%s1102] ss:$4 sm:$0xff] %v829
        %1155 = vst [vmem:[%s1104] ss:$4 sm:$0xff] %v895
        %1156 = vst [vmem:[%s1106] ss:$4 sm:$0xff] %v896
        %1157 = vst [vmem:[%s1108] ss:$4 sm:$0xff] %v897
        %v1158 = vld.sshfl [vmem:[#allocation1] sm:$0xff pattern:$0x73625140]
        %v1159 = vld.sshfl [vmem:[#allocation1 + $0x20] sm:$0xff pattern:$0x73625140]
        %1160 = vst [vmem:[#allocation1] ss:$4 sm:$0xff] %v830
        %v1161 = vld.sshfl [vmem:[#allocation1] sm:$0xff pattern:$0x73625140]
        %1162 = vst [vmem:[%s1102] ss:$4 sm:$0xff] %v898
        %1163 = vst [vmem:[%s1104] ss:$4 sm:$0xff] %v899
        %1164 = vst [vmem:[%s1106] ss:$4 sm:$0xff] %v900
        %1165 = vst [vmem:[%s1108] ss:$4 sm:$0xff] %v831
        %v1166 = vld.sshfl [vmem:[#allocation1 + $0x20] sm:$0xff pattern:$0x73625140]
        %1167 = vst [vmem:[#allocation1] ss:$4 sm:$0xff] %v901
        %1168 = vst [vmem:[%s1096] ss:$4 sm:$0xff] %v902
        %1169 = vst [vmem:[%s1098] ss:$4 sm:$0xff] %v903
        %1170 = vst [vmem:[%s1100] ss:$4 sm:$0xff] %v832
        %1171 = vst [vmem:[%s1102] ss:$4 sm:$0xff] %v904
        %v1172 = vld.sshfl [vmem:[#allocation1] sm:$0xff pattern:$0x73625140]
        %v1173 = vld.sshfl [vmem:[#allocation1 + $0x20] sm:$0xff pattern:$0x73625140]
        %1174 = vst [vmem:[#allocation1] ss:$4 sm:$0xff] %v905
        %1175 = vst [vmem:[%s1096] ss:$4 sm:$0xff] %v906
        %1176 = vst [vmem:[%s1098] ss:$4 sm:$0xff] %v833
        %1177 = vst [vmem:[%s1100] ss:$4 sm:$0xff] %v907
        %1178 = vst [vmem:[%s1102] ss:$4 sm:$0xff] %v908
        %1179 = vst [vmem:[%s1104] ss:$4 sm:$0xff] %v909
        %1180 = vst [vmem:[%s1106] ss:$4 sm:$0xff] %v834
        %1181 = vst [vmem:[%s1108] ss:$4 sm:$0xff] %v910
        %v1182 = vld.sshfl [vmem:[#allocation1] sm:$0xff pattern:$0x73625140]
        %v1183 = vld.sshfl [vmem:[#allocation1 + $0x20] sm:$0xff pattern:$0x73625140]
        %1184 = vst [vmem:[#allocation1] ss:$4 sm:$0xff] %v911
        %v1185 = vld.sshfl [vmem:[#allocation1] sm:$0xff pattern:$0x73625140]
        %1186 = vst [vmem:[%s1102] ss:$4 sm:$0xff] %v912
        %1187 = vst [vmem:[%s1104] ss:$4 sm:$0xff] %v835
        %1188 = vst [vmem:[%s1106] ss:$4 sm:$0xff] %v913
        %1189 = vst [vmem:[%s1108] ss:$4 sm:$0xff] %v914
        %v1190 = vld.sshfl [vmem:[#allocation1 + $0x20] sm:$0xff pattern:$0x73625140]
        %1191 = vst [vmem:[#allocation1] ss:$4 sm:$0xff] %v915
        %1192 = vst [vmem:[%s1096] ss:$4 sm:$0xff] %v836
        %1193 = vst [vmem:[%s1098] ss:$4 sm:$0xff] %v916
        %1194 = vst [vmem:[%s1100] ss:$4 sm:$0xff] %v917
        %1195 = vst [vmem:[%s1102] ss:$4 sm:$0xff] %v918
        %v1196 = vld.sshfl [vmem:[#allocation1] sm:$0xff pattern:$0x73625140]
        %v1197 = vld.sshfl [vmem:[#allocation1 + $0x20] sm:$0xff pattern:$0x73625140]
        %1198 = vst [vmem:[#allocation1] ss:$4 sm:$0xff] %v837
        %1199 = vst [vmem:[%s1096] ss:$4 sm:$0xff] %v919
        %1200 = vst [vmem:[%s1098] ss:$4 sm:$0xff] %v920
        %1201 = vst [vmem:[%s1100] ss:$4 sm:$0xff] %v921
        %1202 = vst [vmem:[%s1102] ss:$4 sm:$0xff] %v838
        %1203 = vst [vmem:[%s1104] ss:$4 sm:$0xff] %v922
        %1204 = vst [vmem:[%s1106] ss:$4 sm:$0xff] %v923
        %1205 = vst [vmem:[%s1108] ss:$4 sm:$0xff] %v924
        %v1206 = vld.sshfl [vmem:[#allocation1] sm:$0xff pattern:$0x73625140]
        %v1207 = vld.sshfl [vmem:[#allocation1 + $0x20] sm:$0xff pattern:$0x73625140]
        %1208 = vst [vmem:[#allocation1] ss:$4 sm:$0xff] %v839
        %v1209 = vld.sshfl [vmem:[#allocation1] sm:$0xff pattern:$0x73625140]
        %1210 = vst [vmem:[%s1102] ss:$4 sm:$0xff] %v925
        %1211 = vst [vmem:[%s1104] ss:$4 sm:$0xff] %v926
        %1212 = vst [vmem:[%s1106] ss:$4 sm:$0xff] %v927
        %1213 = vst [vmem:[%s1108] ss:$4 sm:$0xff] %v840
        %v1214 = vld.sshfl [vmem:[#allocation1 + $0x20] sm:$0xff pattern:$0x73625140]
        %1215 = vst [vmem:[#allocation1] ss:$4 sm:$0xff] %v928
        %1216 = vst [vmem:[%s1096] ss:$4 sm:$0xff] %v929
        %1217 = vst [vmem:[%s1098] ss:$4 sm:$0xff] %v930
        %1218 = vst [vmem:[%s1100] ss:$4 sm:$0xff] %v841
        %1219 = vst [vmem:[%s1102] ss:$4 sm:$0xff] %v931
        %v1220 = vld.sshfl [vmem:[#allocation1] sm:$0xff pattern:$0x73625140]
        %v1221 = vld.sshfl [vmem:[#allocation1 + $0x20] sm:$0xff pattern:$0x73625140]
        %v1252 = vsel %vm1065, 0.0, %v1110
        %v1253 = vsel %vm1066, 0.0, %v1111
        %v1254 = vsel %vm1067, 0.0, %v1113
        %v1255 = vsel %vm1068, 0.0, %v1118
        %v1256 = vsel %vm1069, 0.0, %v1124
        %v1257 = vsel %vm1070, 0.0, %v1125
        %v1258 = vsel %vm1071, 0.0, %v1134
        %v1259 = vsel %vm1072, 0.0, %v1135
        %v1260 = vsel %vm1073, 0.0, %v1137
        %v1261 = vsel %vm1074, 0.0, %v1142
        %v1262 = vsel %vm1075, 0.0, %v1148
        %v1263 = vsel %vm1076, 0.0, %v1149
        %v1264 = vsel %vm1077, 0.0, %v1158
        %v1265 = vsel %vm1078, 0.0, %v1159
        %v1266 = vsel %vm1079, 0.0, %v1161
        %v1267 = vsel %vm1080, 0.0, %v1166
        %v1268 = vsel %vm1081, 0.0, %v1172
        %v1269 = vsel %vm1082, 0.0, %v1173
        %v1270 = vsel %vm1083, 0.0, %v1182
        %v1271 = vsel %vm1084, 0.0, %v1183
        %v1272 = vsel %vm1085, 0.0, %v1185
        %v1273 = vsel %vm1086, 0.0, %v1190
        %v1274 = vsel %vm1087, 0.0, %v1196
        %v1275 = vsel %vm1088, 0.0, %v1197
        %v1276 = vsel %vm1089, 0.0, %v1206
        %v1277 = vsel %vm1090, 0.0, %v1207
        %v1278 = vsel %vm1091, 0.0, %v1209
        %v1279 = vsel %vm1092, 0.0, %v1214
        %v1280 = vsel %vm1093, 0.0, %v1220
        %v1281 = vsel %vm1094, 0.0, %v1221
        %v1282 = vpack.c.bf16 %v1252, %v1252
        %v1283 = vpack.c.bf16 %v1253, %v1253
        %v1284 = vpack.c.bf16 %v1254, %v1254
        %v1285 = vpack.c.bf16 %v1255, %v1255
        %v1286 = vpack.c.bf16 %v1256, %v1256
        %v1287 = vpack.c.bf16 %v1257, %v1257
        %v1288 = vpack.c.bf16 %v1258, %v1258
        %v1289 = vpack.c.bf16 %v1259, %v1259
        %v1290 = vpack.c.bf16 %v1260, %v1260
        %v1291 = vpack.c.bf16 %v1261, %v1261
        %v1292 = vpack.c.bf16 %v1262, %v1262
        %v1293 = vpack.c.bf16 %v1263, %v1263
        %v1294 = vpack.c.bf16 %v1264, %v1264
        %v1295 = vpack.c.bf16 %v1265, %v1265
        %v1296 = vpack.c.bf16 %v1266, %v1266
        %v1297 = vpack.c.bf16 %v1267, %v1267
        %v1298 = vpack.c.bf16 %v1268, %v1268
        %v1299 = vpack.c.bf16 %v1269, %v1269
        %v1300 = vpack.c.bf16 %v1270, %v1270
        %v1301 = vpack.c.bf16 %v1271, %v1271
        %v1302 = vpack.c.bf16 %v1272, %v1272
        %v1303 = vpack.c.bf16 %v1273, %v1273
        %v1304 = vpack.c.bf16 %v1274, %v1274
        %v1305 = vpack.c.bf16 %v1275, %v1275
        %v1306 = vpack.c.bf16 %v1276, %v1276
        %v1307 = vpack.c.bf16 %v1277, %v1277
        %v1308 = vpack.c.bf16 %v1278, %v1278
        %v1309 = vpack.c.bf16 %v1279, %v1279
        %v1310 = vpack.c.bf16 %v1280, %v1280
        %v1311 = vpack.c.bf16 %v1281, %v1281
        %vm1312 = vcmask 27648
        %1313 = vst.msk [vmem:[#allocation2] sm:$0xf] %vm1312, %v1282
        %1314 = vst.msk [vmem:[#allocation2 + $0x4] sm:$0xf] %vm1312, %v1283
        %vm1315 = vcmask 24576
        %1316 = vst.msk [vmem:[#allocation2 + $0x8] sm:$0x1] %vm1315, %v1284
        %1317 = vst.msk [vmem:[#allocation2 + $0xc] sm:$0xf] %vm1312, %v1285
        %1318 = vst.msk [vmem:[#allocation2 + $0x10] sm:$0xf] %vm1312, %v1286
        %1319 = vst.msk [vmem:[#allocation2 + $0x14] sm:$0x1] %vm1315, %v1287
        %1320 = vst.msk [vmem:[#allocation2 + $0x18] sm:$0xf] %vm1312, %v1288
        %1321 = vst.msk [vmem:[#allocation2 + $0x1c] sm:$0xf] %vm1312, %v1289
        %1322 = vst.msk [vmem:[#allocation2 + $0x20] sm:$0x1] %vm1315, %v1290
        %1323 = vst.msk [vmem:[#allocation2 + $0x24] sm:$0xf] %vm1312, %v1291
        %1324 = vst.msk [vmem:[#allocation2 + $0x28] sm:$0xf] %vm1312, %v1292
        %1325 = vst.msk [vmem:[#allocation2 + $0x2c] sm:$0x1] %vm1315, %v1293
        %1326 = vst.msk [vmem:[#allocation2 + $0x30] sm:$0xf] %vm1312, %v1294
        %1327 = vst.msk [vmem:[#allocation2 + $0x34] sm:$0xf] %vm1312, %v1295
        %1328 = vst.msk [vmem:[#allocation2 + $0x38] sm:$0x1] %vm1315, %v1296
        %1329 = vst.msk [vmem:[#allocation2 + $0x3c] sm:$0xf] %vm1312, %v1297
        %1330 = vst.msk [vmem:[#allocation2 + $0x40] sm:$0xf] %vm1312, %v1298
        %1331 = vst.msk [vmem:[#allocation2 + $0x44] sm:$0x1] %vm1315, %v1299
        %1332 = vst.msk [vmem:[#allocation2 + $0x48] sm:$0xf] %vm1312, %v1300
        %1333 = vst.msk [vmem:[#allocation2 + $0x4c] sm:$0xf] %vm1312, %v1301
        %1334 = vst.msk [vmem:[#allocation2 + $0x50] sm:$0x1] %vm1315, %v1302
        %1335 = vst.msk [vmem:[#allocation2 + $0x54] sm:$0xf] %vm1312, %v1303
        %1336 = vst.msk [vmem:[#allocation2 + $0x58] sm:$0xf] %vm1312, %v1304
        %1337 = vst.msk [vmem:[#allocation2 + $0x5c] sm:$0x1] %vm1315, %v1305
        %1338 = vst.msk [vmem:[#allocation2 + $0x60] sm:$0xf] %vm1312, %v1306
        %1339 = vst.msk [vmem:[#allocation2 + $0x64] sm:$0xf] %vm1312, %v1307
        %1340 = vst.msk [vmem:[#allocation2 + $0x68] sm:$0x1] %vm1315, %v1308
        %1341 = vst.msk [vmem:[#allocation2 + $0x6c] sm:$0xf] %vm1312, %v1309
        %1342 = vst.msk [vmem:[#allocation2 + $0x70] sm:$0xf] %vm1312, %v1310
        %1343 = vst.msk [vmem:[#allocation2 + $0x74] sm:$0x1] %vm1315, %v1311
        %v1344 = vld [vmem:[#allocation2] sm:$0xf]
        %v1345 = vld [vmem:[#allocation2 + $0x4] sm:$0xf]
        %v1346 = vld [vmem:[#allocation2 + $0xc] sm:$0xf]
        %v1347 = vld [vmem:[#allocation2 + $0x10] sm:$0xf]
        %v1348 = vld [vmem:[#allocation2 + $0x18] sm:$0xf]
        %v1349 = vld [vmem:[#allocation2 + $0x1c] sm:$0xf]
        %v1350 = vld [vmem:[#allocation2 + $0x24] sm:$0xf]
        %v1351 = vld [vmem:[#allocation2 + $0x28] sm:$0xf]
        %v1352 = vld [vmem:[#allocation2 + $0x30] sm:$0xf]
        %v1353 = vld [vmem:[#allocation2 + $0x34] sm:$0xf]
        %v1354 = vld [vmem:[#allocation2 + $0x3c] sm:$0xf]
        %v1355 = vld [vmem:[#allocation2 + $0x40] sm:$0xf]
        %v1356 = vld [vmem:[#allocation2 + $0x48] sm:$0xf]
        %v1357 = vld [vmem:[#allocation2 + $0x4c] sm:$0xf]
        %v1358 = vld [vmem:[#allocation2 + $0x54] sm:$0xf]
        %v1359 = vld [vmem:[#allocation2 + $0x58] sm:$0xf]
        %v1360 = vld [vmem:[%s2] sm:$0x3]
        %v1377 = vunpack.c.l.b16 %v1344
        %v1378 = vunpack.c.l.b16 %v1345
        %v1379 = vunpack.c.l.b16 %v1346
        %v1380 = vunpack.c.l.b16 %v1347
        %v1381 = vunpack.c.l.b16 %v1348
        %v1382 = vunpack.c.l.b16 %v1349
        %v1383 = vunpack.c.l.b16 %v1350
        %v1384 = vunpack.c.l.b16 %v1351
        %v1385 = vunpack.c.l.b16 %v1352
        %v1386 = vunpack.c.l.b16 %v1353
        %v1387 = vunpack.c.l.b16 %v1354
        %v1388 = vunpack.c.l.b16 %v1355
        %v1389 = vunpack.c.l.b16 %v1356
        %v1390 = vunpack.c.l.b16 %v1357
        %v1391 = vunpack.c.l.b16 %v1358
        %v1392 = vunpack.c.l.b16 %v1359
        %v1393 = vpack.c.b16 %v1378, %v1377
        %v1394 = vpack.c.b16 %v1380, %v1379
        %v1395 = vpack.c.b16 %v1382, %v1381
        %v1396 = vpack.c.b16 %v1384, %v1383
        %v1397 = vpack.c.b16 %v1386, %v1385
        %v1398 = vpack.c.b16 %v1388, %v1387
        %v1399 = vpack.c.b16 %v1390, %v1389
        %v1400 = vpack.c.b16 %v1392, %v1391
        %vm1401 = vcmask 31744
        %v1403 = vsel %vm1401, %v1393, 0
        %v1406 = vsel %vm1401, %v1394, 0
        %v1409 = vsel %vm1401, %v1395, 0
        %v1412 = vsel %vm1401, %v1396, 0
        %v1415 = vsel %vm1401, %v1397, 0
        %v1418 = vsel %vm1401, %v1398, 0
        %v1421 = vsel %vm1401, %v1399, 0
        %v1424 = vsel %vm1401, %v1400, 0
        %vm1426 = vcmask 1041408
        %v1428 = vsel %vm1426, %v1360, 0
        %1430 = vmatpush.bf16.msra.mxu0 0
        %1431 = vmatpush.bf16.msra.mxu0 0
        %1432 = vmatpush.bf16.msra.mxu0 0
        %1433 = vmatpush.bf16.msra.mxu0 0
        %1434 = vmatpush.bf16.msra.mxu0 0
        %1435 = vmatpush.bf16.msra.mxu0 0
        %1436 = vmatpush.bf16.msra.mxu0 0
        %1437 = vmatpush.bf16.msra.mxu0 %v1428
        %1438 = vmatmul.bf16.gmra.mxu0 %v1403
        %v1439 = vpop.f32.mrf.mxu0
        %v1440 = vadd.f32 0.0, %v1439
        %v1441 = vpop.f32.mrf.mxu0
        %v1442 = vadd.f32 0.0, %v1441
        %1443 = vmatmul.bf16.gmra.mxu0 %v1406
        %v1444 = vpop.f32.mrf.mxu0
        %v1445 = vadd.f32 0.0, %v1444
        %v1446 = vpop.f32.mrf.mxu0
        %v1447 = vadd.f32 0.0, %v1446
        %1448 = vmatmul.bf16.gmra.mxu0 %v1409
        %v1449 = vpop.f32.mrf.mxu0
        %v1450 = vadd.f32 0.0, %v1449
        %v1451 = vpop.f32.mrf.mxu0
        %v1452 = vadd.f32 0.0, %v1451
        %1453 = vmatmul.bf16.gmra.mxu0 %v1412
        %v1454 = vpop.f32.mrf.mxu0
        %v1455 = vadd.f32 0.0, %v1454
        %v1456 = vpop.f32.mrf.mxu0
        %v1457 = vadd.f32 0.0, %v1456
        %1458 = vmatmul.bf16.gmra.mxu0 %v1415
        %v1459 = vpop.f32.mrf.mxu0
        %v1460 = vadd.f32 0.0, %v1459
        %v1461 = vpop.f32.mrf.mxu0
        %v1462 = vadd.f32 0.0, %v1461
        %1463 = vmatmul.bf16.gmra.mxu0 %v1418
        %v1464 = vpop.f32.mrf.mxu0
        %v1465 = vadd.f32 0.0, %v1464
        %v1466 = vpop.f32.mrf.mxu0
        %v1467 = vadd.f32 0.0, %v1466
        %1468 = vmatmul.bf16.gmra.mxu0 %v1421
        %v1469 = vpop.f32.mrf.mxu0
        %v1470 = vadd.f32 0.0, %v1469
        %v1471 = vpop.f32.mrf.mxu0
        %v1472 = vadd.f32 0.0, %v1471
        %1473 = vmatmul.bf16.gmra.mxu0 %v1424
        %v1474 = vpop.f32.mrf.mxu0
        %v1475 = vadd.f32 0.0, %v1474
        %v1476 = vpop.f32.mrf.mxu0
        %v1477 = vadd.f32 0.0, %v1476
        %1478 = vdwg.mxu0
        %1479 = vst.msk [vmem:[#allocation3] sm:$0xff] %vm1401, %v1440
        %1480 = vst.msk [vmem:[#allocation3 + $0x8] sm:$0xff] %vm1401, %v1442
        %1481 = vst.msk [vmem:[#allocation3 + $0x10] sm:$0xff] %vm1401, %v1445
        %1482 = vst.msk [vmem:[#allocation3 + $0x18] sm:$0xff] %vm1401, %v1447
        %1483 = vst.msk [vmem:[#allocation3 + $0x20] sm:$0xff] %vm1401, %v1450
        %1484 = vst.msk [vmem:[#allocation3 + $0x28] sm:$0xff] %vm1401, %v1452
        %1485 = vst.msk [vmem:[#allocation3 + $0x30] sm:$0xff] %vm1401, %v1455
        %1486 = vst.msk [vmem:[#allocation3 + $0x38] sm:$0xff] %vm1401, %v1457
        %1487 = vst.msk [vmem:[#allocation3 + $0x40] sm:$0xff] %vm1401, %v1460
        %1488 = vst.msk [vmem:[#allocation3 + $0x48] sm:$0xff] %vm1401, %v1462
        %1489 = vst.msk [vmem:[#allocation3 + $0x50] sm:$0xff] %vm1401, %v1465
        %1490 = vst.msk [vmem:[#allocation3 + $0x58] sm:$0xff] %vm1401, %v1467
        %1491 = vst.msk [vmem:[#allocation3 + $0x60] sm:$0xff] %vm1401, %v1470
        %1492 = vst.msk [vmem:[#allocation3 + $0x68] sm:$0xff] %vm1401, %v1472
        %1493 = vst.msk [vmem:[#allocation3 + $0x70] sm:$0xff] %vm1401, %v1475
        %1494 = vst.msk [vmem:[#allocation3 + $0x78] sm:$0xff] %vm1401, %v1477
        %v1495 = vld [vmem:[#allocation2] sm:$0xf]
        %v1496 = vld [vmem:[#allocation2 + $0x4] sm:$0xf]
        %v1497 = vld [vmem:[#allocation2 + $0x8] sm:$0x1]
        %v1498 = vld [vmem:[#allocation2 + $0xc] sm:$0xf]
        %v1499 = vld [vmem:[#allocation2 + $0x10] sm:$0xf]
        %v1500 = vld [vmem:[#allocation2 + $0x14] sm:$0x1]
        %v1501 = vld [vmem:[#allocation2 + $0x18] sm:$0xf]
        %v1502 = vld [vmem:[#allocation2 + $0x1c] sm:$0xf]
        %v1503 = vld [vmem:[#allocation2 + $0x20] sm:$0x1]
        %v1504 = vld [vmem:[#allocation2 + $0x24] sm:$0xf]
        %v1505 = vld [vmem:[#allocation2 + $0x28] sm:$0xf]
        %v1506 = vld [vmem:[#allocation2 + $0x2c] sm:$0x1]
        %v1507 = vld [vmem:[#allocation2 + $0x30] sm:$0xf]
        %v1508 = vld [vmem:[#allocation2 + $0x34] sm:$0xf]
        %v1509 = vld [vmem:[#allocation2 + $0x38] sm:$0x1]
        %v1510 = vld [vmem:[#allocation2 + $0x3c] sm:$0xf]
        %v1511 = vld [vmem:[#allocation2 + $0x40] sm:$0xf]
        %v1512 = vld [vmem:[#allocation2 + $0x44] sm:$0x1]
        %v1513 = vld [vmem:[#allocation2 + $0x48] sm:$0xf]
        %v1514 = vld [vmem:[#allocation2 + $0x4c] sm:$0xf]
        %v1515 = vld [vmem:[#allocation2 + $0x50] sm:$0x1]
        %v1516 = vld [vmem:[#allocation2 + $0x54] sm:$0xf]
        %v1517 = vld [vmem:[#allocation2 + $0x58] sm:$0xf]
        %v1518 = vld [vmem:[#allocation2 + $0x5c] sm:$0x1]
        %vm1519 = vsmask.f32 3328
        %vm1520 = vsmask.f32 7440
        %vm1521 = vmor %vm1519, %vm1520
        %v1523 = vshrl.u32 %v1495, 16
        %v1525 = vrot.slane %v1523, 4
        %v1526 = vshll.u32 %v1495, 16
        %v1528 = vrot.slane %v1526, 5
        %v1529 = vor.u32 %v1525, %v1528
        %v1530 = vrot.slane %v1529, 4
        %v1532 = vshll.u32 %v1496, 16
        %v1534 = vrot.slane %v1532, 5
        %v1535 = vsel %vm1521, %v1530, %v1534
        %v1536 = vshrl.u32 %v1496, 16
        %v1538 = vrot.slane %v1536, 4
        %v1539 = vor.u32 %v1538, %v1534
        %v1540 = vrot.slane %v1539, 4
        %v1542 = vshll.u32 %v1497, 16
        %v1544 = vrot.slane %v1542, 5
        %v1545 = vsel %vm1521, %v1540, %v1544
        %v1547 = vshrl.u32 %v1498, 16
        %v1549 = vrot.slane %v1547, 4
        %v1550 = vshll.u32 %v1498, 16
        %v1552 = vrot.slane %v1550, 5
        %v1553 = vor.u32 %v1549, %v1552
        %v1554 = vrot.slane %v1553, 4
        %v1556 = vshll.u32 %v1499, 16
        %v1558 = vrot.slane %v1556, 5
        %v1559 = vsel %vm1521, %v1554, %v1558
        %v1560 = vshrl.u32 %v1499, 16
        %v1562 = vrot.slane %v1560, 4
        %v1563 = vor.u32 %v1562, %v1558
        %v1564 = vrot.slane %v1563, 4
        %v1566 = vshll.u32 %v1500, 16
        %v1568 = vrot.slane %v1566, 5
        %v1569 = vsel %vm1521, %v1564, %v1568
        %v1571 = vshrl.u32 %v1501, 16
        %v1573 = vrot.slane %v1571, 4
        %v1574 = vshll.u32 %v1501, 16
        %v1576 = vrot.slane %v1574, 5
        %v1577 = vor.u32 %v1573, %v1576
        %v1578 = vrot.slane %v1577, 4
        %v1580 = vshll.u32 %v1502, 16
        %v1582 = vrot.slane %v1580, 5
        %v1583 = vsel %vm1521, %v1578, %v1582
        %v1584 = vshrl.u32 %v1502, 16
        %v1586 = vrot.slane %v1584, 4
        %v1587 = vor.u32 %v1586, %v1582
        %v1588 = vrot.slane %v1587, 4
        %v1590 = vshll.u32 %v1503, 16
        %v1592 = vrot.slane %v1590, 5
        %v1593 = vsel %vm1521, %v1588, %v1592
        %v1595 = vshrl.u32 %v1504, 16
        %v1597 = vrot.slane %v1595, 4
        %v1598 = vshll.u32 %v1504, 16
        %v1600 = vrot.slane %v1598, 5
        %v1601 = vor.u32 %v1597, %v1600
        %v1602 = vrot.slane %v1601, 4
        %v1604 = vshll.u32 %v1505, 16
        %v1606 = vrot.slane %v1604, 5
        %v1607 = vsel %vm1521, %v1602, %v1606
        %v1608 = vshrl.u32 %v1505, 16
        %v1610 = vrot.slane %v1608, 4
        %v1611 = vor.u32 %v1610, %v1606
        %v1612 = vrot.slane %v1611, 4
        %v1614 = vshll.u32 %v1506, 16
        %v1616 = vrot.slane %v1614, 5
        %v1617 = vsel %vm1521, %v1612, %v1616
        %v1619 = vshrl.u32 %v1507, 16
        %v1621 = vrot.slane %v1619, 4
        %v1622 = vshll.u32 %v1507, 16
        %v1624 = vrot.slane %v1622, 5
        %v1625 = vor.u32 %v1621, %v1624
        %v1626 = vrot.slane %v1625, 4
        %v1628 = vshll.u32 %v1508, 16
        %v1630 = vrot.slane %v1628, 5
        %v1631 = vsel %vm1521, %v1626, %v1630
        %v1632 = vshrl.u32 %v1508, 16
        %v1634 = vrot.slane %v1632, 4
        %v1635 = vor.u32 %v1634, %v1630
        %v1636 = vrot.slane %v1635, 4
        %v1638 = vshll.u32 %v1509, 16
        %v1640 = vrot.slane %v1638, 5
        %v1641 = vsel %vm1521, %v1636, %v1640
        %v1643 = vshrl.u32 %v1510, 16
        %v1645 = vrot.slane %v1643, 4
        %v1646 = vshll.u32 %v1510, 16
        %v1648 = vrot.slane %v1646, 5
        %v1649 = vor.u32 %v1645, %v1648
        %v1650 = vrot.slane %v1649, 4
        %v1652 = vshll.u32 %v1511, 16
        %v1654 = vrot.slane %v1652, 5
        %v1655 = vsel %vm1521, %v1650, %v1654
        %v1656 = vshrl.u32 %v1511, 16
        %v1658 = vrot.slane %v1656, 4
        %v1659 = vor.u32 %v1658, %v1654
        %v1660 = vrot.slane %v1659, 4
        %v1662 = vshll.u32 %v1512, 16
        %v1664 = vrot.slane %v1662, 5
        %v1665 = vsel %vm1521, %v1660, %v1664
        %v1667 = vshrl.u32 %v1513, 16
        %v1669 = vrot.slane %v1667, 4
        %v1670 = vshll.u32 %v1513, 16
        %v1672 = vrot.slane %v1670, 5
        %v1673 = vor.u32 %v1669, %v1672
        %v1674 = vrot.slane %v1673, 4
        %v1676 = vshll.u32 %v1514, 16
        %v1678 = vrot.slane %v1676, 5
        %v1679 = vsel %vm1521, %v1674, %v1678
        %v1680 = vshrl.u32 %v1514, 16
        %v1682 = vrot.slane %v1680, 4
        %v1683 = vor.u32 %v1682, %v1678
        %v1684 = vrot.slane %v1683, 4
        %v1686 = vshll.u32 %v1515, 16
        %v1688 = vrot.slane %v1686, 5
        %v1689 = vsel %vm1521, %v1684, %v1688
        %v1691 = vshrl.u32 %v1516, 16
        %v1693 = vrot.slane %v1691, 4
        %v1694 = vshll.u32 %v1516, 16
        %v1696 = vrot.slane %v1694, 5
        %v1697 = vor.u32 %v1693, %v1696
        %v1698 = vrot.slane %v1697, 4
        %v1700 = vshll.u32 %v1517, 16
        %v1702 = vrot.slane %v1700, 5
        %v1703 = vsel %vm1521, %v1698, %v1702
        %v1704 = vshrl.u32 %v1517, 16
        %v1706 = vrot.slane %v1704, 4
        %v1707 = vor.u32 %v1706, %v1702
        %v1708 = vrot.slane %v1707, 4
        %v1710 = vshll.u32 %v1518, 16
        %v1712 = vrot.slane %v1710, 5
        %v1713 = vsel %vm1521, %v1708, %v1712
        %s1714 = scalar_lea.vmem %s2, 2
        %v1715 = vld [vmem:[%s1714] sm:$0x3]
        %v1716 = vunpack.c.l.b16 %v1535
        %v1717 = vunpack.c.l.b16 %v1545
        %v1718 = vunpack.c.l.b16 %v1559
        %v1719 = vunpack.c.l.b16 %v1569
        %v1720 = vunpack.c.l.b16 %v1583
        %v1721 = vunpack.c.l.b16 %v1593
        %v1722 = vunpack.c.l.b16 %v1607
        %v1723 = vunpack.c.l.b16 %v1617
        %v1724 = vunpack.c.l.b16 %v1631
        %v1725 = vunpack.c.l.b16 %v1641
        %v1726 = vunpack.c.l.b16 %v1655
        %v1727 = vunpack.c.l.b16 %v1665
        %v1728 = vunpack.c.l.b16 %v1679
        %v1729 = vunpack.c.l.b16 %v1689
        %v1730 = vunpack.c.l.b16 %v1703
        %v1731 = vunpack.c.l.b16 %v1713
        %v1732 = vpack.c.b16 %v1717, %v1716
        %v1733 = vpack.c.b16 %v1719, %v1718
        %v1734 = vpack.c.b16 %v1721, %v1720
        %v1735 = vpack.c.b16 %v1723, %v1722
        %v1736 = vpack.c.b16 %v1725, %v1724
        %v1737 = vpack.c.b16 %v1727, %v1726
        %v1738 = vpack.c.b16 %v1729, %v1728
        %v1739 = vpack.c.b16 %v1731, %v1730
        %v1741 = vsel %vm1401, %v1732, 0
        %v1744 = vsel %vm1401, %v1733, 0
        %v1747 = vsel %vm1401, %v1734, 0
        %v1750 = vsel %vm1401, %v1735, 0
        %v1753 = vsel %vm1401, %v1736, 0
        %v1756 = vsel %vm1401, %v1737, 0
        %v1759 = vsel %vm1401, %v1738, 0
        %v1762 = vsel %vm1401, %v1739, 0
        %v1765 = vsel %vm1426, %v1715, 0
        %1767 = vmatpush.bf16.msra.mxu0 0
        %1768 = vmatpush.bf16.msra.mxu0 0
        %1769 = vmatpush.bf16.msra.mxu0 0
        %1770 = vmatpush.bf16.msra.mxu0 0
        %1771 = vmatpush.bf16.msra.mxu0 0
        %1772 = vmatpush.bf16.msra.mxu0 0
        %1773 = vmatpush.bf16.msra.mxu0 0
        %1774 = vmatpush.bf16.msra.mxu0 %v1765
        %1775 = vmatmul.bf16.gmra.mxu0 %v1741
        %v1776 = vpop.f32.mrf.mxu0
        %v1777 = vadd.f32 0.0, %v1776
        %v1778 = vpop.f32.mrf.mxu0
        %v1779 = vadd.f32 0.0, %v1778
        %1780 = vmatmul.bf16.gmra.mxu0 %v1744
        %v1781 = vpop.f32.mrf.mxu0
        %v1782 = vadd.f32 0.0, %v1781
        %v1783 = vpop.f32.mrf.mxu0
        %v1784 = vadd.f32 0.0, %v1783
        %1785 = vmatmul.bf16.gmra.mxu0 %v1747
        %v1786 = vpop.f32.mrf.mxu0
        %v1787 = vadd.f32 0.0, %v1786
        %v1788 = vpop.f32.mrf.mxu0
        %v1789 = vadd.f32 0.0, %v1788
        %1790 = vmatmul.bf16.gmra.mxu0 %v1750
        %v1791 = vpop.f32.mrf.mxu0
        %v1792 = vadd.f32 0.0, %v1791
        %v1793 = vpop.f32.mrf.mxu0
        %v1794 = vadd.f32 0.0, %v1793
        %1795 = vmatmul.bf16.gmra.mxu0 %v1753
        %v1796 = vpop.f32.mrf.mxu0
        %v1797 = vadd.f32 0.0, %v1796
        %v1798 = vpop.f32.mrf.mxu0
        %v1799 = vadd.f32 0.0, %v1798
        %1800 = vmatmul.bf16.gmra.mxu0 %v1756
        %v1801 = vpop.f32.mrf.mxu0
        %v1802 = vadd.f32 0.0, %v1801
        %v1803 = vpop.f32.mrf.mxu0
        %v1804 = vadd.f32 0.0, %v1803
        %1805 = vmatmul.bf16.gmra.mxu0 %v1759
        %v1806 = vpop.f32.mrf.mxu0
        %v1807 = vadd.f32 0.0, %v1806
        %v1808 = vpop.f32.mrf.mxu0
        %v1809 = vadd.f32 0.0, %v1808
        %1810 = vmatmul.bf16.gmra.mxu0 %v1762
        %v1811 = vpop.f32.mrf.mxu0
        %v1812 = vadd.f32 0.0, %v1811
        %v1813 = vpop.f32.mrf.mxu0
        %v1814 = vadd.f32 0.0, %v1813
        %1815 = vdwg.mxu0
        %v1816 = vld [vmem:[#allocation3] sm:$0xff]
        %v1817 = vld [vmem:[#allocation3 + $0x8] sm:$0xff]
        %v1818 = vld [vmem:[#allocation3 + $0x10] sm:$0xff]
        %v1819 = vld [vmem:[#allocation3 + $0x18] sm:$0xff]
        %v1820 = vld [vmem:[#allocation3 + $0x20] sm:$0xff]
        %v1821 = vld [vmem:[#allocation3 + $0x28] sm:$0xff]
        %v1822 = vld [vmem:[#allocation3 + $0x30] sm:$0xff]
        %v1823 = vld [vmem:[#allocation3 + $0x38] sm:$0xff]
        %v1824 = vld [vmem:[#allocation3 + $0x40] sm:$0xff]
        %v1825 = vld [vmem:[#allocation3 + $0x48] sm:$0xff]
        %v1826 = vld [vmem:[#allocation3 + $0x50] sm:$0xff]
        %v1827 = vld [vmem:[#allocation3 + $0x58] sm:$0xff]
        %v1828 = vld [vmem:[#allocation3 + $0x60] sm:$0xff]
        %v1829 = vld [vmem:[#allocation3 + $0x68] sm:$0xff]
        %v1830 = vld [vmem:[#allocation3 + $0x70] sm:$0xff]
        %v1831 = vld [vmem:[#allocation3 + $0x78] sm:$0xff]
        %v1832 = vadd.f32 %v1816, %v1777
        %v1833 = vadd.f32 %v1817, %v1779
        %v1834 = vadd.f32 %v1818, %v1782
        %v1835 = vadd.f32 %v1819, %v1784
        %v1836 = vadd.f32 %v1820, %v1787
        %v1837 = vadd.f32 %v1821, %v1789
        %v1838 = vadd.f32 %v1822, %v1792
        %v1839 = vadd.f32 %v1823, %v1794
        %v1840 = vadd.f32 %v1824, %v1797
        %v1841 = vadd.f32 %v1825, %v1799
        %v1842 = vadd.f32 %v1826, %v1802
        %v1843 = vadd.f32 %v1827, %v1804
        %v1844 = vadd.f32 %v1828, %v1807
        %v1845 = vadd.f32 %v1829, %v1809
        %v1846 = vadd.f32 %v1830, %v1812
        %v1847 = vadd.f32 %v1831, %v1814
        %1848 = vst.msk [vmem:[#allocation3] sm:$0xff] %vm1401, %v1832
        %1849 = vst.msk [vmem:[#allocation3 + $0x8] sm:$0xff] %vm1401, %v1833
        %1850 = vst.msk [vmem:[#allocation3 + $0x10] sm:$0xff] %vm1401, %v1834
        %1851 = vst.msk [vmem:[#allocation3 + $0x18] sm:$0xff] %vm1401, %v1835
        %1852 = vst.msk [vmem:[#allocation3 + $0x20] sm:$0xff] %vm1401, %v1836
        %1853 = vst.msk [vmem:[#allocation3 + $0x28] sm:$0xff] %vm1401, %v1837
        %1854 = vst.msk [vmem:[#allocation3 + $0x30] sm:$0xff] %vm1401, %v1838
        %1855 = vst.msk [vmem:[#allocation3 + $0x38] sm:$0xff] %vm1401, %v1839
        %1856 = vst.msk [vmem:[#allocation3 + $0x40] sm:$0xff] %vm1401, %v1840
        %1857 = vst.msk [vmem:[#allocation3 + $0x48] sm:$0xff] %vm1401, %v1841
        %1858 = vst.msk [vmem:[#allocation3 + $0x50] sm:$0xff] %vm1401, %v1842
        %1859 = vst.msk [vmem:[#allocation3 + $0x58] sm:$0xff] %vm1401, %v1843
        %1860 = vst.msk [vmem:[#allocation3 + $0x60] sm:$0xff] %vm1401, %v1844
        %1861 = vst.msk [vmem:[#allocation3 + $0x68] sm:$0xff] %vm1401, %v1845
        %1862 = vst.msk [vmem:[#allocation3 + $0x70] sm:$0xff] %vm1401, %v1846
        %1863 = vst.msk [vmem:[#allocation3 + $0x78] sm:$0xff] %vm1401, %v1847
        %v1864 = vld [vmem:[#allocation2] sm:$0xe]
        %v1865 = vld [vmem:[#allocation2 + $0x4] sm:$0xf]
        %v1866 = vld [vmem:[#allocation2 + $0x8] sm:$0x1]
        %v1867 = vld [vmem:[#allocation2 + $0xc] sm:$0xe]
        %v1868 = vld [vmem:[#allocation2 + $0x10] sm:$0xf]
        %v1869 = vld [vmem:[#allocation2 + $0x14] sm:$0x1]
        %v1870 = vld [vmem:[#allocation2 + $0x18] sm:$0xe]
        %v1871 = vld [vmem:[#allocation2 + $0x1c] sm:$0xf]
        %v1872 = vld [vmem:[#allocation2 + $0x20] sm:$0x1]
        %v1873 = vld [vmem:[#allocation2 + $0x24] sm:$0xe]
        %v1874 = vld [vmem:[#allocation2 + $0x28] sm:$0xf]
        %v1875 = vld [vmem:[#allocation2 + $0x2c] sm:$0x1]
        %v1876 = vld [vmem:[#allocation2 + $0x30] sm:$0xe]
        %v1877 = vld [vmem:[#allocation2 + $0x34] sm:$0xf]
        %v1878 = vld [vmem:[#allocation2 + $0x38] sm:$0x1]
        %v1879 = vld [vmem:[#allocation2 + $0x3c] sm:$0xe]
        %v1880 = vld [vmem:[#allocation2 + $0x40] sm:$0xf]
        %v1881 = vld [vmem:[#allocation2 + $0x44] sm:$0x1]
        %v1882 = vld [vmem:[#allocation2 + $0x48] sm:$0xe]
        %v1883 = vld [vmem:[#allocation2 + $0x4c] sm:$0xf]
        %v1884 = vld [vmem:[#allocation2 + $0x50] sm:$0x1]
        %v1885 = vld [vmem:[#allocation2 + $0x54] sm:$0xe]
        %v1886 = vld [vmem:[#allocation2 + $0x58] sm:$0xf]
        %v1887 = vld [vmem:[#allocation2 + $0x5c] sm:$0x1]
        %vm1912 = vcmask 1042432
        %vm1913 = vcmask 1046532
        %vm1914 = vmor %vm1912, %vm1913
        %v1915 = vrot.slane %v1864, 5
        %v1916 = vrot.slane %v1915, 4
        %v1917 = vrot.slane %v1865, 5
        %v1918 = vsel %vm1914, %v1916, %v1917
        %v1919 = vrot.slane %v1917, 4
        %v1920 = vrot.slane %v1866, 5
        %v1921 = vsel %vm1914, %v1919, %v1920
        %v1922 = vrot.slane %v1867, 5
        %v1923 = vrot.slane %v1922, 4
        %v1924 = vrot.slane %v1868, 5
        %v1925 = vsel %vm1914, %v1923, %v1924
        %v1926 = vrot.slane %v1924, 4
        %v1927 = vrot.slane %v1869, 5
        %v1928 = vsel %vm1914, %v1926, %v1927
        %v1929 = vrot.slane %v1870, 5
        %v1930 = vrot.slane %v1929, 4
        %v1931 = vrot.slane %v1871, 5
        %v1932 = vsel %vm1914, %v1930, %v1931
        %v1933 = vrot.slane %v1931, 4
        %v1934 = vrot.slane %v1872, 5
        %v1935 = vsel %vm1914, %v1933, %v1934
        %v1936 = vrot.slane %v1873, 5
        %v1937 = vrot.slane %v1936, 4
        %v1938 = vrot.slane %v1874, 5
        %v1939 = vsel %vm1914, %v1937, %v1938
        %v1940 = vrot.slane %v1938, 4
        %v1941 = vrot.slane %v1875, 5
        %v1942 = vsel %vm1914, %v1940, %v1941
        %v1943 = vrot.slane %v1876, 5
        %v1944 = vrot.slane %v1943, 4
        %v1945 = vrot.slane %v1877, 5
        %v1946 = vsel %vm1914, %v1944, %v1945
        %v1947 = vrot.slane %v1945, 4
        %v1948 = vrot.slane %v1878, 5
        %v1949 = vsel %vm1914, %v1947, %v1948
        %v1950 = vrot.slane %v1879, 5
        %v1951 = vrot.slane %v1950, 4
        %v1952 = vrot.slane %v1880, 5
        %v1953 = vsel %vm1914, %v1951, %v1952
        %v1954 = vrot.slane %v1952, 4
        %v1955 = vrot.slane %v1881, 5
        %v1956 = vsel %vm1914, %v1954, %v1955
        %v1957 = vrot.slane %v1882, 5
        %v1958 = vrot.slane %v1957, 4
        %v1959 = vrot.slane %v1883, 5
        %v1960 = vsel %vm1914, %v1958, %v1959
        %v1961 = vrot.slane %v1959, 4
        %v1962 = vrot.slane %v1884, 5
        %v1963 = vsel %vm1914, %v1961, %v1962
        %v1964 = vrot.slane %v1885, 5
        %v1965 = vrot.slane %v1964, 4
        %v1966 = vrot.slane %v1886, 5
        %v1967 = vsel %vm1914, %v1965, %v1966
        %v1968 = vrot.slane %v1966, 4
        %v1969 = vrot.slane %v1887, 5
        %v1970 = vsel %vm1914, %v1968, %v1969
        %s1971 = scalar_lea.vmem %s2, 4
        %v1972 = vld [vmem:[%s1971] sm:$0x3]
        %v1973 = vunpack.c.l.b16 %v1918
        %v1974 = vunpack.c.l.b16 %v1921
        %v1975 = vunpack.c.l.b16 %v1925
        %v1976 = vunpack.c.l.b16 %v1928
        %v1977 = vunpack.c.l.b16 %v1932
        %v1978 = vunpack.c.l.b16 %v1935
        %v1979 = vunpack.c.l.b16 %v1939
        %v1980 = vunpack.c.l.b16 %v1942
        %v1981 = vunpack.c.l.b16 %v1946
        %v1982 = vunpack.c.l.b16 %v1949
        %v1983 = vunpack.c.l.b16 %v1953
        %v1984 = vunpack.c.l.b16 %v1956
        %v1985 = vunpack.c.l.b16 %v1960
        %v1986 = vunpack.c.l.b16 %v1963
        %v1987 = vunpack.c.l.b16 %v1967
        %v1988 = vunpack.c.l.b16 %v1970
        %v1989 = vpack.c.b16 %v1974, %v1973
        %v1990 = vpack.c.b16 %v1976, %v1975
        %v1991 = vpack.c.b16 %v1978, %v1977
        %v1992 = vpack.c.b16 %v1980, %v1979
        %v1993 = vpack.c.b16 %v1982, %v1981
        %v1994 = vpack.c.b16 %v1984, %v1983
        %v1995 = vpack.c.b16 %v1986, %v1985
        %v1996 = vpack.c.b16 %v1988, %v1987
        %v1998 = vsel %vm1401, %v1989, 0
        %v2001 = vsel %vm1401, %v1990, 0
        %v2004 = vsel %vm1401, %v1991, 0
        %v2007 = vsel %vm1401, %v1992, 0
        %v2010 = vsel %vm1401, %v1993, 0
        %v2013 = vsel %vm1401, %v1994, 0
        %v2016 = vsel %vm1401, %v1995, 0
        %v2019 = vsel %vm1401, %v1996, 0
        %v2022 = vsel %vm1426, %v1972, 0
        %2024 = vmatpush.bf16.msra.mxu0 0
        %2025 = vmatpush.bf16.msra.mxu0 0
        %2026 = vmatpush.bf16.msra.mxu0 0
        %2027 = vmatpush.bf16.msra.mxu0 0
        %2028 = vmatpush.bf16.msra.mxu0 0
        %2029 = vmatpush.bf16.msra.mxu0 0
        %2030 = vmatpush.bf16.msra.mxu0 0
        %2031 = vmatpush.bf16.msra.mxu0 %v2022
        %2032 = vmatmul.bf16.gmra.mxu0 %v1998
        %v2033 = vpop.f32.mrf.mxu0
        %v2034 = vadd.f32 0.0, %v2033
        %v2035 = vpop.f32.mrf.mxu0
        %v2036 = vadd.f32 0.0, %v2035
        %2037 = vmatmul.bf16.gmra.mxu0 %v2001
        %v2038 = vpop.f32.mrf.mxu0
        %v2039 = vadd.f32 0.0, %v2038
        %v2040 = vpop.f32.mrf.mxu0
        %v2041 = vadd.f32 0.0, %v2040
        %2042 = vmatmul.bf16.gmra.mxu0 %v2004
        %v2043 = vpop.f32.mrf.mxu0
        %v2044 = vadd.f32 0.0, %v2043
        %v2045 = vpop.f32.mrf.mxu0
        %v2046 = vadd.f32 0.0, %v2045
        %2047 = vmatmul.bf16.gmra.mxu0 %v2007
        %v2048 = vpop.f32.mrf.mxu0
        %v2049 = vadd.f32 0.0, %v2048
        %v2050 = vpop.f32.mrf.mxu0
        %v2051 = vadd.f32 0.0, %v2050
        %2052 = vmatmul.bf16.gmra.mxu0 %v2010
        %v2053 = vpop.f32.mrf.mxu0
        %v2054 = vadd.f32 0.0, %v2053
        %v2055 = vpop.f32.mrf.mxu0
        %v2056 = vadd.f32 0.0, %v2055
        %2057 = vmatmul.bf16.gmra.mxu0 %v2013
        %v2058 = vpop.f32.mrf.mxu0
        %v2059 = vadd.f32 0.0, %v2058
        %v2060 = vpop.f32.mrf.mxu0
        %v2061 = vadd.f32 0.0, %v2060
        %2062 = vmatmul.bf16.gmra.mxu0 %v2016
        %v2063 = vpop.f32.mrf.mxu0
        %v2064 = vadd.f32 0.0, %v2063
        %v2065 = vpop.f32.mrf.mxu0
        %v2066 = vadd.f32 0.0, %v2065
        %2067 = vmatmul.bf16.gmra.mxu0 %v2019
        %v2068 = vpop.f32.mrf.mxu0
        %v2069 = vadd.f32 0.0, %v2068
        %v2070 = vpop.f32.mrf.mxu0
        %v2071 = vadd.f32 0.0, %v2070
        %2072 = vdwg.mxu0
        %v2073 = vld [vmem:[#allocation3] sm:$0xff]
        %v2074 = vld [vmem:[#allocation3 + $0x8] sm:$0xff]
        %v2075 = vld [vmem:[#allocation3 + $0x10] sm:$0xff]
        %v2076 = vld [vmem:[#allocation3 + $0x18] sm:$0xff]
        %v2077 = vld [vmem:[#allocation3 + $0x20] sm:$0xff]
        %v2078 = vld [vmem:[#allocation3 + $0x28] sm:$0xff]
        %v2079 = vld [vmem:[#allocation3 + $0x30] sm:$0xff]
        %v2080 = vld [vmem:[#allocation3 + $0x38] sm:$0xff]
        %v2081 = vld [vmem:[#allocation3 + $0x40] sm:$0xff]
        %v2082 = vld [vmem:[#allocation3 + $0x48] sm:$0xff]
        %v2083 = vld [vmem:[#allocation3 + $0x50] sm:$0xff]
        %v2084 = vld [vmem:[#allocation3 + $0x58] sm:$0xff]
        %v2085 = vld [vmem:[#allocation3 + $0x60] sm:$0xff]
        %v2086 = vld [vmem:[#allocation3 + $0x68] sm:$0xff]
        %v2087 = vld [vmem:[#allocation3 + $0x70] sm:$0xff]
        %v2088 = vld [vmem:[#allocation3 + $0x78] sm:$0xff]
        %v2089 = vadd.f32 %v2073, %v2034
        %v2090 = vadd.f32 %v2074, %v2036
        %v2091 = vadd.f32 %v2075, %v2039
        %v2092 = vadd.f32 %v2076, %v2041
        %v2093 = vadd.f32 %v2077, %v2044
        %v2094 = vadd.f32 %v2078, %v2046
        %v2095 = vadd.f32 %v2079, %v2049
        %v2096 = vadd.f32 %v2080, %v2051
        %v2097 = vadd.f32 %v2081, %v2054
        %v2098 = vadd.f32 %v2082, %v2056
        %v2099 = vadd.f32 %v2083, %v2059
        %v2100 = vadd.f32 %v2084, %v2061
        %v2101 = vadd.f32 %v2085, %v2064
        %v2102 = vadd.f32 %v2086, %v2066
        %v2103 = vadd.f32 %v2087, %v2069
        %v2104 = vadd.f32 %v2088, %v2071
        %2105 = vst.msk [vmem:[#allocation3] sm:$0xff] %vm1401, %v2089
        %2106 = vst.msk [vmem:[#allocation3 + $0x8] sm:$0xff] %vm1401, %v2090
        %2107 = vst.msk [vmem:[#allocation3 + $0x10] sm:$0xff] %vm1401, %v2091
        %2108 = vst.msk [vmem:[#allocation3 + $0x18] sm:$0xff] %vm1401, %v2092
        %2109 = vst.msk [vmem:[#allocation3 + $0x20] sm:$0xff] %vm1401, %v2093
        %2110 = vst.msk [vmem:[#allocation3 + $0x28] sm:$0xff] %vm1401, %v2094
        %2111 = vst.msk [vmem:[#allocation3 + $0x30] sm:$0xff] %vm1401, %v2095
        %2112 = vst.msk [vmem:[#allocation3 + $0x38] sm:$0xff] %vm1401, %v2096
        %2113 = vst.msk [vmem:[#allocation3 + $0x40] sm:$0xff] %vm1401, %v2097
        %2114 = vst.msk [vmem:[#allocation3 + $0x48] sm:$0xff] %vm1401, %v2098
        %2115 = vst.msk [vmem:[#allocation3 + $0x50] sm:$0xff] %vm1401, %v2099
        %2116 = vst.msk [vmem:[#allocation3 + $0x58] sm:$0xff] %vm1401, %v2100
        %2117 = vst.msk [vmem:[#allocation3 + $0x60] sm:$0xff] %vm1401, %v2101
        %2118 = vst.msk [vmem:[#allocation3 + $0x68] sm:$0xff] %vm1401, %v2102
        %2119 = vst.msk [vmem:[#allocation3 + $0x70] sm:$0xff] %vm1401, %v2103
        %2120 = vst.msk [vmem:[#allocation3 + $0x78] sm:$0xff] %vm1401, %v2104
        %s2121 = scalar_lea.vmem [#allocation2], 12
        %v2122 = vld [vmem:[%s2121] sm:$0xf]
        %v2123 = vld [vmem:[%s2121 + $0x4] sm:$0xf]
        %v2124 = vld [vmem:[%s2121 + $0xc] sm:$0xf]
        %v2125 = vld [vmem:[%s2121 + $0x10] sm:$0xf]
        %v2126 = vld [vmem:[%s2121 + $0x18] sm:$0xf]
        %v2127 = vld [vmem:[%s2121 + $0x1c] sm:$0xf]
        %v2128 = vld [vmem:[%s2121 + $0x24] sm:$0xf]
        %v2129 = vld [vmem:[%s2121 + $0x28] sm:$0xf]
        %v2130 = vld [vmem:[%s2121 + $0x30] sm:$0xf]
        %v2131 = vld [vmem:[%s2121 + $0x34] sm:$0xf]
        %v2132 = vld [vmem:[%s2121 + $0x3c] sm:$0xf]
        %v2133 = vld [vmem:[%s2121 + $0x40] sm:$0xf]
        %v2134 = vld [vmem:[%s2121 + $0x48] sm:$0xf]
        %v2135 = vld [vmem:[%s2121 + $0x4c] sm:$0xf]
        %v2136 = vld [vmem:[%s2121 + $0x54] sm:$0xf]
        %v2137 = vld [vmem:[%s2121 + $0x58] sm:$0xf]
        %s2138 = scalar_lea.vmem %s2, 6
        %v2139 = vld [vmem:[%s2138] sm:$0x3]
        %v2156 = vunpack.c.l.b16 %v2122
        %v2157 = vunpack.c.l.b16 %v2123
        %v2158 = vunpack.c.l.b16 %v2124
        %v2159 = vunpack.c.l.b16 %v2125
        %v2160 = vunpack.c.l.b16 %v2126
        %v2161 = vunpack.c.l.b16 %v2127
        %v2162 = vunpack.c.l.b16 %v2128
        %v2163 = vunpack.c.l.b16 %v2129
        %v2164 = vunpack.c.l.b16 %v2130
        %v2165 = vunpack.c.l.b16 %v2131
        %v2166 = vunpack.c.l.b16 %v2132
        %v2167 = vunpack.c.l.b16 %v2133
        %v2168 = vunpack.c.l.b16 %v2134
        %v2169 = vunpack.c.l.b16 %v2135
        %v2170 = vunpack.c.l.b16 %v2136
        %v2171 = vunpack.c.l.b16 %v2137
        %v2172 = vpack.c.b16 %v2157, %v2156
        %v2173 = vpack.c.b16 %v2159, %v2158
        %v2174 = vpack.c.b16 %v2161, %v2160
        %v2175 = vpack.c.b16 %v2163, %v2162
        %v2176 = vpack.c.b16 %v2165, %v2164
        %v2177 = vpack.c.b16 %v2167, %v2166
        %v2178 = vpack.c.b16 %v2169, %v2168
        %v2179 = vpack.c.b16 %v2171, %v2170
        %v2181 = vsel %vm1401, %v2172, 0
        %v2184 = vsel %vm1401, %v2173, 0
        %v2187 = vsel %vm1401, %v2174, 0
        %v2190 = vsel %vm1401, %v2175, 0
        %v2193 = vsel %vm1401, %v2176, 0
        %v2196 = vsel %vm1401, %v2177, 0
        %v2199 = vsel %vm1401, %v2178, 0
        %v2202 = vsel %vm1401, %v2179, 0
        %v2205 = vsel %vm1426, %v2139, 0
        %2207 = vmatpush.bf16.msra.mxu0 0
        %2208 = vmatpush.bf16.msra.mxu0 0
        %2209 = vmatpush.bf16.msra.mxu0 0
        %2210 = vmatpush.bf16.msra.mxu0 0
        %2211 = vmatpush.bf16.msra.mxu0 0
        %2212 = vmatpush.bf16.msra.mxu0 0
        %2213 = vmatpush.bf16.msra.mxu0 0
        %2214 = vmatpush.bf16.msra.mxu0 %v2205
        %2215 = vmatmul.bf16.gmra.mxu0 %v2181
        %v2216 = vpop.f32.mrf.mxu0
        %v2217 = vadd.f32 0.0, %v2216
        %v2218 = vpop.f32.mrf.mxu0
        %v2219 = vadd.f32 0.0, %v2218
        %2220 = vmatmul.bf16.gmra.mxu0 %v2184
        %v2221 = vpop.f32.mrf.mxu0
        %v2222 = vadd.f32 0.0, %v2221
        %v2223 = vpop.f32.mrf.mxu0
        %v2224 = vadd.f32 0.0, %v2223
        %2225 = vmatmul.bf16.gmra.mxu0 %v2187
        %v2226 = vpop.f32.mrf.mxu0
        %v2227 = vadd.f32 0.0, %v2226
        %v2228 = vpop.f32.mrf.mxu0
        %v2229 = vadd.f32 0.0, %v2228
        %2230 = vmatmul.bf16.gmra.mxu0 %v2190
        %v2231 = vpop.f32.mrf.mxu0
        %v2232 = vadd.f32 0.0, %v2231
        %v2233 = vpop.f32.mrf.mxu0
        %v2234 = vadd.f32 0.0, %v2233
        %2235 = vmatmul.bf16.gmra.mxu0 %v2193
        %v2236 = vpop.f32.mrf.mxu0
        %v2237 = vadd.f32 0.0, %v2236
        %v2238 = vpop.f32.mrf.mxu0
        %v2239 = vadd.f32 0.0, %v2238
        %2240 = vmatmul.bf16.gmra.mxu0 %v2196
        %v2241 = vpop.f32.mrf.mxu0
        %v2242 = vadd.f32 0.0, %v2241
        %v2243 = vpop.f32.mrf.mxu0
        %v2244 = vadd.f32 0.0, %v2243
        %2245 = vmatmul.bf16.gmra.mxu0 %v2199
        %v2246 = vpop.f32.mrf.mxu0
        %v2247 = vadd.f32 0.0, %v2246
        %v2248 = vpop.f32.mrf.mxu0
        %v2249 = vadd.f32 0.0, %v2248
        %2250 = vmatmul.bf16.gmra.mxu0 %v2202
        %v2251 = vpop.f32.mrf.mxu0
        %v2252 = vadd.f32 0.0, %v2251
        %v2253 = vpop.f32.mrf.mxu0
        %v2254 = vadd.f32 0.0, %v2253
        %2255 = vdwg.mxu0
        %v2256 = vld [vmem:[#allocation3] sm:$0xff]
        %v2257 = vld [vmem:[#allocation3 + $0x8] sm:$0xff]
        %v2258 = vld [vmem:[#allocation3 + $0x10] sm:$0xff]
        %v2259 = vld [vmem:[#allocation3 + $0x18] sm:$0xff]
        %v2260 = vld [vmem:[#allocation3 + $0x20] sm:$0xff]
        %v2261 = vld [vmem:[#allocation3 + $0x28] sm:$0xff]
        %v2262 = vld [vmem:[#allocation3 + $0x30] sm:$0xff]
        %v2263 = vld [vmem:[#allocation3 + $0x38] sm:$0xff]
        %v2264 = vld [vmem:[#allocation3 + $0x40] sm:$0xff]
        %v2265 = vld [vmem:[#allocation3 + $0x48] sm:$0xff]
        %v2266 = vld [vmem:[#allocation3 + $0x50] sm:$0xff]
        %v2267 = vld [vmem:[#allocation3 + $0x58] sm:$0xff]
        %v2268 = vld [vmem:[#allocation3 + $0x60] sm:$0xff]
        %v2269 = vld [vmem:[#allocation3 + $0x68] sm:$0xff]
        %v2270 = vld [vmem:[#allocation3 + $0x70] sm:$0xff]
        %v2271 = vld [vmem:[#allocation3 + $0x78] sm:$0xff]
        %v2272 = vadd.f32 %v2256, %v2217
        %v2273 = vadd.f32 %v2257, %v2219
        %v2274 = vadd.f32 %v2258, %v2222
        %v2275 = vadd.f32 %v2259, %v2224
        %v2276 = vadd.f32 %v2260, %v2227
        %v2277 = vadd.f32 %v2261, %v2229
        %v2278 = vadd.f32 %v2262, %v2232
        %v2279 = vadd.f32 %v2263, %v2234
        %v2280 = vadd.f32 %v2264, %v2237
        %v2281 = vadd.f32 %v2265, %v2239
        %v2282 = vadd.f32 %v2266, %v2242
        %v2283 = vadd.f32 %v2267, %v2244
        %v2284 = vadd.f32 %v2268, %v2247
        %v2285 = vadd.f32 %v2269, %v2249
        %v2286 = vadd.f32 %v2270, %v2252
        %v2287 = vadd.f32 %v2271, %v2254
        %2288 = vst.msk [vmem:[#allocation3] sm:$0xff] %vm1401, %v2272
        %2289 = vst.msk [vmem:[#allocation3 + $0x8] sm:$0xff] %vm1401, %v2273
        %2290 = vst.msk [vmem:[#allocation3 + $0x10] sm:$0xff] %vm1401, %v2274
        %2291 = vst.msk [vmem:[#allocation3 + $0x18] sm:$0xff] %vm1401, %v2275
        %2292 = vst.msk [vmem:[#allocation3 + $0x20] sm:$0xff] %vm1401, %v2276
        %2293 = vst.msk [vmem:[#allocation3 + $0x28] sm:$0xff] %vm1401, %v2277
        %2294 = vst.msk [vmem:[#allocation3 + $0x30] sm:$0xff] %vm1401, %v2278
        %2295 = vst.msk [vmem:[#allocation3 + $0x38] sm:$0xff] %vm1401, %v2279
        %2296 = vst.msk [vmem:[#allocation3 + $0x40] sm:$0xff] %vm1401, %v2280
        %2297 = vst.msk [vmem:[#allocation3 + $0x48] sm:$0xff] %vm1401, %v2281
        %2298 = vst.msk [vmem:[#allocation3 + $0x50] sm:$0xff] %vm1401, %v2282
        %2299 = vst.msk [vmem:[#allocation3 + $0x58] sm:$0xff] %vm1401, %v2283
        %2300 = vst.msk [vmem:[#allocation3 + $0x60] sm:$0xff] %vm1401, %v2284
        %2301 = vst.msk [vmem:[#allocation3 + $0x68] sm:$0xff] %vm1401, %v2285
        %2302 = vst.msk [vmem:[#allocation3 + $0x70] sm:$0xff] %vm1401, %v2286
        %2303 = vst.msk [vmem:[#allocation3 + $0x78] sm:$0xff] %vm1401, %v2287
        %v2304 = vld [vmem:[%s2121] sm:$0xf]
        %v2305 = vld [vmem:[%s2121 + $0x4] sm:$0xf]
        %v2306 = vld [vmem:[%s2121 + $0x8] sm:$0x1]
        %v2307 = vld [vmem:[%s2121 + $0xc] sm:$0xf]
        %v2308 = vld [vmem:[%s2121 + $0x10] sm:$0xf]
        %v2309 = vld [vmem:[%s2121 + $0x14] sm:$0x1]
        %v2310 = vld [vmem:[%s2121 + $0x18] sm:$0xf]
        %v2311 = vld [vmem:[%s2121 + $0x1c] sm:$0xf]
        %v2312 = vld [vmem:[%s2121 + $0x20] sm:$0x1]
        %v2313 = vld [vmem:[%s2121 + $0x24] sm:$0xf]
        %v2314 = vld [vmem:[%s2121 + $0x28] sm:$0xf]
        %v2315 = vld [vmem:[%s2121 + $0x2c] sm:$0x1]
        %v2316 = vld [vmem:[%s2121 + $0x30] sm:$0xf]
        %v2317 = vld [vmem:[%s2121 + $0x34] sm:$0xf]
        %v2318 = vld [vmem:[%s2121 + $0x38] sm:$0x1]
        %v2319 = vld [vmem:[%s2121 + $0x3c] sm:$0xf]
        %v2320 = vld [vmem:[%s2121 + $0x40] sm:$0xf]
        %v2321 = vld [vmem:[%s2121 + $0x44] sm:$0x1]
        %v2322 = vld [vmem:[%s2121 + $0x48] sm:$0xf]
        %v2323 = vld [vmem:[%s2121 + $0x4c] sm:$0xf]
        %v2324 = vld [vmem:[%s2121 + $0x50] sm:$0x1]
        %v2325 = vld [vmem:[%s2121 + $0x54] sm:$0xf]
        %v2326 = vld [vmem:[%s2121 + $0x58] sm:$0xf]
        %v2327 = vld [vmem:[%s2121 + $0x5c] sm:$0x1]
        %v2329 = vshrl.u32 %v2304, 16
        %v2331 = vrot.slane %v2329, 4
        %v2332 = vshll.u32 %v2304, 16
        %v2334 = vrot.slane %v2332, 5
        %v2335 = vor.u32 %v2331, %v2334
        %v2336 = vrot.slane %v2335, 4
        %v2338 = vshll.u32 %v2305, 16
        %v2340 = vrot.slane %v2338, 5
        %v2341 = vsel %vm1521, %v2336, %v2340
        %v2342 = vshrl.u32 %v2305, 16
        %v2344 = vrot.slane %v2342, 4
        %v2345 = vor.u32 %v2344, %v2340
        %v2346 = vrot.slane %v2345, 4
        %v2348 = vshll.u32 %v2306, 16
        %v2350 = vrot.slane %v2348, 5
        %v2351 = vsel %vm1521, %v2346, %v2350
        %v2353 = vshrl.u32 %v2307, 16
        %v2355 = vrot.slane %v2353, 4
        %v2356 = vshll.u32 %v2307, 16
        %v2358 = vrot.slane %v2356, 5
        %v2359 = vor.u32 %v2355, %v2358
        %v2360 = vrot.slane %v2359, 4
        %v2362 = vshll.u32 %v2308, 16
        %v2364 = vrot.slane %v2362, 5
        %v2365 = vsel %vm1521, %v2360, %v2364
        %v2366 = vshrl.u32 %v2308, 16
        %v2368 = vrot.slane %v2366, 4
        %v2369 = vor.u32 %v2368, %v2364
        %v2370 = vrot.slane %v2369, 4
        %v2372 = vshll.u32 %v2309, 16
        %v2374 = vrot.slane %v2372, 5
        %v2375 = vsel %vm1521, %v2370, %v2374
        %v2377 = vshrl.u32 %v2310, 16
        %v2379 = vrot.slane %v2377, 4
        %v2380 = vshll.u32 %v2310, 16
        %v2382 = vrot.slane %v2380, 5
        %v2383 = vor.u32 %v2379, %v2382
        %v2384 = vrot.slane %v2383, 4
        %v2386 = vshll.u32 %v2311, 16
        %v2388 = vrot.slane %v2386, 5
        %v2389 = vsel %vm1521, %v2384, %v2388
        %v2390 = vshrl.u32 %v2311, 16
        %v2392 = vrot.slane %v2390, 4
        %v2393 = vor.u32 %v2392, %v2388
        %v2394 = vrot.slane %v2393, 4
        %v2396 = vshll.u32 %v2312, 16
        %v2398 = vrot.slane %v2396, 5
        %v2399 = vsel %vm1521, %v2394, %v2398
        %v2401 = vshrl.u32 %v2313, 16
        %v2403 = vrot.slane %v2401, 4
        %v2404 = vshll.u32 %v2313, 16
        %v2406 = vrot.slane %v2404, 5
        %v2407 = vor.u32 %v2403, %v2406
        %v2408 = vrot.slane %v2407, 4
        %v2410 = vshll.u32 %v2314, 16
        %v2412 = vrot.slane %v2410, 5
        %v2413 = vsel %vm1521, %v2408, %v2412
        %v2414 = vshrl.u32 %v2314, 16
        %v2416 = vrot.slane %v2414, 4
        %v2417 = vor.u32 %v2416, %v2412
        %v2418 = vrot.slane %v2417, 4
        %v2420 = vshll.u32 %v2315, 16
        %v2422 = vrot.slane %v2420, 5
        %v2423 = vsel %vm1521, %v2418, %v2422
        %v2425 = vshrl.u32 %v2316, 16
        %v2427 = vrot.slane %v2425, 4
        %v2428 = vshll.u32 %v2316, 16
        %v2430 = vrot.slane %v2428, 5
        %v2431 = vor.u32 %v2427, %v2430
        %v2432 = vrot.slane %v2431, 4
        %v2434 = vshll.u32 %v2317, 16
        %v2436 = vrot.slane %v2434, 5
        %v2437 = vsel %vm1521, %v2432, %v2436
        %v2438 = vshrl.u32 %v2317, 16
        %v2440 = vrot.slane %v2438, 4
        %v2441 = vor.u32 %v2440, %v2436
        %v2442 = vrot.slane %v2441, 4
        %v2444 = vshll.u32 %v2318, 16
        %v2446 = vrot.slane %v2444, 5
        %v2447 = vsel %vm1521, %v2442, %v2446
        %v2449 = vshrl.u32 %v2319, 16
        %v2451 = vrot.slane %v2449, 4
        %v2452 = vshll.u32 %v2319, 16
        %v2454 = vrot.slane %v2452, 5
        %v2455 = vor.u32 %v2451, %v2454
        %v2456 = vrot.slane %v2455, 4
        %v2458 = vshll.u32 %v2320, 16
        %v2460 = vrot.slane %v2458, 5
        %v2461 = vsel %vm1521, %v2456, %v2460
        %v2462 = vshrl.u32 %v2320, 16
        %v2464 = vrot.slane %v2462, 4
        %v2465 = vor.u32 %v2464, %v2460
        %v2466 = vrot.slane %v2465, 4
        %v2468 = vshll.u32 %v2321, 16
        %v2470 = vrot.slane %v2468, 5
        %v2471 = vsel %vm1521, %v2466, %v2470
        %v2473 = vshrl.u32 %v2322, 16
        %v2475 = vrot.slane %v2473, 4
        %v2476 = vshll.u32 %v2322, 16
        %v2478 = vrot.slane %v2476, 5
        %v2479 = vor.u32 %v2475, %v2478
        %v2480 = vrot.slane %v2479, 4
        %v2482 = vshll.u32 %v2323, 16
        %v2484 = vrot.slane %v2482, 5
        %v2485 = vsel %vm1521, %v2480, %v2484
        %v2486 = vshrl.u32 %v2323, 16
        %v2488 = vrot.slane %v2486, 4
        %v2489 = vor.u32 %v2488, %v2484
        %v2490 = vrot.slane %v2489, 4
        %v2492 = vshll.u32 %v2324, 16
        %v2494 = vrot.slane %v2492, 5
        %v2495 = vsel %vm1521, %v2490, %v2494
        %v2497 = vshrl.u32 %v2325, 16
        %v2499 = vrot.slane %v2497, 4
        %v2500 = vshll.u32 %v2325, 16
        %v2502 = vrot.slane %v2500, 5
        %v2503 = vor.u32 %v2499, %v2502
        %v2504 = vrot.slane %v2503, 4
        %v2506 = vshll.u32 %v2326, 16
        %v2508 = vrot.slane %v2506, 5
        %v2509 = vsel %vm1521, %v2504, %v2508
        %v2510 = vshrl.u32 %v2326, 16
        %v2512 = vrot.slane %v2510, 4
        %v2513 = vor.u32 %v2512, %v2508
        %v2514 = vrot.slane %v2513, 4
        %v2516 = vshll.u32 %v2327, 16
        %v2518 = vrot.slane %v2516, 5
        %v2519 = vsel %vm1521, %v2514, %v2518
        %s2520 = scalar_lea.vmem %s2, 8
        %v2521 = vld [vmem:[%s2520] sm:$0x3]
        %v2522 = vunpack.c.l.b16 %v2341
        %v2523 = vunpack.c.l.b16 %v2351
        %v2524 = vunpack.c.l.b16 %v2365
        %v2525 = vunpack.c.l.b16 %v2375
        %v2526 = vunpack.c.l.b16 %v2389
        %v2527 = vunpack.c.l.b16 %v2399
        %v2528 = vunpack.c.l.b16 %v2413
        %v2529 = vunpack.c.l.b16 %v2423
        %v2530 = vunpack.c.l.b16 %v2437
        %v2531 = vunpack.c.l.b16 %v2447
        %v2532 = vunpack.c.l.b16 %v2461
        %v2533 = vunpack.c.l.b16 %v2471
        %v2534 = vunpack.c.l.b16 %v2485
        %v2535 = vunpack.c.l.b16 %v2495
        %v2536 = vunpack.c.l.b16 %v2509
        %v2537 = vunpack.c.l.b16 %v2519
        %v2538 = vpack.c.b16 %v2523, %v2522
        %v2539 = vpack.c.b16 %v2525, %v2524
        %v2540 = vpack.c.b16 %v2527, %v2526
        %v2541 = vpack.c.b16 %v2529, %v2528
        %v2542 = vpack.c.b16 %v2531, %v2530
        %v2543 = vpack.c.b16 %v2533, %v2532
        %v2544 = vpack.c.b16 %v2535, %v2534
        %v2545 = vpack.c.b16 %v2537, %v2536
        %v2547 = vsel %vm1401, %v2538, 0
        %v2550 = vsel %vm1401, %v2539, 0
        %v2553 = vsel %vm1401, %v2540, 0
        %v2556 = vsel %vm1401, %v2541, 0
        %v2559 = vsel %vm1401, %v2542, 0
        %v2562 = vsel %vm1401, %v2543, 0
        %v2565 = vsel %vm1401, %v2544, 0
        %v2568 = vsel %vm1401, %v2545, 0
        %v2571 = vsel %vm1426, %v2521, 0
        %2573 = vmatpush.bf16.msra.mxu0 0
        %2574 = vmatpush.bf16.msra.mxu0 0
        %2575 = vmatpush.bf16.msra.mxu0 0
        %2576 = vmatpush.bf16.msra.mxu0 0
        %2577 = vmatpush.bf16.msra.mxu0 0
        %2578 = vmatpush.bf16.msra.mxu0 0
        %2579 = vmatpush.bf16.msra.mxu0 0
        %2580 = vmatpush.bf16.msra.mxu0 %v2571
        %2581 = vmatmul.bf16.gmra.mxu0 %v2547
        %v2582 = vpop.f32.mrf.mxu0
        %v2583 = vadd.f32 0.0, %v2582
        %v2584 = vpop.f32.mrf.mxu0
        %v2585 = vadd.f32 0.0, %v2584
        %2586 = vmatmul.bf16.gmra.mxu0 %v2550
        %v2587 = vpop.f32.mrf.mxu0
        %v2588 = vadd.f32 0.0, %v2587
        %v2589 = vpop.f32.mrf.mxu0
        %v2590 = vadd.f32 0.0, %v2589
        %2591 = vmatmul.bf16.gmra.mxu0 %v2553
        %v2592 = vpop.f32.mrf.mxu0
        %v2593 = vadd.f32 0.0, %v2592
        %v2594 = vpop.f32.mrf.mxu0
        %v2595 = vadd.f32 0.0, %v2594
        %2596 = vmatmul.bf16.gmra.mxu0 %v2556
        %v2597 = vpop.f32.mrf.mxu0
        %v2598 = vadd.f32 0.0, %v2597
        %v2599 = vpop.f32.mrf.mxu0
        %v2600 = vadd.f32 0.0, %v2599
        %2601 = vmatmul.bf16.gmra.mxu0 %v2559
        %v2602 = vpop.f32.mrf.mxu0
        %v2603 = vadd.f32 0.0, %v2602
        %v2604 = vpop.f32.mrf.mxu0
        %v2605 = vadd.f32 0.0, %v2604
        %2606 = vmatmul.bf16.gmra.mxu0 %v2562
        %v2607 = vpop.f32.mrf.mxu0
        %v2608 = vadd.f32 0.0, %v2607
        %v2609 = vpop.f32.mrf.mxu0
        %v2610 = vadd.f32 0.0, %v2609
        %2611 = vmatmul.bf16.gmra.mxu0 %v2565
        %v2612 = vpop.f32.mrf.mxu0
        %v2613 = vadd.f32 0.0, %v2612
        %v2614 = vpop.f32.mrf.mxu0
        %v2615 = vadd.f32 0.0, %v2614
        %2616 = vmatmul.bf16.gmra.mxu0 %v2568
        %v2617 = vpop.f32.mrf.mxu0
        %v2618 = vadd.f32 0.0, %v2617
        %v2619 = vpop.f32.mrf.mxu0
        %v2620 = vadd.f32 0.0, %v2619
        %2621 = vdwg.mxu0
        %v2622 = vld [vmem:[#allocation3] sm:$0xff]
        %v2623 = vld [vmem:[#allocation3 + $0x8] sm:$0xff]
        %v2624 = vld [vmem:[#allocation3 + $0x10] sm:$0xff]
        %v2625 = vld [vmem:[#allocation3 + $0x18] sm:$0xff]
        %v2626 = vld [vmem:[#allocation3 + $0x20] sm:$0xff]
        %v2627 = vld [vmem:[#allocation3 + $0x28] sm:$0xff]
        %v2628 = vld [vmem:[#allocation3 + $0x30] sm:$0xff]
        %v2629 = vld [vmem:[#allocation3 + $0x38] sm:$0xff]
        %v2630 = vld [vmem:[#allocation3 + $0x40] sm:$0xff]
        %v2631 = vld [vmem:[#allocation3 + $0x48] sm:$0xff]
        %v2632 = vld [vmem:[#allocation3 + $0x50] sm:$0xff]
        %v2633 = vld [vmem:[#allocation3 + $0x58] sm:$0xff]
        %v2634 = vld [vmem:[#allocation3 + $0x60] sm:$0xff]
        %v2635 = vld [vmem:[#allocation3 + $0x68] sm:$0xff]
        %v2636 = vld [vmem:[#allocation3 + $0x70] sm:$0xff]
        %v2637 = vld [vmem:[#allocation3 + $0x78] sm:$0xff]
        %v2638 = vadd.f32 %v2622, %v2583
        %v2639 = vadd.f32 %v2623, %v2585
        %v2640 = vadd.f32 %v2624, %v2588
        %v2641 = vadd.f32 %v2625, %v2590
        %v2642 = vadd.f32 %v2626, %v2593
        %v2643 = vadd.f32 %v2627, %v2595
        %v2644 = vadd.f32 %v2628, %v2598
        %v2645 = vadd.f32 %v2629, %v2600
        %v2646 = vadd.f32 %v2630, %v2603
        %v2647 = vadd.f32 %v2631, %v2605
        %v2648 = vadd.f32 %v2632, %v2608
        %v2649 = vadd.f32 %v2633, %v2610
        %v2650 = vadd.f32 %v2634, %v2613
        %v2651 = vadd.f32 %v2635, %v2615
        %v2652 = vadd.f32 %v2636, %v2618
        %v2653 = vadd.f32 %v2637, %v2620
        %2654 = vst.msk [vmem:[#allocation3] sm:$0xff] %vm1401, %v2638
        %2655 = vst.msk [vmem:[#allocation3 + $0x8] sm:$0xff] %vm1401, %v2639
        %2656 = vst.msk [vmem:[#allocation3 + $0x10] sm:$0xff] %vm1401, %v2640
        %2657 = vst.msk [vmem:[#allocation3 + $0x18] sm:$0xff] %vm1401, %v2641
        %2658 = vst.msk [vmem:[#allocation3 + $0x20] sm:$0xff] %vm1401, %v2642
        %2659 = vst.msk [vmem:[#allocation3 + $0x28] sm:$0xff] %vm1401, %v2643
        %2660 = vst.msk [vmem:[#allocation3 + $0x30] sm:$0xff] %vm1401, %v2644
        %2661 = vst.msk [vmem:[#allocation3 + $0x38] sm:$0xff] %vm1401, %v2645
        %2662 = vst.msk [vmem:[#allocation3 + $0x40] sm:$0xff] %vm1401, %v2646
        %2663 = vst.msk [vmem:[#allocation3 + $0x48] sm:$0xff] %vm1401, %v2647
        %2664 = vst.msk [vmem:[#allocation3 + $0x50] sm:$0xff] %vm1401, %v2648
        %2665 = vst.msk [vmem:[#allocation3 + $0x58] sm:$0xff] %vm1401, %v2649
        %2666 = vst.msk [vmem:[#allocation3 + $0x60] sm:$0xff] %vm1401, %v2650
        %2667 = vst.msk [vmem:[#allocation3 + $0x68] sm:$0xff] %vm1401, %v2651
        %2668 = vst.msk [vmem:[#allocation3 + $0x70] sm:$0xff] %vm1401, %v2652
        %2669 = vst.msk [vmem:[#allocation3 + $0x78] sm:$0xff] %vm1401, %v2653
        %v2670 = vld [vmem:[%s2121] sm:$0xe]
        %v2671 = vld [vmem:[%s2121 + $0x4] sm:$0xf]
        %v2672 = vld [vmem:[%s2121 + $0x8] sm:$0x1]
        %v2673 = vld [vmem:[%s2121 + $0xc] sm:$0xe]
        %v2674 = vld [vmem:[%s2121 + $0x10] sm:$0xf]
        %v2675 = vld [vmem:[%s2121 + $0x14] sm:$0x1]
        %v2676 = vld [vmem:[%s2121 + $0x18] sm:$0xe]
        %v2677 = vld [vmem:[%s2121 + $0x1c] sm:$0xf]
        %v2678 = vld [vmem:[%s2121 + $0x20] sm:$0x1]
        %v2679 = vld [vmem:[%s2121 + $0x24] sm:$0xe]
        %v2680 = vld [vmem:[%s2121 + $0x28] sm:$0xf]
        %v2681 = vld [vmem:[%s2121 + $0x2c] sm:$0x1]
        %v2682 = vld [vmem:[%s2121 + $0x30] sm:$0xe]
        %v2683 = vld [vmem:[%s2121 + $0x34] sm:$0xf]
        %v2684 = vld [vmem:[%s2121 + $0x38] sm:$0x1]
        %v2685 = vld [vmem:[%s2121 + $0x3c] sm:$0xe]
        %v2686 = vld [vmem:[%s2121 + $0x40] sm:$0xf]
        %v2687 = vld [vmem:[%s2121 + $0x44] sm:$0x1]
        %v2688 = vld [vmem:[%s2121 + $0x48] sm:$0xe]
        %v2689 = vld [vmem:[%s2121 + $0x4c] sm:$0xf]
        %v2690 = vld [vmem:[%s2121 + $0x50] sm:$0x1]
        %v2691 = vld [vmem:[%s2121 + $0x54] sm:$0xe]
        %v2692 = vld [vmem:[%s2121 + $0x58] sm:$0xf]
        %v2693 = vld [vmem:[%s2121 + $0x5c] sm:$0x1]
        %v2718 = vrot.slane %v2670, 5
        %v2719 = vrot.slane %v2718, 4
        %v2720 = vrot.slane %v2671, 5
        %v2721 = vsel %vm1914, %v2719, %v2720
        %v2722 = vrot.slane %v2720, 4
        %v2723 = vrot.slane %v2672, 5
        %v2724 = vsel %vm1914, %v2722, %v2723
        %v2725 = vrot.slane %v2673, 5
        %v2726 = vrot.slane %v2725, 4
        %v2727 = vrot.slane %v2674, 5
        %v2728 = vsel %vm1914, %v2726, %v2727
        %v2729 = vrot.slane %v2727, 4
        %v2730 = vrot.slane %v2675, 5
        %v2731 = vsel %vm1914, %v2729, %v2730
        %v2732 = vrot.slane %v2676, 5
        %v2733 = vrot.slane %v2732, 4
        %v2734 = vrot.slane %v2677, 5
        %v2735 = vsel %vm1914, %v2733, %v2734
        %v2736 = vrot.slane %v2734, 4
        %v2737 = vrot.slane %v2678, 5
        %v2738 = vsel %vm1914, %v2736, %v2737
        %v2739 = vrot.slane %v2679, 5
        %v2740 = vrot.slane %v2739, 4
        %v2741 = vrot.slane %v2680, 5
        %v2742 = vsel %vm1914, %v2740, %v2741
        %v2743 = vrot.slane %v2741, 4
        %v2744 = vrot.slane %v2681, 5
        %v2745 = vsel %vm1914, %v2743, %v2744
        %v2746 = vrot.slane %v2682, 5
        %v2747 = vrot.slane %v2746, 4
        %v2748 = vrot.slane %v2683, 5
        %v2749 = vsel %vm1914, %v2747, %v2748
        %v2750 = vrot.slane %v2748, 4
        %v2751 = vrot.slane %v2684, 5
        %v2752 = vsel %vm1914, %v2750, %v2751
        %v2753 = vrot.slane %v2685, 5
        %v2754 = vrot.slane %v2753, 4
        %v2755 = vrot.slane %v2686, 5
        %v2756 = vsel %vm1914, %v2754, %v2755
        %v2757 = vrot.slane %v2755, 4
        %v2758 = vrot.slane %v2687, 5
        %v2759 = vsel %vm1914, %v2757, %v2758
        %v2760 = vrot.slane %v2688, 5
        %v2761 = vrot.slane %v2760, 4
        %v2762 = vrot.slane %v2689, 5
        %v2763 = vsel %vm1914, %v2761, %v2762
        %v2764 = vrot.slane %v2762, 4
        %v2765 = vrot.slane %v2690, 5
        %v2766 = vsel %vm1914, %v2764, %v2765
        %v2767 = vrot.slane %v2691, 5
        %v2768 = vrot.slane %v2767, 4
        %v2769 = vrot.slane %v2692, 5
        %v2770 = vsel %vm1914, %v2768, %v2769
        %v2771 = vrot.slane %v2769, 4
        %v2772 = vrot.slane %v2693, 5
        %v2773 = vsel %vm1914, %v2771, %v2772
        %s2774 = scalar_lea.vmem %s2, 10
        %v2775 = vld [vmem:[%s2774] sm:$0x3]
        %v2776 = vunpack.c.l.b16 %v2721
        %v2777 = vunpack.c.l.b16 %v2724
        %v2778 = vunpack.c.l.b16 %v2728
        %v2779 = vunpack.c.l.b16 %v2731
        %v2780 = vunpack.c.l.b16 %v2735
        %v2781 = vunpack.c.l.b16 %v2738
        %v2782 = vunpack.c.l.b16 %v2742
        %v2783 = vunpack.c.l.b16 %v2745
        %v2784 = vunpack.c.l.b16 %v2749
        %v2785 = vunpack.c.l.b16 %v2752
        %v2786 = vunpack.c.l.b16 %v2756
        %v2787 = vunpack.c.l.b16 %v2759
        %v2788 = vunpack.c.l.b16 %v2763
        %v2789 = vunpack.c.l.b16 %v2766
        %v2790 = vunpack.c.l.b16 %v2770
        %v2791 = vunpack.c.l.b16 %v2773
        %v2792 = vpack.c.b16 %v2777, %v2776
        %v2793 = vpack.c.b16 %v2779, %v2778
        %v2794 = vpack.c.b16 %v2781, %v2780
        %v2795 = vpack.c.b16 %v2783, %v2782
        %v2796 = vpack.c.b16 %v2785, %v2784
        %v2797 = vpack.c.b16 %v2787, %v2786
        %v2798 = vpack.c.b16 %v2789, %v2788
        %v2799 = vpack.c.b16 %v2791, %v2790
        %v2801 = vsel %vm1401, %v2792, 0
        %v2804 = vsel %vm1401, %v2793, 0
        %v2807 = vsel %vm1401, %v2794, 0
        %v2810 = vsel %vm1401, %v2795, 0
        %v2813 = vsel %vm1401, %v2796, 0
        %v2816 = vsel %vm1401, %v2797, 0
        %v2819 = vsel %vm1401, %v2798, 0
        %v2822 = vsel %vm1401, %v2799, 0
        %v2825 = vsel %vm1426, %v2775, 0
        %2827 = vmatpush.bf16.msra.mxu0 0
        %2828 = vmatpush.bf16.msra.mxu0 0
        %2829 = vmatpush.bf16.msra.mxu0 0
        %2830 = vmatpush.bf16.msra.mxu0 0
        %2831 = vmatpush.bf16.msra.mxu0 0
        %2832 = vmatpush.bf16.msra.mxu0 0
        %2833 = vmatpush.bf16.msra.mxu0 0
        %2834 = vmatpush.bf16.msra.mxu0 %v2825
        %2835 = vmatmul.bf16.gmra.mxu0 %v2801
        %v2836 = vpop.f32.mrf.mxu0
        %v2837 = vadd.f32 0.0, %v2836
        %v2838 = vpop.f32.mrf.mxu0
        %v2839 = vadd.f32 0.0, %v2838
        %2840 = vmatmul.bf16.gmra.mxu0 %v2804
        %v2841 = vpop.f32.mrf.mxu0
        %v2842 = vadd.f32 0.0, %v2841
        %v2843 = vpop.f32.mrf.mxu0
        %v2844 = vadd.f32 0.0, %v2843
        %2845 = vmatmul.bf16.gmra.mxu0 %v2807
        %v2846 = vpop.f32.mrf.mxu0
        %v2847 = vadd.f32 0.0, %v2846
        %v2848 = vpop.f32.mrf.mxu0
        %v2849 = vadd.f32 0.0, %v2848
        %2850 = vmatmul.bf16.gmra.mxu0 %v2810
        %v2851 = vpop.f32.mrf.mxu0
        %v2852 = vadd.f32 0.0, %v2851
        %v2853 = vpop.f32.mrf.mxu0
        %v2854 = vadd.f32 0.0, %v2853
        %2855 = vmatmul.bf16.gmra.mxu0 %v2813
        %v2856 = vpop.f32.mrf.mxu0
        %v2857 = vadd.f32 0.0, %v2856
        %v2858 = vpop.f32.mrf.mxu0
        %v2859 = vadd.f32 0.0, %v2858
        %2860 = vmatmul.bf16.gmra.mxu0 %v2816
        %v2861 = vpop.f32.mrf.mxu0
        %v2862 = vadd.f32 0.0, %v2861
        %v2863 = vpop.f32.mrf.mxu0
        %v2864 = vadd.f32 0.0, %v2863
        %2865 = vmatmul.bf16.gmra.mxu0 %v2819
        %v2866 = vpop.f32.mrf.mxu0
        %v2867 = vadd.f32 0.0, %v2866
        %v2868 = vpop.f32.mrf.mxu0
        %v2869 = vadd.f32 0.0, %v2868
        %2870 = vmatmul.bf16.gmra.mxu0 %v2822
        %v2871 = vpop.f32.mrf.mxu0
        %v2872 = vadd.f32 0.0, %v2871
        %v2873 = vpop.f32.mrf.mxu0
        %v2874 = vadd.f32 0.0, %v2873
        %2875 = vdwg.mxu0
        %v2876 = vld [vmem:[#allocation3] sm:$0xff]
        %v2877 = vld [vmem:[#allocation3 + $0x8] sm:$0xff]
        %v2878 = vld [vmem:[#allocation3 + $0x10] sm:$0xff]
        %v2879 = vld [vmem:[#allocation3 + $0x18] sm:$0xff]
        %v2880 = vld [vmem:[#allocation3 + $0x20] sm:$0xff]
        %v2881 = vld [vmem:[#allocation3 + $0x28] sm:$0xff]
        %v2882 = vld [vmem:[#allocation3 + $0x30] sm:$0xff]
        %v2883 = vld [vmem:[#allocation3 + $0x38] sm:$0xff]
        %v2884 = vld [vmem:[#allocation3 + $0x40] sm:$0xff]
        %v2885 = vld [vmem:[#allocation3 + $0x48] sm:$0xff]
        %v2886 = vld [vmem:[#allocation3 + $0x50] sm:$0xff]
        %v2887 = vld [vmem:[#allocation3 + $0x58] sm:$0xff]
        %v2888 = vld [vmem:[#allocation3 + $0x60] sm:$0xff]
        %v2889 = vld [vmem:[#allocation3 + $0x68] sm:$0xff]
        %v2890 = vld [vmem:[#allocation3 + $0x70] sm:$0xff]
        %v2891 = vld [vmem:[#allocation3 + $0x78] sm:$0xff]
        %v2892 = vadd.f32 %v2876, %v2837
        %v2893 = vadd.f32 %v2877, %v2839
        %v2894 = vadd.f32 %v2878, %v2842
        %v2895 = vadd.f32 %v2879, %v2844
        %v2896 = vadd.f32 %v2880, %v2847
        %v2897 = vadd.f32 %v2881, %v2849
        %v2898 = vadd.f32 %v2882, %v2852
        %v2899 = vadd.f32 %v2883, %v2854
        %v2900 = vadd.f32 %v2884, %v2857
        %v2901 = vadd.f32 %v2885, %v2859
        %v2902 = vadd.f32 %v2886, %v2862
        %v2903 = vadd.f32 %v2887, %v2864
        %v2904 = vadd.f32 %v2888, %v2867
        %v2905 = vadd.f32 %v2889, %v2869
        %v2906 = vadd.f32 %v2890, %v2872
        %v2907 = vadd.f32 %v2891, %v2874
        %2908 = vst.msk [vmem:[#allocation3] sm:$0xff] %vm1401, %v2892
        %2909 = vst.msk [vmem:[#allocation3 + $0x8] sm:$0xff] %vm1401, %v2893
        %2910 = vst.msk [vmem:[#allocation3 + $0x10] sm:$0xff] %vm1401, %v2894
        %2911 = vst.msk [vmem:[#allocation3 + $0x18] sm:$0xff] %vm1401, %v2895
        %2912 = vst.msk [vmem:[#allocation3 + $0x20] sm:$0xff] %vm1401, %v2896
        %2913 = vst.msk [vmem:[#allocation3 + $0x28] sm:$0xff] %vm1401, %v2897
        %2914 = vst.msk [vmem:[#allocation3 + $0x30] sm:$0xff] %vm1401, %v2898
        %2915 = vst.msk [vmem:[#allocation3 + $0x38] sm:$0xff] %vm1401, %v2899
        %2916 = vst.msk [vmem:[#allocation3 + $0x40] sm:$0xff] %vm1401, %v2900
        %2917 = vst.msk [vmem:[#allocation3 + $0x48] sm:$0xff] %vm1401, %v2901
        %2918 = vst.msk [vmem:[#allocation3 + $0x50] sm:$0xff] %vm1401, %v2902
        %2919 = vst.msk [vmem:[#allocation3 + $0x58] sm:$0xff] %vm1401, %v2903
        %2920 = vst.msk [vmem:[#allocation3 + $0x60] sm:$0xff] %vm1401, %v2904
        %2921 = vst.msk [vmem:[#allocation3 + $0x68] sm:$0xff] %vm1401, %v2905
        %2922 = vst.msk [vmem:[#allocation3 + $0x70] sm:$0xff] %vm1401, %v2906
        %2923 = vst.msk [vmem:[#allocation3 + $0x78] sm:$0xff] %vm1401, %v2907
        %s2924 = scalar_lea.vmem [#allocation2], 24
        %v2925 = vld [vmem:[%s2924] sm:$0xf]
        %v2926 = vld [vmem:[%s2924 + $0x4] sm:$0xf]
        %v2927 = vld [vmem:[%s2924 + $0xc] sm:$0xf]
        %v2928 = vld [vmem:[%s2924 + $0x10] sm:$0xf]
        %v2929 = vld [vmem:[%s2924 + $0x18] sm:$0xf]
        %v2930 = vld [vmem:[%s2924 + $0x1c] sm:$0xf]
        %v2931 = vld [vmem:[%s2924 + $0x24] sm:$0xf]
        %v2932 = vld [vmem:[%s2924 + $0x28] sm:$0xf]
        %v2933 = vld [vmem:[%s2924 + $0x30] sm:$0xf]
        %v2934 = vld [vmem:[%s2924 + $0x34] sm:$0xf]
        %v2935 = vld [vmem:[%s2924 + $0x3c] sm:$0xf]
        %v2936 = vld [vmem:[%s2924 + $0x40] sm:$0xf]
        %v2937 = vld [vmem:[%s2924 + $0x48] sm:$0xf]
        %v2938 = vld [vmem:[%s2924 + $0x4c] sm:$0xf]
        %v2939 = vld [vmem:[%s2924 + $0x54] sm:$0xf]
        %v2940 = vld [vmem:[%s2924 + $0x58] sm:$0xf]
        %s2941 = scalar_lea.vmem %s2, 12
        %v2942 = vld [vmem:[%s2941] sm:$0x3]
        %v2959 = vunpack.c.l.b16 %v2925
        %v2960 = vunpack.c.l.b16 %v2926
        %v2961 = vunpack.c.l.b16 %v2927
        %v2962 = vunpack.c.l.b16 %v2928
        %v2963 = vunpack.c.l.b16 %v2929
        %v2964 = vunpack.c.l.b16 %v2930
        %v2965 = vunpack.c.l.b16 %v2931
        %v2966 = vunpack.c.l.b16 %v2932
        %v2967 = vunpack.c.l.b16 %v2933
        %v2968 = vunpack.c.l.b16 %v2934
        %v2969 = vunpack.c.l.b16 %v2935
        %v2970 = vunpack.c.l.b16 %v2936
        %v2971 = vunpack.c.l.b16 %v2937
        %v2972 = vunpack.c.l.b16 %v2938
        %v2973 = vunpack.c.l.b16 %v2939
        %v2974 = vunpack.c.l.b16 %v2940
        %v2975 = vpack.c.b16 %v2960, %v2959
        %v2976 = vpack.c.b16 %v2962, %v2961
        %v2977 = vpack.c.b16 %v2964, %v2963
        %v2978 = vpack.c.b16 %v2966, %v2965
        %v2979 = vpack.c.b16 %v2968, %v2967
        %v2980 = vpack.c.b16 %v2970, %v2969
        %v2981 = vpack.c.b16 %v2972, %v2971
        %v2982 = vpack.c.b16 %v2974, %v2973
        %v2984 = vsel %vm1401, %v2975, 0
        %v2987 = vsel %vm1401, %v2976, 0
        %v2990 = vsel %vm1401, %v2977, 0
        %v2993 = vsel %vm1401, %v2978, 0
        %v2996 = vsel %vm1401, %v2979, 0
        %v2999 = vsel %vm1401, %v2980, 0
        %v3002 = vsel %vm1401, %v2981, 0
        %v3005 = vsel %vm1401, %v2982, 0
        %v3008 = vsel %vm1426, %v2942, 0
        %3010 = vmatpush.bf16.msra.mxu0 0
        %3011 = vmatpush.bf16.msra.mxu0 0
        %3012 = vmatpush.bf16.msra.mxu0 0
        %3013 = vmatpush.bf16.msra.mxu0 0
        %3014 = vmatpush.bf16.msra.mxu0 0
        %3015 = vmatpush.bf16.msra.mxu0 0
        %3016 = vmatpush.bf16.msra.mxu0 0
        %3017 = vmatpush.bf16.msra.mxu0 %v3008
        %3018 = vmatmul.bf16.gmra.mxu0 %v2984
        %v3019 = vpop.f32.mrf.mxu0
        %v3020 = vadd.f32 0.0, %v3019
        %v3021 = vpop.f32.mrf.mxu0
        %v3022 = vadd.f32 0.0, %v3021
        %3023 = vmatmul.bf16.gmra.mxu0 %v2987
        %v3024 = vpop.f32.mrf.mxu0
        %v3025 = vadd.f32 0.0, %v3024
        %v3026 = vpop.f32.mrf.mxu0
        %v3027 = vadd.f32 0.0, %v3026
        %3028 = vmatmul.bf16.gmra.mxu0 %v2990
        %v3029 = vpop.f32.mrf.mxu0
        %v3030 = vadd.f32 0.0, %v3029
        %v3031 = vpop.f32.mrf.mxu0
        %v3032 = vadd.f32 0.0, %v3031
        %3033 = vmatmul.bf16.gmra.mxu0 %v2993
        %v3034 = vpop.f32.mrf.mxu0
        %v3035 = vadd.f32 0.0, %v3034
        %v3036 = vpop.f32.mrf.mxu0
        %v3037 = vadd.f32 0.0, %v3036
        %3038 = vmatmul.bf16.gmra.mxu0 %v2996
        %v3039 = vpop.f32.mrf.mxu0
        %v3040 = vadd.f32 0.0, %v3039
        %v3041 = vpop.f32.mrf.mxu0
        %v3042 = vadd.f32 0.0, %v3041
        %3043 = vmatmul.bf16.gmra.mxu0 %v2999
        %v3044 = vpop.f32.mrf.mxu0
        %v3045 = vadd.f32 0.0, %v3044
        %v3046 = vpop.f32.mrf.mxu0
        %v3047 = vadd.f32 0.0, %v3046
        %3048 = vmatmul.bf16.gmra.mxu0 %v3002
        %v3049 = vpop.f32.mrf.mxu0
        %v3050 = vadd.f32 0.0, %v3049
        %v3051 = vpop.f32.mrf.mxu0
        %v3052 = vadd.f32 0.0, %v3051
        %3053 = vmatmul.bf16.gmra.mxu0 %v3005
        %v3054 = vpop.f32.mrf.mxu0
        %v3055 = vadd.f32 0.0, %v3054
        %v3056 = vpop.f32.mrf.mxu0
        %v3057 = vadd.f32 0.0, %v3056
        %3058 = vdwg.mxu0
        %v3059 = vld [vmem:[#allocation3] sm:$0xff]
        %v3060 = vld [vmem:[#allocation3 + $0x8] sm:$0xff]
        %v3061 = vld [vmem:[#allocation3 + $0x10] sm:$0xff]
        %v3062 = vld [vmem:[#allocation3 + $0x18] sm:$0xff]
        %v3063 = vld [vmem:[#allocation3 + $0x20] sm:$0xff]
        %v3064 = vld [vmem:[#allocation3 + $0x28] sm:$0xff]
        %v3065 = vld [vmem:[#allocation3 + $0x30] sm:$0xff]
        %v3066 = vld [vmem:[#allocation3 + $0x38] sm:$0xff]
        %v3067 = vld [vmem:[#allocation3 + $0x40] sm:$0xff]
        %v3068 = vld [vmem:[#allocation3 + $0x48] sm:$0xff]
        %v3069 = vld [vmem:[#allocation3 + $0x50] sm:$0xff]
        %v3070 = vld [vmem:[#allocation3 + $0x58] sm:$0xff]
        %v3071 = vld [vmem:[#allocation3 + $0x60] sm:$0xff]
        %v3072 = vld [vmem:[#allocation3 + $0x68] sm:$0xff]
        %v3073 = vld [vmem:[#allocation3 + $0x70] sm:$0xff]
        %v3074 = vld [vmem:[#allocation3 + $0x78] sm:$0xff]
        %v3075 = vadd.f32 %v3059, %v3020
        %v3076 = vadd.f32 %v3060, %v3022
        %v3077 = vadd.f32 %v3061, %v3025
        %v3078 = vadd.f32 %v3062, %v3027
        %v3079 = vadd.f32 %v3063, %v3030
        %v3080 = vadd.f32 %v3064, %v3032
        %v3081 = vadd.f32 %v3065, %v3035
        %v3082 = vadd.f32 %v3066, %v3037
        %v3083 = vadd.f32 %v3067, %v3040
        %v3084 = vadd.f32 %v3068, %v3042
        %v3085 = vadd.f32 %v3069, %v3045
        %v3086 = vadd.f32 %v3070, %v3047
        %v3087 = vadd.f32 %v3071, %v3050
        %v3088 = vadd.f32 %v3072, %v3052
        %v3089 = vadd.f32 %v3073, %v3055
        %v3090 = vadd.f32 %v3074, %v3057
        %3091 = vst.msk [vmem:[#allocation3] sm:$0xff] %vm1401, %v3075
        %3092 = vst.msk [vmem:[#allocation3 + $0x8] sm:$0xff] %vm1401, %v3076
        %3093 = vst.msk [vmem:[#allocation3 + $0x10] sm:$0xff] %vm1401, %v3077
        %3094 = vst.msk [vmem:[#allocation3 + $0x18] sm:$0xff] %vm1401, %v3078
        %3095 = vst.msk [vmem:[#allocation3 + $0x20] sm:$0xff] %vm1401, %v3079
        %3096 = vst.msk [vmem:[#allocation3 + $0x28] sm:$0xff] %vm1401, %v3080
        %3097 = vst.msk [vmem:[#allocation3 + $0x30] sm:$0xff] %vm1401, %v3081
        %3098 = vst.msk [vmem:[#allocation3 + $0x38] sm:$0xff] %vm1401, %v3082
        %3099 = vst.msk [vmem:[#allocation3 + $0x40] sm:$0xff] %vm1401, %v3083
        %3100 = vst.msk [vmem:[#allocation3 + $0x48] sm:$0xff] %vm1401, %v3084
        %3101 = vst.msk [vmem:[#allocation3 + $0x50] sm:$0xff] %vm1401, %v3085
        %3102 = vst.msk [vmem:[#allocation3 + $0x58] sm:$0xff] %vm1401, %v3086
        %3103 = vst.msk [vmem:[#allocation3 + $0x60] sm:$0xff] %vm1401, %v3087
        %3104 = vst.msk [vmem:[#allocation3 + $0x68] sm:$0xff] %vm1401, %v3088
        %3105 = vst.msk [vmem:[#allocation3 + $0x70] sm:$0xff] %vm1401, %v3089
        %3106 = vst.msk [vmem:[#allocation3 + $0x78] sm:$0xff] %vm1401, %v3090
        %v3107 = vld [vmem:[%s2924] sm:$0xf]
        %v3108 = vld [vmem:[%s2924 + $0x4] sm:$0xf]
        %v3109 = vld [vmem:[%s2924 + $0x8] sm:$0x1]
        %v3110 = vld [vmem:[%s2924 + $0xc] sm:$0xf]
        %v3111 = vld [vmem:[%s2924 + $0x10] sm:$0xf]
        %v3112 = vld [vmem:[%s2924 + $0x14] sm:$0x1]
        %v3113 = vld [vmem:[%s2924 + $0x18] sm:$0xf]
        %v3114 = vld [vmem:[%s2924 + $0x1c] sm:$0xf]
        %v3115 = vld [vmem:[%s2924 + $0x20] sm:$0x1]
        %v3116 = vld [vmem:[%s2924 + $0x24] sm:$0xf]
        %v3117 = vld [vmem:[%s2924 + $0x28] sm:$0xf]
        %v3118 = vld [vmem:[%s2924 + $0x2c] sm:$0x1]
        %v3119 = vld [vmem:[%s2924 + $0x30] sm:$0xf]
        %v3120 = vld [vmem:[%s2924 + $0x34] sm:$0xf]
        %v3121 = vld [vmem:[%s2924 + $0x38] sm:$0x1]
        %v3122 = vld [vmem:[%s2924 + $0x3c] sm:$0xf]
        %v3123 = vld [vmem:[%s2924 + $0x40] sm:$0xf]
        %v3124 = vld [vmem:[%s2924 + $0x44] sm:$0x1]
        %v3125 = vld [vmem:[%s2924 + $0x48] sm:$0xf]
        %v3126 = vld [vmem:[%s2924 + $0x4c] sm:$0xf]
        %v3127 = vld [vmem:[%s2924 + $0x50] sm:$0x1]
        %v3128 = vld [vmem:[%s2924 + $0x54] sm:$0xf]
        %v3129 = vld [vmem:[%s2924 + $0x58] sm:$0xf]
        %v3130 = vld [vmem:[%s2924 + $0x5c] sm:$0x1]
        %v3132 = vshrl.u32 %v3107, 16
        %v3134 = vrot.slane %v3132, 4
        %v3135 = vshll.u32 %v3107, 16
        %v3137 = vrot.slane %v3135, 5
        %v3138 = vor.u32 %v3134, %v3137
        %v3139 = vrot.slane %v3138, 4
        %v3141 = vshll.u32 %v3108, 16
        %v3143 = vrot.slane %v3141, 5
        %v3144 = vsel %vm1521, %v3139, %v3143
        %v3145 = vshrl.u32 %v3108, 16
        %v3147 = vrot.slane %v3145, 4
        %v3148 = vor.u32 %v3147, %v3143
        %v3149 = vrot.slane %v3148, 4
        %v3151 = vshll.u32 %v3109, 16
        %v3153 = vrot.slane %v3151, 5
        %v3154 = vsel %vm1521, %v3149, %v3153
        %v3156 = vshrl.u32 %v3110, 16
        %v3158 = vrot.slane %v3156, 4
        %v3159 = vshll.u32 %v3110, 16
        %v3161 = vrot.slane %v3159, 5
        %v3162 = vor.u32 %v3158, %v3161
        %v3163 = vrot.slane %v3162, 4
        %v3165 = vshll.u32 %v3111, 16
        %v3167 = vrot.slane %v3165, 5
        %v3168 = vsel %vm1521, %v3163, %v3167
        %v3169 = vshrl.u32 %v3111, 16
        %v3171 = vrot.slane %v3169, 4
        %v3172 = vor.u32 %v3171, %v3167
        %v3173 = vrot.slane %v3172, 4
        %v3175 = vshll.u32 %v3112, 16
        %v3177 = vrot.slane %v3175, 5
        %v3178 = vsel %vm1521, %v3173, %v3177
        %v3180 = vshrl.u32 %v3113, 16
        %v3182 = vrot.slane %v3180, 4
        %v3183 = vshll.u32 %v3113, 16
        %v3185 = vrot.slane %v3183, 5
        %v3186 = vor.u32 %v3182, %v3185
        %v3187 = vrot.slane %v3186, 4
        %v3189 = vshll.u32 %v3114, 16
        %v3191 = vrot.slane %v3189, 5
        %v3192 = vsel %vm1521, %v3187, %v3191
        %v3193 = vshrl.u32 %v3114, 16
        %v3195 = vrot.slane %v3193, 4
        %v3196 = vor.u32 %v3195, %v3191
        %v3197 = vrot.slane %v3196, 4
        %v3199 = vshll.u32 %v3115, 16
        %v3201 = vrot.slane %v3199, 5
        %v3202 = vsel %vm1521, %v3197, %v3201
        %v3204 = vshrl.u32 %v3116, 16
        %v3206 = vrot.slane %v3204, 4
        %v3207 = vshll.u32 %v3116, 16
        %v3209 = vrot.slane %v3207, 5
        %v3210 = vor.u32 %v3206, %v3209
        %v3211 = vrot.slane %v3210, 4
        %v3213 = vshll.u32 %v3117, 16
        %v3215 = vrot.slane %v3213, 5
        %v3216 = vsel %vm1521, %v3211, %v3215
        %v3217 = vshrl.u32 %v3117, 16
        %v3219 = vrot.slane %v3217, 4
        %v3220 = vor.u32 %v3219, %v3215
        %v3221 = vrot.slane %v3220, 4
        %v3223 = vshll.u32 %v3118, 16
        %v3225 = vrot.slane %v3223, 5
        %v3226 = vsel %vm1521, %v3221, %v3225
        %v3228 = vshrl.u32 %v3119, 16
        %v3230 = vrot.slane %v3228, 4
        %v3231 = vshll.u32 %v3119, 16
        %v3233 = vrot.slane %v3231, 5
        %v3234 = vor.u32 %v3230, %v3233
        %v3235 = vrot.slane %v3234, 4
        %v3237 = vshll.u32 %v3120, 16
        %v3239 = vrot.slane %v3237, 5
        %v3240 = vsel %vm1521, %v3235, %v3239
        %v3241 = vshrl.u32 %v3120, 16
        %v3243 = vrot.slane %v3241, 4
        %v3244 = vor.u32 %v3243, %v3239
        %v3245 = vrot.slane %v3244, 4
        %v3247 = vshll.u32 %v3121, 16
        %v3249 = vrot.slane %v3247, 5
        %v3250 = vsel %vm1521, %v3245, %v3249
        %v3252 = vshrl.u32 %v3122, 16
        %v3254 = vrot.slane %v3252, 4
        %v3255 = vshll.u32 %v3122, 16
        %v3257 = vrot.slane %v3255, 5
        %v3258 = vor.u32 %v3254, %v3257
        %v3259 = vrot.slane %v3258, 4
        %v3261 = vshll.u32 %v3123, 16
        %v3263 = vrot.slane %v3261, 5
        %v3264 = vsel %vm1521, %v3259, %v3263
        %v3265 = vshrl.u32 %v3123, 16
        %v3267 = vrot.slane %v3265, 4
        %v3268 = vor.u32 %v3267, %v3263
        %v3269 = vrot.slane %v3268, 4
        %v3271 = vshll.u32 %v3124, 16
        %v3273 = vrot.slane %v3271, 5
        %v3274 = vsel %vm1521, %v3269, %v3273
        %v3276 = vshrl.u32 %v3125, 16
        %v3278 = vrot.slane %v3276, 4
        %v3279 = vshll.u32 %v3125, 16
        %v3281 = vrot.slane %v3279, 5
        %v3282 = vor.u32 %v3278, %v3281
        %v3283 = vrot.slane %v3282, 4
        %v3285 = vshll.u32 %v3126, 16
        %v3287 = vrot.slane %v3285, 5
        %v3288 = vsel %vm1521, %v3283, %v3287
        %v3289 = vshrl.u32 %v3126, 16
        %v3291 = vrot.slane %v3289, 4
        %v3292 = vor.u32 %v3291, %v3287
        %v3293 = vrot.slane %v3292, 4
        %v3295 = vshll.u32 %v3127, 16
        %v3297 = vrot.slane %v3295, 5
        %v3298 = vsel %vm1521, %v3293, %v3297
        %v3300 = vshrl.u32 %v3128, 16
        %v3302 = vrot.slane %v3300, 4
        %v3303 = vshll.u32 %v3128, 16
        %v3305 = vrot.slane %v3303, 5
        %v3306 = vor.u32 %v3302, %v3305
        %v3307 = vrot.slane %v3306, 4
        %v3309 = vshll.u32 %v3129, 16
        %v3311 = vrot.slane %v3309, 5
        %v3312 = vsel %vm1521, %v3307, %v3311
        %v3313 = vshrl.u32 %v3129, 16
        %v3315 = vrot.slane %v3313, 4
        %v3316 = vor.u32 %v3315, %v3311
        %v3317 = vrot.slane %v3316, 4
        %v3319 = vshll.u32 %v3130, 16
        %v3321 = vrot.slane %v3319, 5
        %v3322 = vsel %vm1521, %v3317, %v3321
        %s3323 = scalar_lea.vmem %s2, 14
        %v3324 = vld [vmem:[%s3323] sm:$0x3]
        %v3325 = vunpack.c.l.b16 %v3144
        %v3326 = vunpack.c.l.b16 %v3154
        %v3327 = vunpack.c.l.b16 %v3168
        %v3328 = vunpack.c.l.b16 %v3178
        %v3329 = vunpack.c.l.b16 %v3192
        %v3330 = vunpack.c.l.b16 %v3202
        %v3331 = vunpack.c.l.b16 %v3216
        %v3332 = vunpack.c.l.b16 %v3226
        %v3333 = vunpack.c.l.b16 %v3240
        %v3334 = vunpack.c.l.b16 %v3250
        %v3335 = vunpack.c.l.b16 %v3264
        %v3336 = vunpack.c.l.b16 %v3274
        %v3337 = vunpack.c.l.b16 %v3288
        %v3338 = vunpack.c.l.b16 %v3298
        %v3339 = vunpack.c.l.b16 %v3312
        %v3340 = vunpack.c.l.b16 %v3322
        %v3341 = vpack.c.b16 %v3326, %v3325
        %v3342 = vpack.c.b16 %v3328, %v3327
        %v3343 = vpack.c.b16 %v3330, %v3329
        %v3344 = vpack.c.b16 %v3332, %v3331
        %v3345 = vpack.c.b16 %v3334, %v3333
        %v3346 = vpack.c.b16 %v3336, %v3335
        %v3347 = vpack.c.b16 %v3338, %v3337
        %v3348 = vpack.c.b16 %v3340, %v3339
        %v3350 = vsel %vm1401, %v3341, 0
        %v3353 = vsel %vm1401, %v3342, 0
        %v3356 = vsel %vm1401, %v3343, 0
        %v3359 = vsel %vm1401, %v3344, 0
        %v3362 = vsel %vm1401, %v3345, 0
        %v3365 = vsel %vm1401, %v3346, 0
        %v3368 = vsel %vm1401, %v3347, 0
        %v3371 = vsel %vm1401, %v3348, 0
        %v3374 = vsel %vm1426, %v3324, 0
        %3376 = vmatpush.bf16.msra.mxu0 0
        %3377 = vmatpush.bf16.msra.mxu0 0
        %3378 = vmatpush.bf16.msra.mxu0 0
        %3379 = vmatpush.bf16.msra.mxu0 0
        %3380 = vmatpush.bf16.msra.mxu0 0
        %3381 = vmatpush.bf16.msra.mxu0 0
        %3382 = vmatpush.bf16.msra.mxu0 0
        %3383 = vmatpush.bf16.msra.mxu0 %v3374
        %3384 = vmatmul.bf16.gmra.mxu0 %v3350
        %v3385 = vpop.f32.mrf.mxu0
        %v3386 = vadd.f32 0.0, %v3385
        %v3387 = vpop.f32.mrf.mxu0
        %v3388 = vadd.f32 0.0, %v3387
        %3389 = vmatmul.bf16.gmra.mxu0 %v3353
        %v3390 = vpop.f32.mrf.mxu0
        %v3391 = vadd.f32 0.0, %v3390
        %v3392 = vpop.f32.mrf.mxu0
        %v3393 = vadd.f32 0.0, %v3392
        %3394 = vmatmul.bf16.gmra.mxu0 %v3356
        %v3395 = vpop.f32.mrf.mxu0
        %v3396 = vadd.f32 0.0, %v3395
        %v3397 = vpop.f32.mrf.mxu0
        %v3398 = vadd.f32 0.0, %v3397
        %3399 = vmatmul.bf16.gmra.mxu0 %v3359
        %v3400 = vpop.f32.mrf.mxu0
        %v3401 = vadd.f32 0.0, %v3400
        %v3402 = vpop.f32.mrf.mxu0
        %v3403 = vadd.f32 0.0, %v3402
        %3404 = vmatmul.bf16.gmra.mxu0 %v3362
        %v3405 = vpop.f32.mrf.mxu0
        %v3406 = vadd.f32 0.0, %v3405
        %v3407 = vpop.f32.mrf.mxu0
        %v3408 = vadd.f32 0.0, %v3407
        %3409 = vmatmul.bf16.gmra.mxu0 %v3365
        %v3410 = vpop.f32.mrf.mxu0
        %v3411 = vadd.f32 0.0, %v3410
        %v3412 = vpop.f32.mrf.mxu0
        %v3413 = vadd.f32 0.0, %v3412
        %3414 = vmatmul.bf16.gmra.mxu0 %v3368
        %v3415 = vpop.f32.mrf.mxu0
        %v3416 = vadd.f32 0.0, %v3415
        %v3417 = vpop.f32.mrf.mxu0
        %v3418 = vadd.f32 0.0, %v3417
        %3419 = vmatmul.bf16.gmra.mxu0 %v3371
        %v3420 = vpop.f32.mrf.mxu0
        %v3421 = vadd.f32 0.0, %v3420
        %v3422 = vpop.f32.mrf.mxu0
        %v3423 = vadd.f32 0.0, %v3422
        %3424 = vdwg.mxu0
        %v3425 = vld [vmem:[#allocation3] sm:$0xff]
        %v3426 = vld [vmem:[#allocation3 + $0x8] sm:$0xff]
        %v3427 = vld [vmem:[#allocation3 + $0x10] sm:$0xff]
        %v3428 = vld [vmem:[#allocation3 + $0x18] sm:$0xff]
        %v3429 = vld [vmem:[#allocation3 + $0x20] sm:$0xff]
        %v3430 = vld [vmem:[#allocation3 + $0x28] sm:$0xff]
        %v3431 = vld [vmem:[#allocation3 + $0x30] sm:$0xff]
        %v3432 = vld [vmem:[#allocation3 + $0x38] sm:$0xff]
        %v3433 = vld [vmem:[#allocation3 + $0x40] sm:$0xff]
        %v3434 = vld [vmem:[#allocation3 + $0x48] sm:$0xff]
        %v3435 = vld [vmem:[#allocation3 + $0x50] sm:$0xff]
        %v3436 = vld [vmem:[#allocation3 + $0x58] sm:$0xff]
        %v3437 = vld [vmem:[#allocation3 + $0x60] sm:$0xff]
        %v3438 = vld [vmem:[#allocation3 + $0x68] sm:$0xff]
        %v3439 = vld [vmem:[#allocation3 + $0x70] sm:$0xff]
        %v3440 = vld [vmem:[#allocation3 + $0x78] sm:$0xff]
        %v3441 = vadd.f32 %v3425, %v3386
        %v3442 = vadd.f32 %v3426, %v3388
        %v3443 = vadd.f32 %v3427, %v3391
        %v3444 = vadd.f32 %v3428, %v3393
        %v3445 = vadd.f32 %v3429, %v3396
        %v3446 = vadd.f32 %v3430, %v3398
        %v3447 = vadd.f32 %v3431, %v3401
        %v3448 = vadd.f32 %v3432, %v3403
        %v3449 = vadd.f32 %v3433, %v3406
        %v3450 = vadd.f32 %v3434, %v3408
        %v3451 = vadd.f32 %v3435, %v3411
        %v3452 = vadd.f32 %v3436, %v3413
        %v3453 = vadd.f32 %v3437, %v3416
        %v3454 = vadd.f32 %v3438, %v3418
        %v3455 = vadd.f32 %v3439, %v3421
        %v3456 = vadd.f32 %v3440, %v3423
        %3457 = vst.msk [vmem:[#allocation3] sm:$0xff] %vm1401, %v3441
        %3458 = vst.msk [vmem:[#allocation3 + $0x8] sm:$0xff] %vm1401, %v3442
        %3459 = vst.msk [vmem:[#allocation3 + $0x10] sm:$0xff] %vm1401, %v3443
        %3460 = vst.msk [vmem:[#allocation3 + $0x18] sm:$0xff] %vm1401, %v3444
        %3461 = vst.msk [vmem:[#allocation3 + $0x20] sm:$0xff] %vm1401, %v3445
        %3462 = vst.msk [vmem:[#allocation3 + $0x28] sm:$0xff] %vm1401, %v3446
        %3463 = vst.msk [vmem:[#allocation3 + $0x30] sm:$0xff] %vm1401, %v3447
        %3464 = vst.msk [vmem:[#allocation3 + $0x38] sm:$0xff] %vm1401, %v3448
        %3465 = vst.msk [vmem:[#allocation3 + $0x40] sm:$0xff] %vm1401, %v3449
        %3466 = vst.msk [vmem:[#allocation3 + $0x48] sm:$0xff] %vm1401, %v3450
        %3467 = vst.msk [vmem:[#allocation3 + $0x50] sm:$0xff] %vm1401, %v3451
        %3468 = vst.msk [vmem:[#allocation3 + $0x58] sm:$0xff] %vm1401, %v3452
        %3469 = vst.msk [vmem:[#allocation3 + $0x60] sm:$0xff] %vm1401, %v3453
        %3470 = vst.msk [vmem:[#allocation3 + $0x68] sm:$0xff] %vm1401, %v3454
        %3471 = vst.msk [vmem:[#allocation3 + $0x70] sm:$0xff] %vm1401, %v3455
        %3472 = vst.msk [vmem:[#allocation3 + $0x78] sm:$0xff] %vm1401, %v3456
        %v3473 = vld [vmem:[%s2924] sm:$0xe]
        %v3474 = vld [vmem:[%s2924 + $0x4] sm:$0xf]
        %v3475 = vld [vmem:[%s2924 + $0x8] sm:$0x1]
        %v3476 = vld [vmem:[%s2924 + $0xc] sm:$0xe]
        %v3477 = vld [vmem:[%s2924 + $0x10] sm:$0xf]
        %v3478 = vld [vmem:[%s2924 + $0x14] sm:$0x1]
        %v3479 = vld [vmem:[%s2924 + $0x18] sm:$0xe]
        %v3480 = vld [vmem:[%s2924 + $0x1c] sm:$0xf]
        %v3481 = vld [vmem:[%s2924 + $0x20] sm:$0x1]
        %v3482 = vld [vmem:[%s2924 + $0x24] sm:$0xe]
        %v3483 = vld [vmem:[%s2924 + $0x28] sm:$0xf]
        %v3484 = vld [vmem:[%s2924 + $0x2c] sm:$0x1]
        %v3485 = vld [vmem:[%s2924 + $0x30] sm:$0xe]
        %v3486 = vld [vmem:[%s2924 + $0x34] sm:$0xf]
        %v3487 = vld [vmem:[%s2924 + $0x38] sm:$0x1]
        %v3488 = vld [vmem:[%s2924 + $0x3c] sm:$0xe]
        %v3489 = vld [vmem:[%s2924 + $0x40] sm:$0xf]
        %v3490 = vld [vmem:[%s2924 + $0x44] sm:$0x1]
        %v3491 = vld [vmem:[%s2924 + $0x48] sm:$0xe]
        %v3492 = vld [vmem:[%s2924 + $0x4c] sm:$0xf]
        %v3493 = vld [vmem:[%s2924 + $0x50] sm:$0x1]
        %v3494 = vld [vmem:[%s2924 + $0x54] sm:$0xe]
        %v3495 = vld [vmem:[%s2924 + $0x58] sm:$0xf]
        %v3496 = vld [vmem:[%s2924 + $0x5c] sm:$0x1]
        %v3521 = vrot.slane %v3473, 5
        %v3522 = vrot.slane %v3521, 4
        %v3523 = vrot.slane %v3474, 5
        %v3524 = vsel %vm1914, %v3522, %v3523
        %v3525 = vrot.slane %v3523, 4
        %v3526 = vrot.slane %v3475, 5
        %v3527 = vsel %vm1914, %v3525, %v3526
        %v3528 = vrot.slane %v3476, 5
        %v3529 = vrot.slane %v3528, 4
        %v3530 = vrot.slane %v3477, 5
        %v3531 = vsel %vm1914, %v3529, %v3530
        %v3532 = vrot.slane %v3530, 4
        %v3533 = vrot.slane %v3478, 5
        %v3534 = vsel %vm1914, %v3532, %v3533
        %v3535 = vrot.slane %v3479, 5
        %v3536 = vrot.slane %v3535, 4
        %v3537 = vrot.slane %v3480, 5
        %v3538 = vsel %vm1914, %v3536, %v3537
        %v3539 = vrot.slane %v3537, 4
        %v3540 = vrot.slane %v3481, 5
        %v3541 = vsel %vm1914, %v3539, %v3540
        %v3542 = vrot.slane %v3482, 5
        %v3543 = vrot.slane %v3542, 4
        %v3544 = vrot.slane %v3483, 5
        %v3545 = vsel %vm1914, %v3543, %v3544
        %v3546 = vrot.slane %v3544, 4
        %v3547 = vrot.slane %v3484, 5
        %v3548 = vsel %vm1914, %v3546, %v3547
        %v3549 = vrot.slane %v3485, 5
        %v3550 = vrot.slane %v3549, 4
        %v3551 = vrot.slane %v3486, 5
        %v3552 = vsel %vm1914, %v3550, %v3551
        %v3553 = vrot.slane %v3551, 4
        %v3554 = vrot.slane %v3487, 5
        %v3555 = vsel %vm1914, %v3553, %v3554
        %v3556 = vrot.slane %v3488, 5
        %v3557 = vrot.slane %v3556, 4
        %v3558 = vrot.slane %v3489, 5
        %v3559 = vsel %vm1914, %v3557, %v3558
        %v3560 = vrot.slane %v3558, 4
        %v3561 = vrot.slane %v3490, 5
        %v3562 = vsel %vm1914, %v3560, %v3561
        %v3563 = vrot.slane %v3491, 5
        %v3564 = vrot.slane %v3563, 4
        %v3565 = vrot.slane %v3492, 5
        %v3566 = vsel %vm1914, %v3564, %v3565
        %v3567 = vrot.slane %v3565, 4
        %v3568 = vrot.slane %v3493, 5
        %v3569 = vsel %vm1914, %v3567, %v3568
        %v3570 = vrot.slane %v3494, 5
        %v3571 = vrot.slane %v3570, 4
        %v3572 = vrot.slane %v3495, 5
        %v3573 = vsel %vm1914, %v3571, %v3572
        %v3574 = vrot.slane %v3572, 4
        %v3575 = vrot.slane %v3496, 5
        %v3576 = vsel %vm1914, %v3574, %v3575
        %s3577 = scalar_lea.vmem %s2, 16
        %v3578 = vld [vmem:[%s3577] sm:$0x3]
        %v3579 = vunpack.c.l.b16 %v3524
        %v3580 = vunpack.c.l.b16 %v3527
        %v3581 = vunpack.c.l.b16 %v3531
        %v3582 = vunpack.c.l.b16 %v3534
        %v3583 = vunpack.c.l.b16 %v3538
        %v3584 = vunpack.c.l.b16 %v3541
        %v3585 = vunpack.c.l.b16 %v3545
        %v3586 = vunpack.c.l.b16 %v3548
        %v3587 = vunpack.c.l.b16 %v3552
        %v3588 = vunpack.c.l.b16 %v3555
        %v3589 = vunpack.c.l.b16 %v3559
        %v3590 = vunpack.c.l.b16 %v3562
        %v3591 = vunpack.c.l.b16 %v3566
        %v3592 = vunpack.c.l.b16 %v3569
        %v3593 = vunpack.c.l.b16 %v3573
        %v3594 = vunpack.c.l.b16 %v3576
        %v3595 = vpack.c.b16 %v3580, %v3579
        %v3596 = vpack.c.b16 %v3582, %v3581
        %v3597 = vpack.c.b16 %v3584, %v3583
        %v3598 = vpack.c.b16 %v3586, %v3585
        %v3599 = vpack.c.b16 %v3588, %v3587
        %v3600 = vpack.c.b16 %v3590, %v3589
        %v3601 = vpack.c.b16 %v3592, %v3591
        %v3602 = vpack.c.b16 %v3594, %v3593
        %v3604 = vsel %vm1401, %v3595, 0
        %v3607 = vsel %vm1401, %v3596, 0
        %v3610 = vsel %vm1401, %v3597, 0
        %v3613 = vsel %vm1401, %v3598, 0
        %v3616 = vsel %vm1401, %v3599, 0
        %v3619 = vsel %vm1401, %v3600, 0
        %v3622 = vsel %vm1401, %v3601, 0
        %v3625 = vsel %vm1401, %v3602, 0
        %v3628 = vsel %vm1426, %v3578, 0
        %3630 = vmatpush.bf16.msra.mxu0 0
        %3631 = vmatpush.bf16.msra.mxu0 0
        %3632 = vmatpush.bf16.msra.mxu0 0
        %3633 = vmatpush.bf16.msra.mxu0 0
        %3634 = vmatpush.bf16.msra.mxu0 0
        %3635 = vmatpush.bf16.msra.mxu0 0
        %3636 = vmatpush.bf16.msra.mxu0 0
        %3637 = vmatpush.bf16.msra.mxu0 %v3628
        %3638 = vmatmul.bf16.gmra.mxu0 %v3604
        %v3639 = vpop.f32.mrf.mxu0
        %v3640 = vadd.f32 0.0, %v3639
        %v3641 = vpop.f32.mrf.mxu0
        %v3642 = vadd.f32 0.0, %v3641
        %3643 = vmatmul.bf16.gmra.mxu0 %v3607
        %v3644 = vpop.f32.mrf.mxu0
        %v3645 = vadd.f32 0.0, %v3644
        %v3646 = vpop.f32.mrf.mxu0
        %v3647 = vadd.f32 0.0, %v3646
        %3648 = vmatmul.bf16.gmra.mxu0 %v3610
        %v3649 = vpop.f32.mrf.mxu0
        %v3650 = vadd.f32 0.0, %v3649
        %v3651 = vpop.f32.mrf.mxu0
        %v3652 = vadd.f32 0.0, %v3651
        %3653 = vmatmul.bf16.gmra.mxu0 %v3613
        %v3654 = vpop.f32.mrf.mxu0
        %v3655 = vadd.f32 0.0, %v3654
        %v3656 = vpop.f32.mrf.mxu0
        %v3657 = vadd.f32 0.0, %v3656
        %3658 = vmatmul.bf16.gmra.mxu0 %v3616
        %v3659 = vpop.f32.mrf.mxu0
        %v3660 = vadd.f32 0.0, %v3659
        %v3661 = vpop.f32.mrf.mxu0
        %v3662 = vadd.f32 0.0, %v3661
        %3663 = vmatmul.bf16.gmra.mxu0 %v3619
        %v3664 = vpop.f32.mrf.mxu0
        %v3665 = vadd.f32 0.0, %v3664
        %v3666 = vpop.f32.mrf.mxu0
        %v3667 = vadd.f32 0.0, %v3666
        %3668 = vmatmul.bf16.gmra.mxu0 %v3622
        %v3669 = vpop.f32.mrf.mxu0
        %v3670 = vadd.f32 0.0, %v3669
        %v3671 = vpop.f32.mrf.mxu0
        %v3672 = vadd.f32 0.0, %v3671
        %3673 = vmatmul.bf16.gmra.mxu0 %v3625
        %v3674 = vpop.f32.mrf.mxu0
        %v3675 = vadd.f32 0.0, %v3674
        %v3676 = vpop.f32.mrf.mxu0
        %v3677 = vadd.f32 0.0, %v3676
        %3678 = vdwg.mxu0
        %v3679 = vld [vmem:[#allocation3] sm:$0xff]
        %v3680 = vld [vmem:[#allocation3 + $0x8] sm:$0xff]
        %v3681 = vld [vmem:[#allocation3 + $0x10] sm:$0xff]
        %v3682 = vld [vmem:[#allocation3 + $0x18] sm:$0xff]
        %v3683 = vld [vmem:[#allocation3 + $0x20] sm:$0xff]
        %v3684 = vld [vmem:[#allocation3 + $0x28] sm:$0xff]
        %v3685 = vld [vmem:[#allocation3 + $0x30] sm:$0xff]
        %v3686 = vld [vmem:[#allocation3 + $0x38] sm:$0xff]
        %v3687 = vld [vmem:[#allocation3 + $0x40] sm:$0xff]
        %v3688 = vld [vmem:[#allocation3 + $0x48] sm:$0xff]
        %v3689 = vld [vmem:[#allocation3 + $0x50] sm:$0xff]
        %v3690 = vld [vmem:[#allocation3 + $0x58] sm:$0xff]
        %v3691 = vld [vmem:[#allocation3 + $0x60] sm:$0xff]
        %v3692 = vld [vmem:[#allocation3 + $0x68] sm:$0xff]
        %v3693 = vld [vmem:[#allocation3 + $0x70] sm:$0xff]
        %v3694 = vld [vmem:[#allocation3 + $0x78] sm:$0xff]
        %v3695 = vadd.f32 %v3679, %v3640
        %v3696 = vadd.f32 %v3680, %v3642
        %v3697 = vadd.f32 %v3681, %v3645
        %v3698 = vadd.f32 %v3682, %v3647
        %v3699 = vadd.f32 %v3683, %v3650
        %v3700 = vadd.f32 %v3684, %v3652
        %v3701 = vadd.f32 %v3685, %v3655
        %v3702 = vadd.f32 %v3686, %v3657
        %v3703 = vadd.f32 %v3687, %v3660
        %v3704 = vadd.f32 %v3688, %v3662
        %v3705 = vadd.f32 %v3689, %v3665
        %v3706 = vadd.f32 %v3690, %v3667
        %v3707 = vadd.f32 %v3691, %v3670
        %v3708 = vadd.f32 %v3692, %v3672
        %v3709 = vadd.f32 %v3693, %v3675
        %v3710 = vadd.f32 %v3694, %v3677
        %3711 = vst.msk [vmem:[#allocation3] sm:$0xff] %vm1401, %v3695
        %3712 = vst.msk [vmem:[#allocation3 + $0x8] sm:$0xff] %vm1401, %v3696
        %3713 = vst.msk [vmem:[#allocation3 + $0x10] sm:$0xff] %vm1401, %v3697
        %3714 = vst.msk [vmem:[#allocation3 + $0x18] sm:$0xff] %vm1401, %v3698
        %3715 = vst.msk [vmem:[#allocation3 + $0x20] sm:$0xff] %vm1401, %v3699
        %3716 = vst.msk [vmem:[#allocation3 + $0x28] sm:$0xff] %vm1401, %v3700
        %3717 = vst.msk [vmem:[#allocation3 + $0x30] sm:$0xff] %vm1401, %v3701
        %3718 = vst.msk [vmem:[#allocation3 + $0x38] sm:$0xff] %vm1401, %v3702
        %3719 = vst.msk [vmem:[#allocation3 + $0x40] sm:$0xff] %vm1401, %v3703
        %3720 = vst.msk [vmem:[#allocation3 + $0x48] sm:$0xff] %vm1401, %v3704
        %3721 = vst.msk [vmem:[#allocation3 + $0x50] sm:$0xff] %vm1401, %v3705
        %3722 = vst.msk [vmem:[#allocation3 + $0x58] sm:$0xff] %vm1401, %v3706
        %3723 = vst.msk [vmem:[#allocation3 + $0x60] sm:$0xff] %vm1401, %v3707
        %3724 = vst.msk [vmem:[#allocation3 + $0x68] sm:$0xff] %vm1401, %v3708
        %3725 = vst.msk [vmem:[#allocation3 + $0x70] sm:$0xff] %vm1401, %v3709
        %3726 = vst.msk [vmem:[#allocation3 + $0x78] sm:$0xff] %vm1401, %v3710
        %v3727 = vld [vmem:[#allocation3] sm:$0xff]
        %v3728 = vld [vmem:[#allocation3 + $0x8] sm:$0xff]
        %v3729 = vld [vmem:[#allocation3 + $0x10] sm:$0xff]
        %v3730 = vld [vmem:[#allocation3 + $0x18] sm:$0xff]
        %v3731 = vld [vmem:[#allocation3 + $0x20] sm:$0xff]
        %v3732 = vld [vmem:[#allocation3 + $0x28] sm:$0xff]
        %v3733 = vld [vmem:[#allocation3 + $0x30] sm:$0xff]
        %v3734 = vld [vmem:[#allocation3 + $0x38] sm:$0xff]
        %v3735 = vld [vmem:[#allocation3 + $0x40] sm:$0xff]
        %v3736 = vld [vmem:[#allocation3 + $0x48] sm:$0xff]
        %v3737 = vld [vmem:[#allocation3 + $0x50] sm:$0xff]
        %v3738 = vld [vmem:[#allocation3 + $0x58] sm:$0xff]
        %v3739 = vld [vmem:[#allocation3 + $0x60] sm:$0xff]
        %v3740 = vld [vmem:[#allocation3 + $0x68] sm:$0xff]
        %v3741 = vld [vmem:[#allocation3 + $0x70] sm:$0xff]
        %v3742 = vld [vmem:[#allocation3 + $0x78] sm:$0xff]
        %v3743 = vld [vmem:[%s6] sm:$0x1]
        %v3745 = vperm.slane %v3743, 0
        %v3747 = vmul.f32 %v3727, %v3745
        %v3748 = vmul.f32 %v3728, %v3745
        %v3749 = vmul.f32 %v3729, %v3745
        %v3750 = vmul.f32 %v3730, %v3745
        %v3751 = vmul.f32 %v3731, %v3745
        %v3752 = vmul.f32 %v3732, %v3745
        %v3753 = vmul.f32 %v3733, %v3745
        %v3754 = vmul.f32 %v3734, %v3745
        %v3755 = vmul.f32 %v3735, %v3745
        %v3756 = vmul.f32 %v3736, %v3745
        %v3757 = vmul.f32 %v3737, %v3745
        %v3758 = vmul.f32 %v3738, %v3745
        %v3759 = vmul.f32 %v3739, %v3745
        %v3760 = vmul.f32 %v3740, %v3745
        %v3761 = vmul.f32 %v3741, %v3745
        %v3762 = vmul.f32 %v3742, %v3745
        %v3763 = vld [vmem:[%s7] sm:$0x1]
        %v3765 = vperm.slane %v3763, 0
        %v3767 = vadd.f32 %v3747, %v3765
        %v3768 = vadd.f32 %v3748, %v3765
        %v3769 = vadd.f32 %v3749, %v3765
        %v3770 = vadd.f32 %v3750, %v3765
        %v3771 = vadd.f32 %v3751, %v3765
        %v3772 = vadd.f32 %v3752, %v3765
        %v3773 = vadd.f32 %v3753, %v3765
        %v3774 = vadd.f32 %v3754, %v3765
        %v3775 = vadd.f32 %v3755, %v3765
        %v3776 = vadd.f32 %v3756, %v3765
        %v3777 = vadd.f32 %v3757, %v3765
        %v3778 = vadd.f32 %v3758, %v3765
        %v3779 = vadd.f32 %v3759, %v3765
        %v3780 = vadd.f32 %v3760, %v3765
        %v3781 = vadd.f32 %v3761, %v3765
        %v3782 = vadd.f32 %v3762, %v3765
        %v3783 = vmax.f32 %v3767, 0.0
        %v3784 = vmax.f32 %v3768, 0.0
        %v3785 = vmax.f32 %v3769, 0.0
        %v3786 = vmax.f32 %v3770, 0.0
        %v3787 = vmax.f32 %v3771, 0.0
        %v3788 = vmax.f32 %v3772, 0.0
        %v3789 = vmax.f32 %v3773, 0.0
        %v3790 = vmax.f32 %v3774, 0.0
        %v3791 = vmax.f32 %v3775, 0.0
        %v3792 = vmax.f32 %v3776, 0.0
        %v3793 = vmax.f32 %v3777, 0.0
        %v3794 = vmax.f32 %v3778, 0.0
        %v3795 = vmax.f32 %v3779, 0.0
        %v3796 = vmax.f32 %v3780, 0.0
        %v3797 = vmax.f32 %v3781, 0.0
        %v3798 = vmax.f32 %v3782, 0.0
        %v3799 = vpack.c.bf16 %v3784, %v3783
        %v3800 = vpack.c.bf16 %v3786, %v3785
        %v3801 = vpack.c.bf16 %v3788, %v3787
        %v3802 = vpack.c.bf16 %v3790, %v3789
        %v3803 = vpack.c.bf16 %v3792, %v3791
        %v3804 = vpack.c.bf16 %v3794, %v3793
        %v3805 = vpack.c.bf16 %v3796, %v3795
        %v3806 = vpack.c.bf16 %v3798, %v3797
        %v3807 = vld [vmem:[%s3] sm:$0x3]
        %v3809 = vsel %vm1401, %v3799, 0
        %v3812 = vsel %vm1401, %v3800, 0
        %v3815 = vsel %vm1401, %v3801, 0
        %v3818 = vsel %vm1401, %v3802, 0
        %v3821 = vsel %vm1401, %v3803, 0
        %v3824 = vsel %vm1401, %v3804, 0
        %v3827 = vsel %vm1401, %v3805, 0
        %v3830 = vsel %vm1401, %v3806, 0
        %v3833 = vsel %vm1426, %v3807, 0
        %3835 = vmatpush.bf16.msra.mxu0 0
        %3836 = vmatpush.bf16.msra.mxu0 0
        %3837 = vmatpush.bf16.msra.mxu0 0
        %3838 = vmatpush.bf16.msra.mxu0 0
        %3839 = vmatpush.bf16.msra.mxu0 0
        %3840 = vmatpush.bf16.msra.mxu0 0
        %3841 = vmatpush.bf16.msra.mxu0 0
        %3842 = vmatpush.bf16.msra.mxu0 %v3833
        %3843 = vmatmul.bf16.gmra.mxu0 %v3809
        %v3844 = vpop.f32.mrf.mxu0
        %v3845 = vadd.f32 0.0, %v3844
        %v3846 = vpop.f32.mrf.mxu0
        %v3847 = vadd.f32 0.0, %v3846
        %3848 = vmatmul.bf16.gmra.mxu0 %v3812
        %v3849 = vpop.f32.mrf.mxu0
        %v3850 = vadd.f32 0.0, %v3849
        %v3851 = vpop.f32.mrf.mxu0
        %v3852 = vadd.f32 0.0, %v3851
        %3853 = vmatmul.bf16.gmra.mxu0 %v3815
        %v3854 = vpop.f32.mrf.mxu0
        %v3855 = vadd.f32 0.0, %v3854
        %v3856 = vpop.f32.mrf.mxu0
        %v3857 = vadd.f32 0.0, %v3856
        %3858 = vmatmul.bf16.gmra.mxu0 %v3818
        %v3859 = vpop.f32.mrf.mxu0
        %v3860 = vadd.f32 0.0, %v3859
        %v3861 = vpop.f32.mrf.mxu0
        %v3862 = vadd.f32 0.0, %v3861
        %3863 = vmatmul.bf16.gmra.mxu0 %v3821
        %v3864 = vpop.f32.mrf.mxu0
        %v3865 = vadd.f32 0.0, %v3864
        %v3866 = vpop.f32.mrf.mxu0
        %v3867 = vadd.f32 0.0, %v3866
        %3868 = vmatmul.bf16.gmra.mxu0 %v3824
        %v3869 = vpop.f32.mrf.mxu0
        %v3870 = vadd.f32 0.0, %v3869
        %v3871 = vpop.f32.mrf.mxu0
        %v3872 = vadd.f32 0.0, %v3871
        %3873 = vmatmul.bf16.gmra.mxu0 %v3827
        %v3874 = vpop.f32.mrf.mxu0
        %v3875 = vadd.f32 0.0, %v3874
        %v3876 = vpop.f32.mrf.mxu0
        %v3877 = vadd.f32 0.0, %v3876
        %3878 = vmatmul.bf16.gmra.mxu0 %v3830
        %v3879 = vpop.f32.mrf.mxu0
        %v3880 = vadd.f32 0.0, %v3879
        %v3881 = vpop.f32.mrf.mxu0
        %v3882 = vadd.f32 0.0, %v3881
        %3883 = vdwg.mxu0
        %v3884 = vld [vmem:[%s8] sm:$0x1]
        %v3886 = vperm.slane %v3884, 0
        %v3888 = vmul.f32 %v3845, %v3886
        %v3889 = vmul.f32 %v3847, %v3886
        %v3890 = vmul.f32 %v3850, %v3886
        %v3891 = vmul.f32 %v3852, %v3886
        %v3892 = vmul.f32 %v3855, %v3886
        %v3893 = vmul.f32 %v3857, %v3886
        %v3894 = vmul.f32 %v3860, %v3886
        %v3895 = vmul.f32 %v3862, %v3886
        %v3896 = vmul.f32 %v3865, %v3886
        %v3897 = vmul.f32 %v3867, %v3886
        %v3898 = vmul.f32 %v3870, %v3886
        %v3899 = vmul.f32 %v3872, %v3886
        %v3900 = vmul.f32 %v3875, %v3886
        %v3901 = vmul.f32 %v3877, %v3886
        %v3902 = vmul.f32 %v3880, %v3886
        %v3903 = vmul.f32 %v3882, %v3886
        %v3904 = vld [vmem:[%s9] sm:$0x1]
        %v3906 = vperm.slane %v3904, 0
        %v3908 = vadd.f32 %v3888, %v3906
        %v3909 = vadd.f32 %v3889, %v3906
        %v3910 = vadd.f32 %v3890, %v3906
        %v3911 = vadd.f32 %v3891, %v3906
        %v3912 = vadd.f32 %v3892, %v3906
        %v3913 = vadd.f32 %v3893, %v3906
        %v3914 = vadd.f32 %v3894, %v3906
        %v3915 = vadd.f32 %v3895, %v3906
        %v3916 = vadd.f32 %v3896, %v3906
        %v3917 = vadd.f32 %v3897, %v3906
        %v3918 = vadd.f32 %v3898, %v3906
        %v3919 = vadd.f32 %v3899, %v3906
        %v3920 = vadd.f32 %v3900, %v3906
        %v3921 = vadd.f32 %v3901, %v3906
        %v3922 = vadd.f32 %v3902, %v3906
        %v3923 = vadd.f32 %v3903, %v3906
        %s3924 = sadd.s32 %s374, 1
        %s3925 = smul.u32 %s3924, 24
        %s3926 = scalar_lea.vmem %s371, %s3925
        %v3927 = vld [vmem:[%s3926 + $0x1] sm:$0xff]
        %v3928 = vld [vmem:[%s3926 + $0x9] sm:$0xff]
        %v3929 = vld [vmem:[%s3926 + $0x19] sm:$0xff]
        %v3930 = vld [vmem:[%s3926 + $0x21] sm:$0xff]
        %v3931 = vld [vmem:[%s3926 + $0x31] sm:$0xff]
        %v3932 = vld [vmem:[%s3926 + $0x39] sm:$0xff]
        %v3933 = vld [vmem:[%s3926 + $0x49] sm:$0xff]
        %v3934 = vld [vmem:[%s3926 + $0x51] sm:$0xff]
        %v3935 = vld [vmem:[%s3926 + $0x61] sm:$0xff]
        %v3936 = vld [vmem:[%s3926 + $0x69] sm:$0xff]
        %v3937 = vld [vmem:[%s3926 + $0x79] sm:$0xff]
        %v3938 = vld [vmem:[%s3926 + $0x81] sm:$0xff]
        %v3939 = vld [vmem:[%s3926 + $0x91] sm:$0xff]
        %v3940 = vld [vmem:[%s3926 + $0x99] sm:$0xff]
        %v3941 = vld [vmem:[%s3926 + $0xa9] sm:$0xff]
        %v3942 = vld [vmem:[%s3926 + $0xb1] sm:$0xff]
        %v3943 = vadd.f32 %v3908, %v3927
        %v3944 = vadd.f32 %v3909, %v3928
        %v3945 = vadd.f32 %v3910, %v3929
        %v3946 = vadd.f32 %v3911, %v3930
        %v3947 = vadd.f32 %v3912, %v3931
        %v3948 = vadd.f32 %v3913, %v3932
        %v3949 = vadd.f32 %v3914, %v3933
        %v3950 = vadd.f32 %v3915, %v3934
        %v3951 = vadd.f32 %v3916, %v3935
        %v3952 = vadd.f32 %v3917, %v3936
        %v3953 = vadd.f32 %v3918, %v3937
        %v3954 = vadd.f32 %v3919, %v3938
        %v3955 = vadd.f32 %v3920, %v3939
        %v3956 = vadd.f32 %v3921, %v3940
        %v3957 = vadd.f32 %v3922, %v3941
        %v3958 = vadd.f32 %v3923, %v3942
        %v3959 = vmax.f32 %v3943, 0.0
        %v3960 = vmax.f32 %v3944, 0.0
        %v3961 = vmax.f32 %v3945, 0.0
        %v3962 = vmax.f32 %v3946, 0.0
        %v3963 = vmax.f32 %v3947, 0.0
        %v3964 = vmax.f32 %v3948, 0.0
        %v3965 = vmax.f32 %v3949, 0.0
        %v3966 = vmax.f32 %v3950, 0.0
        %v3967 = vmax.f32 %v3951, 0.0
        %v3968 = vmax.f32 %v3952, 0.0
        %v3969 = vmax.f32 %v3953, 0.0
        %v3970 = vmax.f32 %v3954, 0.0
        %v3971 = vmax.f32 %v3955, 0.0
        %v3972 = vmax.f32 %v3956, 0.0
        %v3973 = vmax.f32 %v3957, 0.0
        %v3974 = vmax.f32 %v3958, 0.0
        %3975 = vst.msk [vmem:[%s366] sm:$0xff] %vm660, %v3959
        %3976 = vst.msk [vmem:[%s366 + $0x8] sm:$0xff] %vm660, %v3960
        %3977 = vst.msk [vmem:[%s366 + $0x10] sm:$0xff] %vm660, %v3961
        %3978 = vst.msk [vmem:[%s366 + $0x18] sm:$0xff] %vm660, %v3962
        %3979 = vst.msk [vmem:[%s366 + $0x20] sm:$0xff] %vm660, %v3963
        %3980 = vst.msk [vmem:[%s366 + $0x28] sm:$0xff] %vm660, %v3964
        %3981 = vst.msk [vmem:[%s366 + $0x30] sm:$0xff] %vm660, %v3965
        %3982 = vst.msk [vmem:[%s366 + $0x38] sm:$0xff] %vm660, %v3966
        %3983 = vst.msk [vmem:[%s366 + $0x40] sm:$0xff] %vm660, %v3967
        %3984 = vst.msk [vmem:[%s366 + $0x48] sm:$0xff] %vm660, %v3968
        %3985 = vst.msk [vmem:[%s366 + $0x50] sm:$0xff] %vm660, %v3969
        %3986 = vst.msk [vmem:[%s366 + $0x58] sm:$0xff] %vm660, %v3970
        %3987 = vst.msk [vmem:[%s366 + $0x60] sm:$0xff] %vm660, %v3971
        %3988 = vst.msk [vmem:[%s366 + $0x68] sm:$0xff] %vm660, %v3972
        %3989 = vst.msk [vmem:[%s366 + $0x70] sm:$0xff] %vm660, %v3973
        %3990 = vst.msk [vmem:[%s366 + $0x78] sm:$0xff] %vm660, %v3974
        %s3991 = sand.u32 %s261, 1
        %s3992 = scalar_lea.sflag [#allocation5], %s3991
        %s3993 = sand.u32 %s261, 1
        %s3994 = smul.addr %s3993, 128
        %s3995 = scalar_lea.vmem [#allocation4], %s3994
        // Predicated region
        $region61: #{tpu_custom_call.1} parent=59 // pred_check
          %p3996 = pneg %p271
        $region62: #{tpu_custom_call.1} parent=59 // pred_check_branch
          %3998 = sbr.rel (%p3996) target = $region64
        $region63: #{tpu_custom_call.1} parent=59 // pred_region
          %s3999 = smul.u32 8, %s29
          %4001 = vsyncadd %s3992, 0
          %s4002 = smul.addr %s3999, 2
          %s4003 = smul.addr %s28, 32
          %s4004 = sadd.s32 %s4002, %s4003
          %s4005 = smul.addr %s4004, 8
          %s4006 = scalar_lea.hbm %s10, %s4005
          %s4007 = sshll.u32 %s3995, 4
          %s4008 = int_to_ptr.vmem [resolvable:$true] %s4007
          %s4009 = sshll.u32 %s4006, 4
          %s4010 = int_to_ptr.hbm [resolvable:$true] %s4009
          %4015 = dma.vmem_to_hbm [thread:$0]  %s4008, 2048, %s4010, %s3992, 128, 128, 8
        $region64: #{tpu_custom_call.1} parent=59 // pred_fallthru
          _
      $region60: #{tpu_custom_call.1} parent=5 // pred_fallthru
        _
      %p4016 = scmp.le.s32.totalorder 2, %s19
      // Predicated region
      $region65: #{tpu_custom_call.1} parent=5 // pred_check
        %p4017 = pneg %p4016
      $region66: #{tpu_custom_call.1} parent=5 // pred_check_branch
        %4019 = sbr.rel (%p4017) target = $region68
      $region67: #{tpu_custom_call.1} parent=5 // pred_region
        %s4020 = ssub.s32 %s19, 2
        // Predicated region
        $region69: #{tpu_custom_call.1} parent=67 // pred_check
          %p4021 = pneg %p277
        $region70: #{tpu_custom_call.1} parent=67 // pred_check_branch
          %4023 = sbr.rel (%p4021) target = $region72
        $region71: #{tpu_custom_call.1} parent=67 // pred_region
          %s4024 = sand.u32 %s262, 1
          %s4025 = scalar_lea.sflag [#allocation5], %s4024
          %s4026 = sand.u32 %s262, 1
          %s4027 = smul.addr %s4026, 128
          %s4028 = scalar_lea.vmem [#allocation4], %s4027
          %4030 = dma.done %s4025, 2048
        $region72: #{tpu_custom_call.1} parent=67 // pred_fallthru
          _
      $region68: #{tpu_custom_call.1} parent=5 // pred_fallthru
        _
    $region6: #{tpu_custom_call.1} parent=1 // loop_footer
      %s23 = sadd.s32 1, %s19
    $region7: #{tpu_custom_call.1} parent=1 // loop_footer_branch
      %18 = sbr.rel target = $region3
    $region8: #{tpu_custom_call.1} parent=1 // loop_exit
      _
    %4031 = vsyncpa [#allocation5], 1
    %s4032 = scalar_lea.sflag [#allocation5], 1
    %4033 = vsyncpa %s4032, 1

</llo_original>
